<compile_context>
chip_gen: v7x
topology: tpu7x:2x2x1
jax: 0.10.0
libtpu: 0.0.40
codegen_flags: <defaults>
</compile_context>

<pallas_src>
import functools

import jax
import jax.numpy as jnp
from jax import lax
from jax.experimental import pallas as pl
from jax.experimental.pallas import tpu as pltpu


def _mul_conv1x1_kernel(x_ref, s_ref, w_ref, o_ref):
    # x_ref : (1, C_in, M)   f32   activations, native NCHW (spatial flattened)
    # s_ref : (1, C_in, 1)   f32   per-(batch, channel) SE scale
    # w_ref : (tn, C_in)     bf16  weight rows of this C_out tile (pre-cast/padded)
    # o_ref : (1, tn, M)     f32   output tile (last block partial -> masked write)
    xb = (x_ref[0] * s_ref[0]).astype(jnp.bfloat16)        # fold scale into x: (C_in, M)
    o_ref[0] = jnp.dot(w_ref[...], xb,
                       preferred_element_type=jnp.float32).astype(o_ref.dtype)


def prepare_conv_weight(weight_oi, *, n_cout_tiles=2):
    """One-time (parameter-load-time) prep of the 1x1 conv weight.

    weight_oi : (C_out, C_in) f32 (PyTorch Conv2d 1x1 weight, squeezed)
    Returns (w_prepped, tn): bf16 weight zero-padded to n_tiles * tn rows, and
    the per-tile row count tn (sublane-aligned).
    """
    C_out, C_in = weight_oi.shape
    n_j = max(1, int(n_cout_tiles))
    per_tile = -(-C_out // n_j)          # ceil(C_out / n_j)
    tn = -(-per_tile // 8) * 8           # round up to sublane multiple
    n_tiles = -(-C_out // tn)
    c_out_pad = tn * n_tiles
    w = jnp.pad(weight_oi.astype(jnp.bfloat16), ((0, c_out_pad - C_out), (0, 0)))
    return w, tn


@functools.partial(jax.jit, static_argnames=("c_out", "tn"))
def mul_conv1x1(x_nchw, scale_nc11, w_prepped, *, c_out, tn):
    """conv2d_1x1(x * scale) — hot path is a single Pallas kernel.

    x_nchw    : (N, C_in, H, W)          f32
    scale_nc11: (N, C_in, 1, 1)          f32
    w_prepped : (n_tiles*tn, C_in)       bf16  (from prepare_conv_weight)
    returns   : (N, c_out, H, W)         f32
    """
    N, C_in, H, W = x_nchw.shape
    M = H * W
    n_tiles = -(-c_out // tn)

    # Free reshapes only (no transposes): NCHW consumed/produced natively.
    x = x_nchw.reshape(N, C_in, M)
    scale = scale_nc11.reshape(N, C_in, 1)   # broadcasts along the M lanes in-kernel

    if N == 1:
        grid = (N, n_tiles)
        x_map = lambda b, j: (b, 0, 0)
        s_map = lambda b, j: (b, 0, 0)
        w_map = lambda b, j: (j, 0)
        o_map = lambda b, j: (b, j, 0)
        dim_sem = ("parallel", "parallel")
    else:
        # Batch innermost + "arbitrary": the weight block index is unchanged
        # across consecutive steps (sequential per-core order guaranteed), so
        # the large weight tile is NOT re-DMA'd per batch element.
        grid = (n_tiles, N)
        x_map = lambda j, b: (b, 0, 0)
        s_map = lambda j, b: (b, 0, 0)
        w_map = lambda j, b: (j, 0)
        o_map = lambda j, b: (b, j, 0)
        dim_sem = ("parallel", "arbitrary")

    cost = pl.CostEstimate(
        flops=2 * N * c_out * C_in * M,
        transcendentals=0,
        bytes_accessed=(x.size * 4 + scale.size * 4 + w_prepped.size * 2
                        + N * c_out * M * 4),
    )

    out = pl.pallas_call(
        _mul_conv1x1_kernel,
        out_shape=jax.ShapeDtypeStruct((N, c_out, M), x_nchw.dtype),
        grid_spec=pltpu.PrefetchScalarGridSpec(
            num_scalar_prefetch=0,
            grid=grid,
            in_specs=[
                pl.BlockSpec((1, C_in, M), x_map),    # full-C_in, full-M block
                pl.BlockSpec((1, C_in, 1), s_map),    # per-batch channel scale
                pl.BlockSpec((tn, C_in), w_map),      # one C_out tile of the weight
            ],
            out_specs=pl.BlockSpec((1, tn, M), o_map),  # last block partial -> masked
        ),
        compiler_params=pltpu.CompilerParams(dimension_semantics=dim_sem),
        cost_estimate=cost,
    )(x, scale, w_prepped)

    # Free reshape only — no slice, no transpose.
    return out.reshape(N, c_out, H, W)


if __name__ == "__main__":
    # Real module shapes — small enough (~3 MB total) to run directly:
    #   x552: (1, 2064, 7, 7), x557: (1, 2064, 1, 1), Conv2d(2064, 344, 1).
    N, C_in, C_out, H, W = 1, 2064, 344, 7, 7
    M = H * W

    key = jax.random.PRNGKey(0)
    k1, k2, k3 = jax.random.split(key, 3)
    x552 = jax.random.normal(k1, (N, C_in, H, W), dtype=jnp.float32)
    x557 = jax.random.normal(k2, (N, C_in, 1, 1), dtype=jnp.float32)
    weight = 0.02 * jax.random.normal(k3, (C_out, C_in), dtype=jnp.float32)

    # One-time weight prep (outside the hot path).  n_cout_tiles=2 is the
    # v5e/v6e sweet spot; sweep 4 on v7x so each of its two cores pipelines.
    w_prepped, tn = prepare_conv_weight(weight, n_cout_tiles=2)
    w_prepped = jax.block_until_ready(w_prepped)

    y = jax.block_until_ready(
        mul_conv1x1(x552, x557, w_prepped, c_out=C_out, tn=tn))
    assert y.shape == (N, C_out, H, W)

    # Matched-precision reference (same rounding order as the kernel):
    #   xb = bf16(x * s), w = bf16(weight), f32-accumulated dot.
    xs_bf = (x552.reshape(N, C_in, M) * x557.reshape(N, C_in, 1)).astype(jnp.bfloat16)
    w_bf = weight.astype(jnp.bfloat16)
    y_ref = jnp.einsum("oc,ncm->nom", w_bf, xs_bf,
                       preferred_element_type=jnp.float32).reshape(N, C_out, H, W)
    assert jnp.allclose(y, y_ref, atol=2e-3, rtol=2e-3)

    # Fidelity vs the original full-f32 PyTorch semantics (loose tol: bf16 path).
    y_f32 = jnp.einsum("nchw,oc->nohw", x552 * x557, weight,
                       precision=lax.Precision.HIGHEST)
    assert jnp.allclose(y, y_f32, atol=5e-2, rtol=5e-2)

    print("KERNEL_OK")
</pallas_src>

<mosaic_0001>
module attributes {stable_mosaic.version = 11 : i64} {
  func.func @_mul_conv1x1_kernel(%arg0: i32, %arg1: i32, %arg2: memref<1x2064x49xf32, #tpu.memory_space<vmem>>, %arg3: memref<1x2064x1xf32, #tpu.memory_space<vmem>>, %arg4: memref<176x2064xbf16, #tpu.memory_space<vmem>>, %arg5: memref<1x176x49xf32, #tpu.memory_space<vmem>>) attributes {dimension_semantics = [#tpu.dimension_semantics<parallel>, #tpu.dimension_semantics<parallel>], iteration_bounds = array<i64: 1, 2>, scalar_prefetch = 0 : i64, scratch_operands = 0 : i64, tpu.core_type = #tpu.core_type<tc>, window_params = [{transform_indices = @transform_0, window_bounds = array<i64: 1, 2064, 49>}, {transform_indices = @transform_1, window_bounds = array<i64: 1, 2064, 1>}, {transform_indices = @transform_2, window_bounds = array<i64: 176, 2064>}, {transform_indices = @transform_3, window_bounds = array<i64: 1, 176, 49>}]} {
    %c0 = arith.constant 0 : index
    %c0_0 = arith.constant 0 : index
    %c0_1 = arith.constant 0 : index
    %0 = vector.load %arg2[%c0, %c0_0, %c0_1] : memref<1x2064x49xf32, #tpu.memory_space<vmem>>, vector<1x2064x49xf32>
    %1 = vector.shape_cast %0 : vector<1x2064x49xf32> to vector<2064x49xf32>
    %c0_2 = arith.constant 0 : index
    %c0_3 = arith.constant 0 : index
    %c0_4 = arith.constant 0 : index
    %2 = vector.load %arg3[%c0_2, %c0_3, %c0_4] : memref<1x2064x1xf32, #tpu.memory_space<vmem>>, vector<1x2064x1xf32>
    %3 = vector.shape_cast %2 : vector<1x2064x1xf32> to vector<2064x1xf32>
    %4 = vector.broadcast %3 : vector<2064x1xf32> to vector<2064x49xf32>
    %5 = arith.mulf %1, %4 : vector<2064x49xf32>
    %6 = arith.truncf %5 : vector<2064x49xf32> to vector<2064x49xbf16>
    %c0_5 = arith.constant 0 : index
    %c0_6 = arith.constant 0 : index
    %7 = vector.load %arg4[%c0_5, %c0_6] : memref<176x2064xbf16, #tpu.memory_space<vmem>>, vector<176x2064xbf16>
    %cst = arith.constant dense<0.000000e+00> : vector<176x49xf32>
    %8 = tpu.matmul %7, %6, %cst {dimension_numbers = #tpu.dot_dimension_numbers<[1], [0], [0], [1], [0, 0, 1, 1], [], []>} : vector<176x2064xbf16>, vector<2064x49xbf16>, vector<176x49xf32> -> vector<176x49xf32>
    %c0_7 = arith.constant 0 : index
    %c0_8 = arith.constant 0 : index
    %c0_9 = arith.constant 0 : index
    %9 = vector.load %arg5[%c0_7, %c0_8, %c0_9] : memref<1x176x49xf32, #tpu.memory_space<vmem>>, vector<1x176x49xf32>
    %10 = vector.shape_cast %9 : vector<1x176x49xf32> to vector<176x49xf32>
    %11 = vector.shape_cast %8 : vector<176x49xf32> to vector<1x176x49xf32>
    tpu.vector_store %arg5[%c0_7, %c0_8, %c0_9], %11 {strides = array<i32>} : memref<1x176x49xf32, #tpu.memory_space<vmem>>, vector<1x176x49xf32>,
    return
  }
  func.func @transform_0(%arg0: i32, %arg1: i32) -> (i32, i32, i32) {
    %c0_i32 = arith.constant 0 : i32
    %c0_i32_0 = arith.constant 0 : i32
    %c0_i32_1 = arith.constant 0 : i32
    return %arg0, %c0_i32, %c0_i32_0 : i32, i32, i32
  }
  func.func @transform_1(%arg0: i32, %arg1: i32) -> (i32, i32, i32) {
    %c0_i32 = arith.constant 0 : i32
    %c0_i32_0 = arith.constant 0 : i32
    %c0_i32_1 = arith.constant 0 : i32
    return %arg0, %c0_i32, %c0_i32_0 : i32, i32, i32
  }
  func.func @transform_2(%arg0: i32, %arg1: i32) -> (i32, i32) {
    %c0_i32 = arith.constant 0 : i32
    %c0_i32_0 = arith.constant 0 : i32
    return %arg1, %c0_i32 : i32, i32
  }
  func.func @transform_3(%arg0: i32, %arg1: i32) -> (i32, i32, i32) {
    %c0_i32 = arith.constant 0 : i32
    %c0_i32_0 = arith.constant 0 : i32
    return %arg0, %arg1, %c0_i32 : i32, i32, i32
  }
}

</mosaic_0001>

<llo_original>
// kernel: mul_conv1x1.1
$region0: #{mul_conv1x1.1}
  #allocation0 [shape = 'u32[]', space=smem, size = 0x4, offset = 0x4, fixed_abs, tag = 'smem constant byte address 0x4 - core index']
  #allocation1 [shape = 'u32[144,128]{1,0:T(1,128)}', space=vmem, size = 0x12000, scoped, tag = 'internal scratch']
  %s0 = inlined_call_operand.vmem [shape: f32[1,2064,49], index: 0, kind: input, shape index: {}]
  %s1 = inlined_call_operand.vmem [shape: f32[1,2064,1], index: 1, kind: input, shape index: {}]
  %s2 = inlined_call_operand.vmem [shape: bf16[352,2064], index: 2, kind: input, shape index: {}]
  %s3 = inlined_call_operand.vmem [shape: f32[1,344,49], index: 3, kind: output, shape index: {}]
  %s4 = sld [smem:[#allocation0]]
  $region93: #{mul_conv1x1.1} parent=0
    _
  %s6 = ssub.s32 1, %s4
  %s7 = scalar_select 0, %s6, %s4
  $region1: #{mul_conv1x1.1} parent=0
    #allocation2 [shape = 'u8[180224]{0}', space=vmem, size = 0x2c000, scoped, tag = 'output window, operand 0']
    loop: start=0, step=1, limit=4
    $region2: #{mul_conv1x1.1} parent=1 // loop_pre_header
      _
    $region3: #{mul_conv1x1.1} parent=1 // loop_header
      %s9 = sphi 0, %s13
      %p10 = scmp.ge.s32.totalorder %s9, 4
      %s16 = sphi 0, %s28
      %s17 = sphi 0, %s24
      %s18 = sphi 0, %s16
      %s19 = sphi 0, %s17
      %s20 = sphi 0, %s18
      %s21 = sphi 0, %s19
      %s31 = sphi 0, %s33
      %s34 = sphi 0, %s31
      %s35 = sphi 0, %s34
      %s51 = sphi 0, %s35
      %s57 = sphi 0, %s59
      %s60 = sphi 0, %s57
      %s61 = sphi 0, %s60
      %s77 = sphi 0, %s61
      %s83 = sphi 0, %s85
      %s86 = sphi 0, %s83
      %s87 = sphi 0, %s86
      %s103 = sphi 0, %s87
      %s111 = sphi 0, %s113
      %s114 = sphi 0, %s111
      %s115 = sphi 0, %s114
      %s131 = sphi 0, %s115
    $region4: #{mul_conv1x1.1} parent=1 // loop_header_branch
      %12 = sbr.rel (%p10) target = $region8
    $region5: #{mul_conv1x1.1} parent=1 // loop_body
      %s14 = ssub.s32 %s9, 1
      %s15 = ssub.s32 %s9, 2
      %s22 = sadd.s32 1, %s17
      %p23 = scmp.ge.s32.totalorder %s22, 2
      %s24 = scalar_select %p23, 0, %s22
      %s25 = sadd.s32 1, %s16
      %s26 = scalar_select %p23, %s25, %s16
      %p27 = scmp.ge.s32.totalorder %s26, 1
      %s28 = scalar_select %p27, 0, %s26
      %s29 = ssub.s32 %s16, %s28
      %p30 = scmp.eq.s32.totalorder %s29, 0
      %s32 = sadd.s32 %s31, 1
      %s33 = scalar_select %p30, %s31, %s32
      %p36 = pneg %p30
      %p37 = scmp.eq.s32.totalorder %s9, 1
      %p38 = por %p36, %p37
      %p39 = scmp.ne.s32.totalorder %s31, %s34
      %p40 = scmp.eq.s32.totalorder %s9, 0
      %p41 = por %p39, %p40
      %p42 = scmp.ne.s32.totalorder %s31, %s34
      %p43 = scmp.eq.s32.totalorder %s14, 1
      %p44 = por %p42, %p43
      %p45 = scmp.ne.s32.totalorder %s34, %s35
      %p46 = scmp.eq.s32.totalorder %s14, 0
      %p47 = por %p45, %p46
      %p48 = scmp.ne.s32.totalorder %s34, %s35
      %p49 = scmp.eq.s32.totalorder %s15, 1
      %p50 = por %p48, %p49
      %p52 = scmp.ne.s32.totalorder %s35, %s51
      %p53 = scmp.eq.s32.totalorder %s15, 0
      %p54 = por %p52, %p53
      %s55 = ssub.s32 %s16, %s28
      %p56 = scmp.eq.s32.totalorder %s55, 0
      %s58 = sadd.s32 %s57, 1
      %s59 = scalar_select %p56, %s57, %s58
      %p62 = pneg %p56
      %p63 = scmp.eq.s32.totalorder %s9, 1
      %p64 = por %p62, %p63
      %p65 = scmp.ne.s32.totalorder %s57, %s60
      %p66 = scmp.eq.s32.totalorder %s9, 0
      %p67 = por %p65, %p66
      %p68 = scmp.ne.s32.totalorder %s57, %s60
      %p69 = scmp.eq.s32.totalorder %s14, 1
      %p70 = por %p68, %p69
      %p71 = scmp.ne.s32.totalorder %s60, %s61
      %p72 = scmp.eq.s32.totalorder %s14, 0
      %p73 = por %p71, %p72
      %p74 = scmp.ne.s32.totalorder %s60, %s61
      %p75 = scmp.eq.s32.totalorder %s15, 1
      %p76 = por %p74, %p75
      %p78 = scmp.ne.s32.totalorder %s61, %s77
      %p79 = scmp.eq.s32.totalorder %s15, 0
      %p80 = por %p78, %p79
      %s81 = ssub.s32 %s17, %s24
      %p82 = scmp.eq.s32.totalorder %s81, 0
      %s84 = sadd.s32 %s83, 1
      %s85 = scalar_select %p82, %s83, %s84
      %p88 = pneg %p82
      %p89 = scmp.eq.s32.totalorder %s9, 1
      %p90 = por %p88, %p89
      %p91 = scmp.ne.s32.totalorder %s83, %s86
      %p92 = scmp.eq.s32.totalorder %s9, 0
      %p93 = por %p91, %p92
      %p94 = scmp.ne.s32.totalorder %s83, %s86
      %p95 = scmp.eq.s32.totalorder %s14, 1
      %p96 = por %p94, %p95
      %p97 = scmp.ne.s32.totalorder %s86, %s87
      %p98 = scmp.eq.s32.totalorder %s14, 0
      %p99 = por %p97, %p98
      %p100 = scmp.ne.s32.totalorder %s86, %s87
      %p101 = scmp.eq.s32.totalorder %s15, 1
      %p102 = por %p100, %p101
      %p104 = scmp.ne.s32.totalorder %s87, %s103
      %p105 = scmp.eq.s32.totalorder %s15, 0
      %p106 = por %p104, %p105
      %s107 = ssub.s32 %s16, %s28
      %s108 = ssub.s32 %s17, %s24
      %s109 = sor.u32 %s107, %s108
      %p110 = scmp.eq.s32.totalorder %s109, 0
      %s112 = sadd.s32 %s111, 1
      %s113 = scalar_select %p110, %s111, %s112
      %p116 = pneg %p110
      %p117 = scmp.eq.s32.totalorder %s9, 1
      %p118 = por %p116, %p117
      %p119 = scmp.ne.s32.totalorder %s111, %s114
      %p120 = scmp.eq.s32.totalorder %s9, 0
      %p121 = por %p119, %p120
      %p122 = scmp.ne.s32.totalorder %s111, %s114
      %p123 = scmp.eq.s32.totalorder %s14, 1
      %p124 = por %p122, %p123
      %p125 = scmp.ne.s32.totalorder %s114, %s115
      %p126 = scmp.eq.s32.totalorder %s14, 0
      %p127 = por %p125, %p126
      %p128 = scmp.ne.s32.totalorder %s114, %s115
      %p129 = scmp.eq.s32.totalorder %s15, 1
      %p130 = por %p128, %p129
      %p132 = scmp.ne.s32.totalorder %s115, %s131
      %p133 = scmp.eq.s32.totalorder %s15, 0
      %p134 = por %p132, %p133
      %p135 = scmp.le.s32.totalorder 1, %s9
      %p136 = scmp.lt.s32.totalorder %s9, 3
      %p137 = pnand %p135, %p136
      %p138 = pneg %p137
      // Predicated region
      $region9: #{mul_conv1x1.1} parent=5 // pred_check
        _
      $region10: #{mul_conv1x1.1} parent=5 // pred_check_branch
        %140 = sbr.rel (%p137) target = $region12
      $region11: #{mul_conv1x1.1} parent=5 // pred_region
        %s141 = ssub.s32 %s9, 1
        // Predicated region
        $region13: #{mul_conv1x1.1} parent=11 // pred_check
          %p142 = pneg %p47
        $region14: #{mul_conv1x1.1} parent=11 // pred_check_branch
          %144 = sbr.rel (%p142) target = $region16
        $region15: #{mul_conv1x1.1} parent=11 // pred_region
          %p145 = scmp.lt.s32.totalorder %s18, 0
          %s146 = scalar_select %p145, %s18, 0
          %s147 = smul.addr %s146, 258
          %s148 = smul.addr %s147, 8
          %s149 = scalar_lea.vmem %s0, %s148
        $region16: #{mul_conv1x1.1} parent=11 // pred_fallthru
          _
        // Predicated region
        $region17: #{mul_conv1x1.1} parent=11 // pred_check
          %p150 = pneg %p73
        $region18: #{mul_conv1x1.1} parent=11 // pred_check_branch
          %152 = sbr.rel (%p150) target = $region20
        $region19: #{mul_conv1x1.1} parent=11 // pred_region
          %p153 = scmp.lt.s32.totalorder %s18, 0
          %s154 = scalar_select %p153, %s18, 0
          %s155 = smul.addr %s154, 258
          %s156 = smul.addr %s155, 8
          %s157 = scalar_lea.vmem %s1, %s156
        $region20: #{mul_conv1x1.1} parent=11 // pred_fallthru
          _
      $region12: #{mul_conv1x1.1} parent=5 // pred_fallthru
        _
      %p158 = scmp.lt.s32.totalorder %s9, 2
      // Predicated region
      $region21: #{mul_conv1x1.1} parent=5 // pred_check
        %p159 = pneg %p158
      $region22: #{mul_conv1x1.1} parent=5 // pred_check_branch
        %161 = sbr.rel (%p159) target = $region24
      $region23: #{mul_conv1x1.1} parent=5 // pred_region
        // Predicated region
        $region25: #{mul_conv1x1.1} parent=23 // pred_check
          %p162 = pneg %p93
        $region26: #{mul_conv1x1.1} parent=23 // pred_check_branch
          %164 = sbr.rel (%p162) target = $region28
        $region27: #{mul_conv1x1.1} parent=23 // pred_region
          %s165 = smul.u32 22, %s17
          %p166 = scmp.lt.s32.totalorder %s165, 43
          %s167 = scalar_select %p166, %s165, 43
          %s168 = smul.addr %s167, 17
          %s169 = smul.addr %s168, 4
          %s170 = scalar_lea.vmem %s2, %s169
          %s171 = smul.u32 22, %s17
        $region28: #{mul_conv1x1.1} parent=23 // pred_fallthru
          _
      $region24: #{mul_conv1x1.1} parent=5 // pred_fallthru
        _
      %p172 = scmp.le.s32.totalorder 1, %s9
      %p173 = scmp.lt.s32.totalorder %s9, 3
      %p174 = pnand %p172, %p173
      %p175 = pneg %p174
      // Predicated region
      $region29: #{mul_conv1x1.1} parent=5 // pred_check
        _
      $region30: #{mul_conv1x1.1} parent=5 // pred_check_branch
        %177 = sbr.rel (%p174) target = $region32
      $region31: #{mul_conv1x1.1} parent=5 // pred_region
        %s178 = ssub.s32 %s9, 1
        %p179 = scmp.lt.s32.totalorder %s18, 0
        %s180 = scalar_select %p179, %s18, 0
        %s181 = smul.addr %s180, 258
        %s182 = smul.addr %s181, 8
        %s183 = scalar_lea.vmem %s0, %s182
        %p184 = pneg %p47
        %p185 = pneg %p44
        %p186 = scmp.lt.s32.totalorder %s18, 0
        %s187 = scalar_select %p186, %s18, 0
        %s188 = smul.addr %s187, 258
        %s189 = smul.addr %s188, 8
        %s190 = scalar_lea.vmem %s1, %s189
        %p191 = pneg %p73
        %p192 = pneg %p70
        %s193 = smul.u32 22, %s19
        %p194 = scmp.lt.s32.totalorder %s193, 43
        %s195 = scalar_select %p194, %s193, 43
        %s196 = smul.addr %s195, 17
        %s197 = smul.addr %s196, 4
        %s198 = scalar_lea.vmem %s2, %s197
        %p199 = pneg %p99
        %p200 = pneg %p96
        %p201 = pneg %p127
        %p202 = pneg %p124
        %s203 = sand.u32 %s114, 1
        %s204 = sand.u32 %s114, 1
        %s205 = smul.addr %s204, 176
        %s206 = scalar_lea.vmem [#allocation2], %s205
        %p207 = scmp.lt.s32.totalorder %s18, 0
        %s208 = scalar_select %p207, %s18, 0
        %s209 = smul.addr %s208, 258
        %s210 = smul.addr %s209, 8
        %s211 = scalar_lea.vmem %s0, %s210
        %p212 = scmp.lt.s32.totalorder %s18, 0
        %s213 = scalar_select %p212, %s18, 0
        %s214 = smul.addr %s213, 258
        %s215 = smul.addr %s214, 8
        %s216 = scalar_lea.vmem %s1, %s215
        %s217 = smul.u32 22, %s19
        %p218 = scmp.lt.s32.totalorder %s217, 43
        %s219 = scalar_select %p218, %s217, 43
        %s220 = smul.addr %s219, 17
        %s221 = smul.addr %s220, 4
        %s222 = scalar_lea.vmem %s2, %s221
        %s223 = smul.u32 22, %s19
        %s224 = smul.u32 22, %s19
        %s225 = ssub.s32 43, %s224
        %p226 = scmp.lt.s32.totalorder %s225, 22
        %s227 = scalar_select %p226, %s225, 22
        %s228 = smul.u32 128, %s227
        %v230 = vld [vmem:[%s211] sm:$0xff]
        %v231 = vld [vmem:[%s211 + $0x8] sm:$0xff]
        %v232 = vld [vmem:[%s211 + $0x10] sm:$0xff]
        %v233 = vld [vmem:[%s211 + $0x18] sm:$0xff]
        %v234 = vld [vmem:[%s211 + $0x20] sm:$0xff]
        %v235 = vld [vmem:[%s211 + $0x28] sm:$0xff]
        %v236 = vld [vmem:[%s211 + $0x30] sm:$0xff]
        %v237 = vld [vmem:[%s211 + $0x38] sm:$0xff]
        %v238 = vld [vmem:[%s211 + $0x40] sm:$0xff]
        %v239 = vld [vmem:[%s211 + $0x48] sm:$0xff]
        %v240 = vld [vmem:[%s211 + $0x50] sm:$0xff]
        %v241 = vld [vmem:[%s211 + $0x58] sm:$0xff]
        %v242 = vld [vmem:[%s211 + $0x60] sm:$0xff]
        %v243 = vld [vmem:[%s211 + $0x68] sm:$0xff]
        %v244 = vld [vmem:[%s211 + $0x70] sm:$0xff]
        %v245 = vld [vmem:[%s211 + $0x78] sm:$0xff]
        %v246 = vld [vmem:[%s211 + $0x80] sm:$0xff]
        %v247 = vld [vmem:[%s211 + $0x88] sm:$0xff]
        %v248 = vld [vmem:[%s211 + $0x90] sm:$0xff]
        %v249 = vld [vmem:[%s211 + $0x98] sm:$0xff]
        %v250 = vld [vmem:[%s211 + $0xa0] sm:$0xff]
        %v251 = vld [vmem:[%s211 + $0xa8] sm:$0xff]
        %v252 = vld [vmem:[%s211 + $0xb0] sm:$0xff]
        %v253 = vld [vmem:[%s211 + $0xb8] sm:$0xff]
        %v254 = vld [vmem:[%s211 + $0xc0] sm:$0xff]
        %v255 = vld [vmem:[%s211 + $0xc8] sm:$0xff]
        %v256 = vld [vmem:[%s211 + $0xd0] sm:$0xff]
        %v257 = vld [vmem:[%s211 + $0xd8] sm:$0xff]
        %v258 = vld [vmem:[%s211 + $0xe0] sm:$0xff]
        %v259 = vld [vmem:[%s211 + $0xe8] sm:$0xff]
        %v260 = vld [vmem:[%s211 + $0xf0] sm:$0xff]
        %v261 = vld [vmem:[%s211 + $0xf8] sm:$0xff]
        %v262 = vld [vmem:[%s211 + $0x100] sm:$0xff]
        %v263 = vld [vmem:[%s211 + $0x108] sm:$0xff]
        %v264 = vld [vmem:[%s211 + $0x110] sm:$0xff]
        %v265 = vld [vmem:[%s211 + $0x118] sm:$0xff]
        %v266 = vld [vmem:[%s211 + $0x120] sm:$0xff]
        %v267 = vld [vmem:[%s211 + $0x128] sm:$0xff]
        %v268 = vld [vmem:[%s211 + $0x130] sm:$0xff]
        %v269 = vld [vmem:[%s211 + $0x138] sm:$0xff]
        %v270 = vld [vmem:[%s211 + $0x140] sm:$0xff]
        %v271 = vld [vmem:[%s211 + $0x148] sm:$0xff]
        %v272 = vld [vmem:[%s211 + $0x150] sm:$0xff]
        %v273 = vld [vmem:[%s211 + $0x158] sm:$0xff]
        %v274 = vld [vmem:[%s211 + $0x160] sm:$0xff]
        %v275 = vld [vmem:[%s211 + $0x168] sm:$0xff]
        %v276 = vld [vmem:[%s211 + $0x170] sm:$0xff]
        %v277 = vld [vmem:[%s211 + $0x178] sm:$0xff]
        %v278 = vld [vmem:[%s211 + $0x180] sm:$0xff]
        %v279 = vld [vmem:[%s211 + $0x188] sm:$0xff]
        %v280 = vld [vmem:[%s211 + $0x190] sm:$0xff]
        %v281 = vld [vmem:[%s211 + $0x198] sm:$0xff]
        %v282 = vld [vmem:[%s211 + $0x1a0] sm:$0xff]
        %v283 = vld [vmem:[%s211 + $0x1a8] sm:$0xff]
        %v284 = vld [vmem:[%s211 + $0x1b0] sm:$0xff]
        %v285 = vld [vmem:[%s211 + $0x1b8] sm:$0xff]
        %v286 = vld [vmem:[%s211 + $0x1c0] sm:$0xff]
        %v287 = vld [vmem:[%s211 + $0x1c8] sm:$0xff]
        %v288 = vld [vmem:[%s211 + $0x1d0] sm:$0xff]
        %v289 = vld [vmem:[%s211 + $0x1d8] sm:$0xff]
        %v290 = vld [vmem:[%s211 + $0x1e0] sm:$0xff]
        %v291 = vld [vmem:[%s211 + $0x1e8] sm:$0xff]
        %v292 = vld [vmem:[%s211 + $0x1f0] sm:$0xff]
        %v293 = vld [vmem:[%s211 + $0x1f8] sm:$0xff]
        %v294 = vld [vmem:[%s211 + $0x200] sm:$0xff]
        %v295 = vld [vmem:[%s211 + $0x208] sm:$0xff]
        %v296 = vld [vmem:[%s211 + $0x210] sm:$0xff]
        %v297 = vld [vmem:[%s211 + $0x218] sm:$0xff]
        %v298 = vld [vmem:[%s211 + $0x220] sm:$0xff]
        %v299 = vld [vmem:[%s211 + $0x228] sm:$0xff]
        %v300 = vld [vmem:[%s211 + $0x230] sm:$0xff]
        %v301 = vld [vmem:[%s211 + $0x238] sm:$0xff]
        %v302 = vld [vmem:[%s211 + $0x240] sm:$0xff]
        %v303 = vld [vmem:[%s211 + $0x248] sm:$0xff]
        %v304 = vld [vmem:[%s211 + $0x250] sm:$0xff]
        %v305 = vld [vmem:[%s211 + $0x258] sm:$0xff]
        %v306 = vld [vmem:[%s211 + $0x260] sm:$0xff]
        %v307 = vld [vmem:[%s211 + $0x268] sm:$0xff]
        %v308 = vld [vmem:[%s211 + $0x270] sm:$0xff]
        %v309 = vld [vmem:[%s211 + $0x278] sm:$0xff]
        %v310 = vld [vmem:[%s211 + $0x280] sm:$0xff]
        %v311 = vld [vmem:[%s211 + $0x288] sm:$0xff]
        %v312 = vld [vmem:[%s211 + $0x290] sm:$0xff]
        %v313 = vld [vmem:[%s211 + $0x298] sm:$0xff]
        %v314 = vld [vmem:[%s211 + $0x2a0] sm:$0xff]
        %v315 = vld [vmem:[%s211 + $0x2a8] sm:$0xff]
        %v316 = vld [vmem:[%s211 + $0x2b0] sm:$0xff]
        %v317 = vld [vmem:[%s211 + $0x2b8] sm:$0xff]
        %v318 = vld [vmem:[%s211 + $0x2c0] sm:$0xff]
        %v319 = vld [vmem:[%s211 + $0x2c8] sm:$0xff]
        %v320 = vld [vmem:[%s211 + $0x2d0] sm:$0xff]
        %v321 = vld [vmem:[%s211 + $0x2d8] sm:$0xff]
        %v322 = vld [vmem:[%s211 + $0x2e0] sm:$0xff]
        %v323 = vld [vmem:[%s211 + $0x2e8] sm:$0xff]
        %v324 = vld [vmem:[%s211 + $0x2f0] sm:$0xff]
        %v325 = vld [vmem:[%s211 + $0x2f8] sm:$0xff]
        %v326 = vld [vmem:[%s211 + $0x300] sm:$0xff]
        %v327 = vld [vmem:[%s211 + $0x308] sm:$0xff]
        %v328 = vld [vmem:[%s211 + $0x310] sm:$0xff]
        %v329 = vld [vmem:[%s211 + $0x318] sm:$0xff]
        %v330 = vld [vmem:[%s211 + $0x320] sm:$0xff]
        %v331 = vld [vmem:[%s211 + $0x328] sm:$0xff]
        %v332 = vld [vmem:[%s211 + $0x330] sm:$0xff]
        %v333 = vld [vmem:[%s211 + $0x338] sm:$0xff]
        %v334 = vld [vmem:[%s211 + $0x340] sm:$0xff]
        %v335 = vld [vmem:[%s211 + $0x348] sm:$0xff]
        %v336 = vld [vmem:[%s211 + $0x350] sm:$0xff]
        %v337 = vld [vmem:[%s211 + $0x358] sm:$0xff]
        %v338 = vld [vmem:[%s211 + $0x360] sm:$0xff]
        %v339 = vld [vmem:[%s211 + $0x368] sm:$0xff]
        %v340 = vld [vmem:[%s211 + $0x370] sm:$0xff]
        %v341 = vld [vmem:[%s211 + $0x378] sm:$0xff]
        %v342 = vld [vmem:[%s211 + $0x380] sm:$0xff]
        %v343 = vld [vmem:[%s211 + $0x388] sm:$0xff]
        %v344 = vld [vmem:[%s211 + $0x390] sm:$0xff]
        %v345 = vld [vmem:[%s211 + $0x398] sm:$0xff]
        %v346 = vld [vmem:[%s211 + $0x3a0] sm:$0xff]
        %v347 = vld [vmem:[%s211 + $0x3a8] sm:$0xff]
        %v348 = vld [vmem:[%s211 + $0x3b0] sm:$0xff]
        %v349 = vld [vmem:[%s211 + $0x3b8] sm:$0xff]
        %v350 = vld [vmem:[%s211 + $0x3c0] sm:$0xff]
        %v351 = vld [vmem:[%s211 + $0x3c8] sm:$0xff]
        %v352 = vld [vmem:[%s211 + $0x3d0] sm:$0xff]
        %v353 = vld [vmem:[%s211 + $0x3d8] sm:$0xff]
        %v354 = vld [vmem:[%s211 + $0x3e0] sm:$0xff]
        %v355 = vld [vmem:[%s211 + $0x3e8] sm:$0xff]
        %v356 = vld [vmem:[%s211 + $0x3f0] sm:$0xff]
        %v357 = vld [vmem:[%s211 + $0x3f8] sm:$0xff]
        %v358 = vld [vmem:[%s211 + $0x400] sm:$0xff]
        %v359 = vld [vmem:[%s211 + $0x408] sm:$0xff]
        %v360 = vld [vmem:[%s211 + $0x410] sm:$0xff]
        %v361 = vld [vmem:[%s211 + $0x418] sm:$0xff]
        %v362 = vld [vmem:[%s211 + $0x420] sm:$0xff]
        %v363 = vld [vmem:[%s211 + $0x428] sm:$0xff]
        %v364 = vld [vmem:[%s211 + $0x430] sm:$0xff]
        %v365 = vld [vmem:[%s211 + $0x438] sm:$0xff]
        %v366 = vld [vmem:[%s211 + $0x440] sm:$0xff]
        %v367 = vld [vmem:[%s211 + $0x448] sm:$0xff]
        %v368 = vld [vmem:[%s211 + $0x450] sm:$0xff]
        %v369 = vld [vmem:[%s211 + $0x458] sm:$0xff]
        %v370 = vld [vmem:[%s211 + $0x460] sm:$0xff]
        %v371 = vld [vmem:[%s211 + $0x468] sm:$0xff]
        %v372 = vld [vmem:[%s211 + $0x470] sm:$0xff]
        %v373 = vld [vmem:[%s211 + $0x478] sm:$0xff]
        %v374 = vld [vmem:[%s211 + $0x480] sm:$0xff]
        %v375 = vld [vmem:[%s211 + $0x488] sm:$0xff]
        %v376 = vld [vmem:[%s211 + $0x490] sm:$0xff]
        %v377 = vld [vmem:[%s211 + $0x498] sm:$0xff]
        %v378 = vld [vmem:[%s211 + $0x4a0] sm:$0xff]
        %v379 = vld [vmem:[%s211 + $0x4a8] sm:$0xff]
        %v380 = vld [vmem:[%s211 + $0x4b0] sm:$0xff]
        %v381 = vld [vmem:[%s211 + $0x4b8] sm:$0xff]
        %v382 = vld [vmem:[%s211 + $0x4c0] sm:$0xff]
        %v383 = vld [vmem:[%s211 + $0x4c8] sm:$0xff]
        %v384 = vld [vmem:[%s211 + $0x4d0] sm:$0xff]
        %v385 = vld [vmem:[%s211 + $0x4d8] sm:$0xff]
        %v386 = vld [vmem:[%s211 + $0x4e0] sm:$0xff]
        %v387 = vld [vmem:[%s211 + $0x4e8] sm:$0xff]
        %v388 = vld [vmem:[%s211 + $0x4f0] sm:$0xff]
        %v389 = vld [vmem:[%s211 + $0x4f8] sm:$0xff]
        %v390 = vld [vmem:[%s211 + $0x500] sm:$0xff]
        %v391 = vld [vmem:[%s211 + $0x508] sm:$0xff]
        %v392 = vld [vmem:[%s211 + $0x510] sm:$0xff]
        %v393 = vld [vmem:[%s211 + $0x518] sm:$0xff]
        %v394 = vld [vmem:[%s211 + $0x520] sm:$0xff]
        %v395 = vld [vmem:[%s211 + $0x528] sm:$0xff]
        %v396 = vld [vmem:[%s211 + $0x530] sm:$0xff]
        %v397 = vld [vmem:[%s211 + $0x538] sm:$0xff]
        %v398 = vld [vmem:[%s211 + $0x540] sm:$0xff]
        %v399 = vld [vmem:[%s211 + $0x548] sm:$0xff]
        %v400 = vld [vmem:[%s211 + $0x550] sm:$0xff]
        %v401 = vld [vmem:[%s211 + $0x558] sm:$0xff]
        %v402 = vld [vmem:[%s211 + $0x560] sm:$0xff]
        %v403 = vld [vmem:[%s211 + $0x568] sm:$0xff]
        %v404 = vld [vmem:[%s211 + $0x570] sm:$0xff]
        %v405 = vld [vmem:[%s211 + $0x578] sm:$0xff]
        %v406 = vld [vmem:[%s211 + $0x580] sm:$0xff]
        %v407 = vld [vmem:[%s211 + $0x588] sm:$0xff]
        %v408 = vld [vmem:[%s211 + $0x590] sm:$0xff]
        %v409 = vld [vmem:[%s211 + $0x598] sm:$0xff]
        %v410 = vld [vmem:[%s211 + $0x5a0] sm:$0xff]
        %v411 = vld [vmem:[%s211 + $0x5a8] sm:$0xff]
        %v412 = vld [vmem:[%s211 + $0x5b0] sm:$0xff]
        %v413 = vld [vmem:[%s211 + $0x5b8] sm:$0xff]
        %v414 = vld [vmem:[%s211 + $0x5c0] sm:$0xff]
        %v415 = vld [vmem:[%s211 + $0x5c8] sm:$0xff]
        %v416 = vld [vmem:[%s211 + $0x5d0] sm:$0xff]
        %v417 = vld [vmem:[%s211 + $0x5d8] sm:$0xff]
        %v418 = vld [vmem:[%s211 + $0x5e0] sm:$0xff]
        %v419 = vld [vmem:[%s211 + $0x5e8] sm:$0xff]
        %v420 = vld [vmem:[%s211 + $0x5f0] sm:$0xff]
        %v421 = vld [vmem:[%s211 + $0x5f8] sm:$0xff]
        %v422 = vld [vmem:[%s211 + $0x600] sm:$0xff]
        %v423 = vld [vmem:[%s211 + $0x608] sm:$0xff]
        %v424 = vld [vmem:[%s211 + $0x610] sm:$0xff]
        %v425 = vld [vmem:[%s211 + $0x618] sm:$0xff]
        %v426 = vld [vmem:[%s211 + $0x620] sm:$0xff]
        %v427 = vld [vmem:[%s211 + $0x628] sm:$0xff]
        %v428 = vld [vmem:[%s211 + $0x630] sm:$0xff]
        %v429 = vld [vmem:[%s211 + $0x638] sm:$0xff]
        %v430 = vld [vmem:[%s211 + $0x640] sm:$0xff]
        %v431 = vld [vmem:[%s211 + $0x648] sm:$0xff]
        %v432 = vld [vmem:[%s211 + $0x650] sm:$0xff]
        %v433 = vld [vmem:[%s211 + $0x658] sm:$0xff]
        %v434 = vld [vmem:[%s211 + $0x660] sm:$0xff]
        %v435 = vld [vmem:[%s211 + $0x668] sm:$0xff]
        %v436 = vld [vmem:[%s211 + $0x670] sm:$0xff]
        %v437 = vld [vmem:[%s211 + $0x678] sm:$0xff]
        %v438 = vld [vmem:[%s211 + $0x680] sm:$0xff]
        %v439 = vld [vmem:[%s211 + $0x688] sm:$0xff]
        %v440 = vld [vmem:[%s211 + $0x690] sm:$0xff]
        %v441 = vld [vmem:[%s211 + $0x698] sm:$0xff]
        %v442 = vld [vmem:[%s211 + $0x6a0] sm:$0xff]
        %v443 = vld [vmem:[%s211 + $0x6a8] sm:$0xff]
        %v444 = vld [vmem:[%s211 + $0x6b0] sm:$0xff]
        %v445 = vld [vmem:[%s211 + $0x6b8] sm:$0xff]
        %v446 = vld [vmem:[%s211 + $0x6c0] sm:$0xff]
        %v447 = vld [vmem:[%s211 + $0x6c8] sm:$0xff]
        %v448 = vld [vmem:[%s211 + $0x6d0] sm:$0xff]
        %v449 = vld [vmem:[%s211 + $0x6d8] sm:$0xff]
        %v450 = vld [vmem:[%s211 + $0x6e0] sm:$0xff]
        %v451 = vld [vmem:[%s211 + $0x6e8] sm:$0xff]
        %v452 = vld [vmem:[%s211 + $0x6f0] sm:$0xff]
        %v453 = vld [vmem:[%s211 + $0x6f8] sm:$0xff]
        %v454 = vld [vmem:[%s211 + $0x700] sm:$0xff]
        %v455 = vld [vmem:[%s211 + $0x708] sm:$0xff]
        %v456 = vld [vmem:[%s211 + $0x710] sm:$0xff]
        %v457 = vld [vmem:[%s211 + $0x718] sm:$0xff]
        %v458 = vld [vmem:[%s211 + $0x720] sm:$0xff]
        %v459 = vld [vmem:[%s211 + $0x728] sm:$0xff]
        %v460 = vld [vmem:[%s211 + $0x730] sm:$0xff]
        %v461 = vld [vmem:[%s211 + $0x738] sm:$0xff]
        %v462 = vld [vmem:[%s211 + $0x740] sm:$0xff]
        %v463 = vld [vmem:[%s211 + $0x748] sm:$0xff]
        %v464 = vld [vmem:[%s211 + $0x750] sm:$0xff]
        %v465 = vld [vmem:[%s211 + $0x758] sm:$0xff]
        %v466 = vld [vmem:[%s211 + $0x760] sm:$0xff]
        %v467 = vld [vmem:[%s211 + $0x768] sm:$0xff]
        %v468 = vld [vmem:[%s211 + $0x770] sm:$0xff]
        %v469 = vld [vmem:[%s211 + $0x778] sm:$0xff]
        %v470 = vld [vmem:[%s211 + $0x780] sm:$0xff]
        %v471 = vld [vmem:[%s211 + $0x788] sm:$0xff]
        %v472 = vld [vmem:[%s211 + $0x790] sm:$0xff]
        %v473 = vld [vmem:[%s211 + $0x798] sm:$0xff]
        %v474 = vld [vmem:[%s211 + $0x7a0] sm:$0xff]
        %v475 = vld [vmem:[%s211 + $0x7a8] sm:$0xff]
        %v476 = vld [vmem:[%s211 + $0x7b0] sm:$0xff]
        %v477 = vld [vmem:[%s211 + $0x7b8] sm:$0xff]
        %v478 = vld [vmem:[%s211 + $0x7c0] sm:$0xff]
        %v479 = vld [vmem:[%s211 + $0x7c8] sm:$0xff]
        %v480 = vld [vmem:[%s211 + $0x7d0] sm:$0xff]
        %v481 = vld [vmem:[%s211 + $0x7d8] sm:$0xff]
        %v482 = vld [vmem:[%s211 + $0x7e0] sm:$0xff]
        %v483 = vld [vmem:[%s211 + $0x7e8] sm:$0xff]
        %v484 = vld [vmem:[%s211 + $0x7f0] sm:$0xff]
        %v485 = vld [vmem:[%s211 + $0x7f8] sm:$0xff]
        %v486 = vld [vmem:[%s211 + $0x800] sm:$0xff]
        %v487 = vld [vmem:[%s211 + $0x808] sm:$0xff]
        %v488 = vld [vmem:[%s216] sm:$0xff]
        %v489 = vld [vmem:[%s216 + $0x8] sm:$0xff]
        %v490 = vld [vmem:[%s216 + $0x10] sm:$0xff]
        %v491 = vld [vmem:[%s216 + $0x18] sm:$0xff]
        %v492 = vld [vmem:[%s216 + $0x20] sm:$0xff]
        %v493 = vld [vmem:[%s216 + $0x28] sm:$0xff]
        %v494 = vld [vmem:[%s216 + $0x30] sm:$0xff]
        %v495 = vld [vmem:[%s216 + $0x38] sm:$0xff]
        %v496 = vld [vmem:[%s216 + $0x40] sm:$0xff]
        %v497 = vld [vmem:[%s216 + $0x48] sm:$0xff]
        %v498 = vld [vmem:[%s216 + $0x50] sm:$0xff]
        %v499 = vld [vmem:[%s216 + $0x58] sm:$0xff]
        %v500 = vld [vmem:[%s216 + $0x60] sm:$0xff]
        %v501 = vld [vmem:[%s216 + $0x68] sm:$0xff]
        %v502 = vld [vmem:[%s216 + $0x70] sm:$0xff]
        %v503 = vld [vmem:[%s216 + $0x78] sm:$0xff]
        %v504 = vld [vmem:[%s216 + $0x80] sm:$0xff]
        %v505 = vld [vmem:[%s216 + $0x88] sm:$0xff]
        %v506 = vld [vmem:[%s216 + $0x90] sm:$0xff]
        %v507 = vld [vmem:[%s216 + $0x98] sm:$0xff]
        %v508 = vld [vmem:[%s216 + $0xa0] sm:$0xff]
        %v509 = vld [vmem:[%s216 + $0xa8] sm:$0xff]
        %v510 = vld [vmem:[%s216 + $0xb0] sm:$0xff]
        %v511 = vld [vmem:[%s216 + $0xb8] sm:$0xff]
        %v512 = vld [vmem:[%s216 + $0xc0] sm:$0xff]
        %v513 = vld [vmem:[%s216 + $0xc8] sm:$0xff]
        %v514 = vld [vmem:[%s216 + $0xd0] sm:$0xff]
        %v515 = vld [vmem:[%s216 + $0xd8] sm:$0xff]
        %v516 = vld [vmem:[%s216 + $0xe0] sm:$0xff]
        %v517 = vld [vmem:[%s216 + $0xe8] sm:$0xff]
        %v518 = vld [vmem:[%s216 + $0xf0] sm:$0xff]
        %v519 = vld [vmem:[%s216 + $0xf8] sm:$0xff]
        %v520 = vld [vmem:[%s216 + $0x100] sm:$0xff]
        %v521 = vld [vmem:[%s216 + $0x108] sm:$0xff]
        %v522 = vld [vmem:[%s216 + $0x110] sm:$0xff]
        %v523 = vld [vmem:[%s216 + $0x118] sm:$0xff]
        %v524 = vld [vmem:[%s216 + $0x120] sm:$0xff]
        %v525 = vld [vmem:[%s216 + $0x128] sm:$0xff]
        %v526 = vld [vmem:[%s216 + $0x130] sm:$0xff]
        %v527 = vld [vmem:[%s216 + $0x138] sm:$0xff]
        %v528 = vld [vmem:[%s216 + $0x140] sm:$0xff]
        %v529 = vld [vmem:[%s216 + $0x148] sm:$0xff]
        %v530 = vld [vmem:[%s216 + $0x150] sm:$0xff]
        %v531 = vld [vmem:[%s216 + $0x158] sm:$0xff]
        %v532 = vld [vmem:[%s216 + $0x160] sm:$0xff]
        %v533 = vld [vmem:[%s216 + $0x168] sm:$0xff]
        %v534 = vld [vmem:[%s216 + $0x170] sm:$0xff]
        %v535 = vld [vmem:[%s216 + $0x178] sm:$0xff]
        %v536 = vld [vmem:[%s216 + $0x180] sm:$0xff]
        %v537 = vld [vmem:[%s216 + $0x188] sm:$0xff]
        %v538 = vld [vmem:[%s216 + $0x190] sm:$0xff]
        %v539 = vld [vmem:[%s216 + $0x198] sm:$0xff]
        %v540 = vld [vmem:[%s216 + $0x1a0] sm:$0xff]
        %v541 = vld [vmem:[%s216 + $0x1a8] sm:$0xff]
        %v542 = vld [vmem:[%s216 + $0x1b0] sm:$0xff]
        %v543 = vld [vmem:[%s216 + $0x1b8] sm:$0xff]
        %v544 = vld [vmem:[%s216 + $0x1c0] sm:$0xff]
        %v545 = vld [vmem:[%s216 + $0x1c8] sm:$0xff]
        %v546 = vld [vmem:[%s216 + $0x1d0] sm:$0xff]
        %v547 = vld [vmem:[%s216 + $0x1d8] sm:$0xff]
        %v548 = vld [vmem:[%s216 + $0x1e0] sm:$0xff]
        %v549 = vld [vmem:[%s216 + $0x1e8] sm:$0xff]
        %v550 = vld [vmem:[%s216 + $0x1f0] sm:$0xff]
        %v551 = vld [vmem:[%s216 + $0x1f8] sm:$0xff]
        %v552 = vld [vmem:[%s216 + $0x200] sm:$0xff]
        %v553 = vld [vmem:[%s216 + $0x208] sm:$0xff]
        %v554 = vld [vmem:[%s216 + $0x210] sm:$0xff]
        %v555 = vld [vmem:[%s216 + $0x218] sm:$0xff]
        %v556 = vld [vmem:[%s216 + $0x220] sm:$0xff]
        %v557 = vld [vmem:[%s216 + $0x228] sm:$0xff]
        %v558 = vld [vmem:[%s216 + $0x230] sm:$0xff]
        %v559 = vld [vmem:[%s216 + $0x238] sm:$0xff]
        %v560 = vld [vmem:[%s216 + $0x240] sm:$0xff]
        %v561 = vld [vmem:[%s216 + $0x248] sm:$0xff]
        %v562 = vld [vmem:[%s216 + $0x250] sm:$0xff]
        %v563 = vld [vmem:[%s216 + $0x258] sm:$0xff]
        %v564 = vld [vmem:[%s216 + $0x260] sm:$0xff]
        %v565 = vld [vmem:[%s216 + $0x268] sm:$0xff]
        %v566 = vld [vmem:[%s216 + $0x270] sm:$0xff]
        %v567 = vld [vmem:[%s216 + $0x278] sm:$0xff]
        %v568 = vld [vmem:[%s216 + $0x280] sm:$0xff]
        %v569 = vld [vmem:[%s216 + $0x288] sm:$0xff]
        %v570 = vld [vmem:[%s216 + $0x290] sm:$0xff]
        %v571 = vld [vmem:[%s216 + $0x298] sm:$0xff]
        %v572 = vld [vmem:[%s216 + $0x2a0] sm:$0xff]
        %v573 = vld [vmem:[%s216 + $0x2a8] sm:$0xff]
        %v574 = vld [vmem:[%s216 + $0x2b0] sm:$0xff]
        %v575 = vld [vmem:[%s216 + $0x2b8] sm:$0xff]
        %v576 = vld [vmem:[%s216 + $0x2c0] sm:$0xff]
        %v577 = vld [vmem:[%s216 + $0x2c8] sm:$0xff]
        %v578 = vld [vmem:[%s216 + $0x2d0] sm:$0xff]
        %v579 = vld [vmem:[%s216 + $0x2d8] sm:$0xff]
        %v580 = vld [vmem:[%s216 + $0x2e0] sm:$0xff]
        %v581 = vld [vmem:[%s216 + $0x2e8] sm:$0xff]
        %v582 = vld [vmem:[%s216 + $0x2f0] sm:$0xff]
        %v583 = vld [vmem:[%s216 + $0x2f8] sm:$0xff]
        %v584 = vld [vmem:[%s216 + $0x300] sm:$0xff]
        %v585 = vld [vmem:[%s216 + $0x308] sm:$0xff]
        %v586 = vld [vmem:[%s216 + $0x310] sm:$0xff]
        %v587 = vld [vmem:[%s216 + $0x318] sm:$0xff]
        %v588 = vld [vmem:[%s216 + $0x320] sm:$0xff]
        %v589 = vld [vmem:[%s216 + $0x328] sm:$0xff]
        %v590 = vld [vmem:[%s216 + $0x330] sm:$0xff]
        %v591 = vld [vmem:[%s216 + $0x338] sm:$0xff]
        %v592 = vld [vmem:[%s216 + $0x340] sm:$0xff]
        %v593 = vld [vmem:[%s216 + $0x348] sm:$0xff]
        %v594 = vld [vmem:[%s216 + $0x350] sm:$0xff]
        %v595 = vld [vmem:[%s216 + $0x358] sm:$0xff]
        %v596 = vld [vmem:[%s216 + $0x360] sm:$0xff]
        %v597 = vld [vmem:[%s216 + $0x368] sm:$0xff]
        %v598 = vld [vmem:[%s216 + $0x370] sm:$0xff]
        %v599 = vld [vmem:[%s216 + $0x378] sm:$0xff]
        %v600 = vld [vmem:[%s216 + $0x380] sm:$0xff]
        %v601 = vld [vmem:[%s216 + $0x388] sm:$0xff]
        %v602 = vld [vmem:[%s216 + $0x390] sm:$0xff]
        %v603 = vld [vmem:[%s216 + $0x398] sm:$0xff]
        %v604 = vld [vmem:[%s216 + $0x3a0] sm:$0xff]
        %v605 = vld [vmem:[%s216 + $0x3a8] sm:$0xff]
        %v606 = vld [vmem:[%s216 + $0x3b0] sm:$0xff]
        %v607 = vld [vmem:[%s216 + $0x3b8] sm:$0xff]
        %v608 = vld [vmem:[%s216 + $0x3c0] sm:$0xff]
        %v609 = vld [vmem:[%s216 + $0x3c8] sm:$0xff]
        %v610 = vld [vmem:[%s216 + $0x3d0] sm:$0xff]
        %v611 = vld [vmem:[%s216 + $0x3d8] sm:$0xff]
        %v612 = vld [vmem:[%s216 + $0x3e0] sm:$0xff]
        %v613 = vld [vmem:[%s216 + $0x3e8] sm:$0xff]
        %v614 = vld [vmem:[%s216 + $0x3f0] sm:$0xff]
        %v615 = vld [vmem:[%s216 + $0x3f8] sm:$0xff]
        %v616 = vld [vmem:[%s216 + $0x400] sm:$0xff]
        %v617 = vld [vmem:[%s216 + $0x408] sm:$0xff]
        %v618 = vld [vmem:[%s216 + $0x410] sm:$0xff]
        %v619 = vld [vmem:[%s216 + $0x418] sm:$0xff]
        %v620 = vld [vmem:[%s216 + $0x420] sm:$0xff]
        %v621 = vld [vmem:[%s216 + $0x428] sm:$0xff]
        %v622 = vld [vmem:[%s216 + $0x430] sm:$0xff]
        %v623 = vld [vmem:[%s216 + $0x438] sm:$0xff]
        %v624 = vld [vmem:[%s216 + $0x440] sm:$0xff]
        %v625 = vld [vmem:[%s216 + $0x448] sm:$0xff]
        %v626 = vld [vmem:[%s216 + $0x450] sm:$0xff]
        %v627 = vld [vmem:[%s216 + $0x458] sm:$0xff]
        %v628 = vld [vmem:[%s216 + $0x460] sm:$0xff]
        %v629 = vld [vmem:[%s216 + $0x468] sm:$0xff]
        %v630 = vld [vmem:[%s216 + $0x470] sm:$0xff]
        %v631 = vld [vmem:[%s216 + $0x478] sm:$0xff]
        %v632 = vld [vmem:[%s216 + $0x480] sm:$0xff]
        %v633 = vld [vmem:[%s216 + $0x488] sm:$0xff]
        %v634 = vld [vmem:[%s216 + $0x490] sm:$0xff]
        %v635 = vld [vmem:[%s216 + $0x498] sm:$0xff]
        %v636 = vld [vmem:[%s216 + $0x4a0] sm:$0xff]
        %v637 = vld [vmem:[%s216 + $0x4a8] sm:$0xff]
        %v638 = vld [vmem:[%s216 + $0x4b0] sm:$0xff]
        %v639 = vld [vmem:[%s216 + $0x4b8] sm:$0xff]
        %v640 = vld [vmem:[%s216 + $0x4c0] sm:$0xff]
        %v641 = vld [vmem:[%s216 + $0x4c8] sm:$0xff]
        %v642 = vld [vmem:[%s216 + $0x4d0] sm:$0xff]
        %v643 = vld [vmem:[%s216 + $0x4d8] sm:$0xff]
        %v644 = vld [vmem:[%s216 + $0x4e0] sm:$0xff]
        %v645 = vld [vmem:[%s216 + $0x4e8] sm:$0xff]
        %v646 = vld [vmem:[%s216 + $0x4f0] sm:$0xff]
        %v647 = vld [vmem:[%s216 + $0x4f8] sm:$0xff]
        %v648 = vld [vmem:[%s216 + $0x500] sm:$0xff]
        %v649 = vld [vmem:[%s216 + $0x508] sm:$0xff]
        %v650 = vld [vmem:[%s216 + $0x510] sm:$0xff]
        %v651 = vld [vmem:[%s216 + $0x518] sm:$0xff]
        %v652 = vld [vmem:[%s216 + $0x520] sm:$0xff]
        %v653 = vld [vmem:[%s216 + $0x528] sm:$0xff]
        %v654 = vld [vmem:[%s216 + $0x530] sm:$0xff]
        %v655 = vld [vmem:[%s216 + $0x538] sm:$0xff]
        %v656 = vld [vmem:[%s216 + $0x540] sm:$0xff]
        %v657 = vld [vmem:[%s216 + $0x548] sm:$0xff]
        %v658 = vld [vmem:[%s216 + $0x550] sm:$0xff]
        %v659 = vld [vmem:[%s216 + $0x558] sm:$0xff]
        %v660 = vld [vmem:[%s216 + $0x560] sm:$0xff]
        %v661 = vld [vmem:[%s216 + $0x568] sm:$0xff]
        %v662 = vld [vmem:[%s216 + $0x570] sm:$0xff]
        %v663 = vld [vmem:[%s216 + $0x578] sm:$0xff]
        %v664 = vld [vmem:[%s216 + $0x580] sm:$0xff]
        %v665 = vld [vmem:[%s216 + $0x588] sm:$0xff]
        %v666 = vld [vmem:[%s216 + $0x590] sm:$0xff]
        %v667 = vld [vmem:[%s216 + $0x598] sm:$0xff]
        %v668 = vld [vmem:[%s216 + $0x5a0] sm:$0xff]
        %v669 = vld [vmem:[%s216 + $0x5a8] sm:$0xff]
        %v670 = vld [vmem:[%s216 + $0x5b0] sm:$0xff]
        %v671 = vld [vmem:[%s216 + $0x5b8] sm:$0xff]
        %v672 = vld [vmem:[%s216 + $0x5c0] sm:$0xff]
        %v673 = vld [vmem:[%s216 + $0x5c8] sm:$0xff]
        %v674 = vld [vmem:[%s216 + $0x5d0] sm:$0xff]
        %v675 = vld [vmem:[%s216 + $0x5d8] sm:$0xff]
        %v676 = vld [vmem:[%s216 + $0x5e0] sm:$0xff]
        %v677 = vld [vmem:[%s216 + $0x5e8] sm:$0xff]
        %v678 = vld [vmem:[%s216 + $0x5f0] sm:$0xff]
        %v679 = vld [vmem:[%s216 + $0x5f8] sm:$0xff]
        %v680 = vld [vmem:[%s216 + $0x600] sm:$0xff]
        %v681 = vld [vmem:[%s216 + $0x608] sm:$0xff]
        %v682 = vld [vmem:[%s216 + $0x610] sm:$0xff]
        %v683 = vld [vmem:[%s216 + $0x618] sm:$0xff]
        %v684 = vld [vmem:[%s216 + $0x620] sm:$0xff]
        %v685 = vld [vmem:[%s216 + $0x628] sm:$0xff]
        %v686 = vld [vmem:[%s216 + $0x630] sm:$0xff]
        %v687 = vld [vmem:[%s216 + $0x638] sm:$0xff]
        %v688 = vld [vmem:[%s216 + $0x640] sm:$0xff]
        %v689 = vld [vmem:[%s216 + $0x648] sm:$0xff]
        %v690 = vld [vmem:[%s216 + $0x650] sm:$0xff]
        %v691 = vld [vmem:[%s216 + $0x658] sm:$0xff]
        %v692 = vld [vmem:[%s216 + $0x660] sm:$0xff]
        %v693 = vld [vmem:[%s216 + $0x668] sm:$0xff]
        %v694 = vld [vmem:[%s216 + $0x670] sm:$0xff]
        %v695 = vld [vmem:[%s216 + $0x678] sm:$0xff]
        %v696 = vld [vmem:[%s216 + $0x680] sm:$0xff]
        %v697 = vld [vmem:[%s216 + $0x688] sm:$0xff]
        %v698 = vld [vmem:[%s216 + $0x690] sm:$0xff]
        %v699 = vld [vmem:[%s216 + $0x698] sm:$0xff]
        %v700 = vld [vmem:[%s216 + $0x6a0] sm:$0xff]
        %v701 = vld [vmem:[%s216 + $0x6a8] sm:$0xff]
        %v702 = vld [vmem:[%s216 + $0x6b0] sm:$0xff]
        %v703 = vld [vmem:[%s216 + $0x6b8] sm:$0xff]
        %v704 = vld [vmem:[%s216 + $0x6c0] sm:$0xff]
        %v705 = vld [vmem:[%s216 + $0x6c8] sm:$0xff]
        %v706 = vld [vmem:[%s216 + $0x6d0] sm:$0xff]
        %v707 = vld [vmem:[%s216 + $0x6d8] sm:$0xff]
        %v708 = vld [vmem:[%s216 + $0x6e0] sm:$0xff]
        %v709 = vld [vmem:[%s216 + $0x6e8] sm:$0xff]
        %v710 = vld [vmem:[%s216 + $0x6f0] sm:$0xff]
        %v711 = vld [vmem:[%s216 + $0x6f8] sm:$0xff]
        %v712 = vld [vmem:[%s216 + $0x700] sm:$0xff]
        %v713 = vld [vmem:[%s216 + $0x708] sm:$0xff]
        %v714 = vld [vmem:[%s216 + $0x710] sm:$0xff]
        %v715 = vld [vmem:[%s216 + $0x718] sm:$0xff]
        %v716 = vld [vmem:[%s216 + $0x720] sm:$0xff]
        %v717 = vld [vmem:[%s216 + $0x728] sm:$0xff]
        %v718 = vld [vmem:[%s216 + $0x730] sm:$0xff]
        %v719 = vld [vmem:[%s216 + $0x738] sm:$0xff]
        %v720 = vld [vmem:[%s216 + $0x740] sm:$0xff]
        %v721 = vld [vmem:[%s216 + $0x748] sm:$0xff]
        %v722 = vld [vmem:[%s216 + $0x750] sm:$0xff]
        %v723 = vld [vmem:[%s216 + $0x758] sm:$0xff]
        %v724 = vld [vmem:[%s216 + $0x760] sm:$0xff]
        %v725 = vld [vmem:[%s216 + $0x768] sm:$0xff]
        %v726 = vld [vmem:[%s216 + $0x770] sm:$0xff]
        %v727 = vld [vmem:[%s216 + $0x778] sm:$0xff]
        %v728 = vld [vmem:[%s216 + $0x780] sm:$0xff]
        %v729 = vld [vmem:[%s216 + $0x788] sm:$0xff]
        %v730 = vld [vmem:[%s216 + $0x790] sm:$0xff]
        %v731 = vld [vmem:[%s216 + $0x798] sm:$0xff]
        %v732 = vld [vmem:[%s216 + $0x7a0] sm:$0xff]
        %v733 = vld [vmem:[%s216 + $0x7a8] sm:$0xff]
        %v734 = vld [vmem:[%s216 + $0x7b0] sm:$0xff]
        %v735 = vld [vmem:[%s216 + $0x7b8] sm:$0xff]
        %v736 = vld [vmem:[%s216 + $0x7c0] sm:$0xff]
        %v737 = vld [vmem:[%s216 + $0x7c8] sm:$0xff]
        %v738 = vld [vmem:[%s216 + $0x7d0] sm:$0xff]
        %v739 = vld [vmem:[%s216 + $0x7d8] sm:$0xff]
        %v740 = vld [vmem:[%s216 + $0x7e0] sm:$0xff]
        %v741 = vld [vmem:[%s216 + $0x7e8] sm:$0xff]
        %v742 = vld [vmem:[%s216 + $0x7f0] sm:$0xff]
        %v743 = vld [vmem:[%s216 + $0x7f8] sm:$0xff]
        %v744 = vld [vmem:[%s216 + $0x800] sm:$0xff]
        %v745 = vld [vmem:[%s216 + $0x808] sm:$0xff]
        %747 = vset.pattern.permute.xlu0 0
        %748 = vperm.xlu0 %747, %v488
        %v749 = vpop.permute.xlu0 %748
        %752 = vset.pattern.permute.xlu0 0
        %753 = vperm.xlu0 %752, %v489
        %v754 = vpop.permute.xlu0 %753
        %757 = vset.pattern.permute.xlu0 0
        %758 = vperm.xlu0 %757, %v490
        %v759 = vpop.permute.xlu0 %758
        %762 = vset.pattern.permute.xlu0 0
        %763 = vperm.xlu0 %762, %v491
        %v764 = vpop.permute.xlu0 %763
        %767 = vset.pattern.permute.xlu0 0
        %768 = vperm.xlu0 %767, %v492
        %v769 = vpop.permute.xlu0 %768
        %772 = vset.pattern.permute.xlu0 0
        %773 = vperm.xlu0 %772, %v493
        %v774 = vpop.permute.xlu0 %773
        %777 = vset.pattern.permute.xlu0 0
        %778 = vperm.xlu0 %777, %v494
        %v779 = vpop.permute.xlu0 %778
        %782 = vset.pattern.permute.xlu0 0
        %783 = vperm.xlu0 %782, %v495
        %v784 = vpop.permute.xlu0 %783
        %787 = vset.pattern.permute.xlu0 0
        %788 = vperm.xlu0 %787, %v496
        %v789 = vpop.permute.xlu0 %788
        %792 = vset.pattern.permute.xlu0 0
        %793 = vperm.xlu0 %792, %v497
        %v794 = vpop.permute.xlu0 %793
        %797 = vset.pattern.permute.xlu0 0
        %798 = vperm.xlu0 %797, %v498
        %v799 = vpop.permute.xlu0 %798
        %802 = vset.pattern.permute.xlu0 0
        %803 = vperm.xlu0 %802, %v499
        %v804 = vpop.permute.xlu0 %803
        %807 = vset.pattern.permute.xlu0 0
        %808 = vperm.xlu0 %807, %v500
        %v809 = vpop.permute.xlu0 %808
        %812 = vset.pattern.permute.xlu0 0
        %813 = vperm.xlu0 %812, %v501
        %v814 = vpop.permute.xlu0 %813
        %817 = vset.pattern.permute.xlu0 0
        %818 = vperm.xlu0 %817, %v502
        %v819 = vpop.permute.xlu0 %818
        %822 = vset.pattern.permute.xlu0 0
        %823 = vperm.xlu0 %822, %v503
        %v824 = vpop.permute.xlu0 %823
        %827 = vset.pattern.permute.xlu0 0
        %828 = vperm.xlu0 %827, %v504
        %v829 = vpop.permute.xlu0 %828
        %832 = vset.pattern.permute.xlu0 0
        %833 = vperm.xlu0 %832, %v505
        %v834 = vpop.permute.xlu0 %833
        %837 = vset.pattern.permute.xlu0 0
        %838 = vperm.xlu0 %837, %v506
        %v839 = vpop.permute.xlu0 %838
        %842 = vset.pattern.permute.xlu0 0
        %843 = vperm.xlu0 %842, %v507
        %v844 = vpop.permute.xlu0 %843
        %847 = vset.pattern.permute.xlu0 0
        %848 = vperm.xlu0 %847, %v508
        %v849 = vpop.permute.xlu0 %848
        %852 = vset.pattern.permute.xlu0 0
        %853 = vperm.xlu0 %852, %v509
        %v854 = vpop.permute.xlu0 %853
        %857 = vset.pattern.permute.xlu0 0
        %858 = vperm.xlu0 %857, %v510
        %v859 = vpop.permute.xlu0 %858
        %862 = vset.pattern.permute.xlu0 0
        %863 = vperm.xlu0 %862, %v511
        %v864 = vpop.permute.xlu0 %863
        %867 = vset.pattern.permute.xlu0 0
        %868 = vperm.xlu0 %867, %v512
        %v869 = vpop.permute.xlu0 %868
        %872 = vset.pattern.permute.xlu0 0
        %873 = vperm.xlu0 %872, %v513
        %v874 = vpop.permute.xlu0 %873
        %877 = vset.pattern.permute.xlu0 0
        %878 = vperm.xlu0 %877, %v514
        %v879 = vpop.permute.xlu0 %878
        %882 = vset.pattern.permute.xlu0 0
        %883 = vperm.xlu0 %882, %v515
        %v884 = vpop.permute.xlu0 %883
        %887 = vset.pattern.permute.xlu0 0
        %888 = vperm.xlu0 %887, %v516
        %v889 = vpop.permute.xlu0 %888
        %892 = vset.pattern.permute.xlu0 0
        %893 = vperm.xlu0 %892, %v517
        %v894 = vpop.permute.xlu0 %893
        %897 = vset.pattern.permute.xlu0 0
        %898 = vperm.xlu0 %897, %v518
        %v899 = vpop.permute.xlu0 %898
        %902 = vset.pattern.permute.xlu0 0
        %903 = vperm.xlu0 %902, %v519
        %v904 = vpop.permute.xlu0 %903
        %907 = vset.pattern.permute.xlu0 0
        %908 = vperm.xlu0 %907, %v520
        %v909 = vpop.permute.xlu0 %908
        %912 = vset.pattern.permute.xlu0 0
        %913 = vperm.xlu0 %912, %v521
        %v914 = vpop.permute.xlu0 %913
        %917 = vset.pattern.permute.xlu0 0
        %918 = vperm.xlu0 %917, %v522
        %v919 = vpop.permute.xlu0 %918
        %922 = vset.pattern.permute.xlu0 0
        %923 = vperm.xlu0 %922, %v523
        %v924 = vpop.permute.xlu0 %923
        %927 = vset.pattern.permute.xlu0 0
        %928 = vperm.xlu0 %927, %v524
        %v929 = vpop.permute.xlu0 %928
        %932 = vset.pattern.permute.xlu0 0
        %933 = vperm.xlu0 %932, %v525
        %v934 = vpop.permute.xlu0 %933
        %937 = vset.pattern.permute.xlu0 0
        %938 = vperm.xlu0 %937, %v526
        %v939 = vpop.permute.xlu0 %938
        %942 = vset.pattern.permute.xlu0 0
        %943 = vperm.xlu0 %942, %v527
        %v944 = vpop.permute.xlu0 %943
        %947 = vset.pattern.permute.xlu0 0
        %948 = vperm.xlu0 %947, %v528
        %v949 = vpop.permute.xlu0 %948
        %952 = vset.pattern.permute.xlu0 0
        %953 = vperm.xlu0 %952, %v529
        %v954 = vpop.permute.xlu0 %953
        %957 = vset.pattern.permute.xlu0 0
        %958 = vperm.xlu0 %957, %v530
        %v959 = vpop.permute.xlu0 %958
        %962 = vset.pattern.permute.xlu0 0
        %963 = vperm.xlu0 %962, %v531
        %v964 = vpop.permute.xlu0 %963
        %967 = vset.pattern.permute.xlu0 0
        %968 = vperm.xlu0 %967, %v532
        %v969 = vpop.permute.xlu0 %968
        %972 = vset.pattern.permute.xlu0 0
        %973 = vperm.xlu0 %972, %v533
        %v974 = vpop.permute.xlu0 %973
        %977 = vset.pattern.permute.xlu0 0
        %978 = vperm.xlu0 %977, %v534
        %v979 = vpop.permute.xlu0 %978
        %982 = vset.pattern.permute.xlu0 0
        %983 = vperm.xlu0 %982, %v535
        %v984 = vpop.permute.xlu0 %983
        %987 = vset.pattern.permute.xlu0 0
        %988 = vperm.xlu0 %987, %v536
        %v989 = vpop.permute.xlu0 %988
        %992 = vset.pattern.permute.xlu0 0
        %993 = vperm.xlu0 %992, %v537
        %v994 = vpop.permute.xlu0 %993
        %997 = vset.pattern.permute.xlu0 0
        %998 = vperm.xlu0 %997, %v538
        %v999 = vpop.permute.xlu0 %998
        %1002 = vset.pattern.permute.xlu0 0
        %1003 = vperm.xlu0 %1002, %v539
        %v1004 = vpop.permute.xlu0 %1003
        %1007 = vset.pattern.permute.xlu0 0
        %1008 = vperm.xlu0 %1007, %v540
        %v1009 = vpop.permute.xlu0 %1008
        %1012 = vset.pattern.permute.xlu0 0
        %1013 = vperm.xlu0 %1012, %v541
        %v1014 = vpop.permute.xlu0 %1013
        %1017 = vset.pattern.permute.xlu0 0
        %1018 = vperm.xlu0 %1017, %v542
        %v1019 = vpop.permute.xlu0 %1018
        %1022 = vset.pattern.permute.xlu0 0
        %1023 = vperm.xlu0 %1022, %v543
        %v1024 = vpop.permute.xlu0 %1023
        %1027 = vset.pattern.permute.xlu0 0
        %1028 = vperm.xlu0 %1027, %v544
        %v1029 = vpop.permute.xlu0 %1028
        %1032 = vset.pattern.permute.xlu0 0
        %1033 = vperm.xlu0 %1032, %v545
        %v1034 = vpop.permute.xlu0 %1033
        %1037 = vset.pattern.permute.xlu0 0
        %1038 = vperm.xlu0 %1037, %v546
        %v1039 = vpop.permute.xlu0 %1038
        %1042 = vset.pattern.permute.xlu0 0
        %1043 = vperm.xlu0 %1042, %v547
        %v1044 = vpop.permute.xlu0 %1043
        %1047 = vset.pattern.permute.xlu0 0
        %1048 = vperm.xlu0 %1047, %v548
        %v1049 = vpop.permute.xlu0 %1048
        %1052 = vset.pattern.permute.xlu0 0
        %1053 = vperm.xlu0 %1052, %v549
        %v1054 = vpop.permute.xlu0 %1053
        %1057 = vset.pattern.permute.xlu0 0
        %1058 = vperm.xlu0 %1057, %v550
        %v1059 = vpop.permute.xlu0 %1058
        %1062 = vset.pattern.permute.xlu0 0
        %1063 = vperm.xlu0 %1062, %v551
        %v1064 = vpop.permute.xlu0 %1063
        %1067 = vset.pattern.permute.xlu0 0
        %1068 = vperm.xlu0 %1067, %v552
        %v1069 = vpop.permute.xlu0 %1068
        %1072 = vset.pattern.permute.xlu0 0
        %1073 = vperm.xlu0 %1072, %v553
        %v1074 = vpop.permute.xlu0 %1073
        %1077 = vset.pattern.permute.xlu0 0
        %1078 = vperm.xlu0 %1077, %v554
        %v1079 = vpop.permute.xlu0 %1078
        %1082 = vset.pattern.permute.xlu0 0
        %1083 = vperm.xlu0 %1082, %v555
        %v1084 = vpop.permute.xlu0 %1083
        %1087 = vset.pattern.permute.xlu0 0
        %1088 = vperm.xlu0 %1087, %v556
        %v1089 = vpop.permute.xlu0 %1088
        %1092 = vset.pattern.permute.xlu0 0
        %1093 = vperm.xlu0 %1092, %v557
        %v1094 = vpop.permute.xlu0 %1093
        %1097 = vset.pattern.permute.xlu0 0
        %1098 = vperm.xlu0 %1097, %v558
        %v1099 = vpop.permute.xlu0 %1098
        %1102 = vset.pattern.permute.xlu0 0
        %1103 = vperm.xlu0 %1102, %v559
        %v1104 = vpop.permute.xlu0 %1103
        %1107 = vset.pattern.permute.xlu0 0
        %1108 = vperm.xlu0 %1107, %v560
        %v1109 = vpop.permute.xlu0 %1108
        %1112 = vset.pattern.permute.xlu0 0
        %1113 = vperm.xlu0 %1112, %v561
        %v1114 = vpop.permute.xlu0 %1113
        %1117 = vset.pattern.permute.xlu0 0
        %1118 = vperm.xlu0 %1117, %v562
        %v1119 = vpop.permute.xlu0 %1118
        %1122 = vset.pattern.permute.xlu0 0
        %1123 = vperm.xlu0 %1122, %v563
        %v1124 = vpop.permute.xlu0 %1123
        %1127 = vset.pattern.permute.xlu0 0
        %1128 = vperm.xlu0 %1127, %v564
        %v1129 = vpop.permute.xlu0 %1128
        %1132 = vset.pattern.permute.xlu0 0
        %1133 = vperm.xlu0 %1132, %v565
        %v1134 = vpop.permute.xlu0 %1133
        %1137 = vset.pattern.permute.xlu0 0
        %1138 = vperm.xlu0 %1137, %v566
        %v1139 = vpop.permute.xlu0 %1138
        %1142 = vset.pattern.permute.xlu0 0
        %1143 = vperm.xlu0 %1142, %v567
        %v1144 = vpop.permute.xlu0 %1143
        %1147 = vset.pattern.permute.xlu0 0
        %1148 = vperm.xlu0 %1147, %v568
        %v1149 = vpop.permute.xlu0 %1148
        %1152 = vset.pattern.permute.xlu0 0
        %1153 = vperm.xlu0 %1152, %v569
        %v1154 = vpop.permute.xlu0 %1153
        %1157 = vset.pattern.permute.xlu0 0
        %1158 = vperm.xlu0 %1157, %v570
        %v1159 = vpop.permute.xlu0 %1158
        %1162 = vset.pattern.permute.xlu0 0
        %1163 = vperm.xlu0 %1162, %v571
        %v1164 = vpop.permute.xlu0 %1163
        %1167 = vset.pattern.permute.xlu0 0
        %1168 = vperm.xlu0 %1167, %v572
        %v1169 = vpop.permute.xlu0 %1168
        %1172 = vset.pattern.permute.xlu0 0
        %1173 = vperm.xlu0 %1172, %v573
        %v1174 = vpop.permute.xlu0 %1173
        %1177 = vset.pattern.permute.xlu0 0
        %1178 = vperm.xlu0 %1177, %v574
        %v1179 = vpop.permute.xlu0 %1178
        %1182 = vset.pattern.permute.xlu0 0
        %1183 = vperm.xlu0 %1182, %v575
        %v1184 = vpop.permute.xlu0 %1183
        %1187 = vset.pattern.permute.xlu0 0
        %1188 = vperm.xlu0 %1187, %v576
        %v1189 = vpop.permute.xlu0 %1188
        %1192 = vset.pattern.permute.xlu0 0
        %1193 = vperm.xlu0 %1192, %v577
        %v1194 = vpop.permute.xlu0 %1193
        %1197 = vset.pattern.permute.xlu0 0
        %1198 = vperm.xlu0 %1197, %v578
        %v1199 = vpop.permute.xlu0 %1198
        %1202 = vset.pattern.permute.xlu0 0
        %1203 = vperm.xlu0 %1202, %v579
        %v1204 = vpop.permute.xlu0 %1203
        %1207 = vset.pattern.permute.xlu0 0
        %1208 = vperm.xlu0 %1207, %v580
        %v1209 = vpop.permute.xlu0 %1208
        %1212 = vset.pattern.permute.xlu0 0
        %1213 = vperm.xlu0 %1212, %v581
        %v1214 = vpop.permute.xlu0 %1213
        %1217 = vset.pattern.permute.xlu0 0
        %1218 = vperm.xlu0 %1217, %v582
        %v1219 = vpop.permute.xlu0 %1218
        %1222 = vset.pattern.permute.xlu0 0
        %1223 = vperm.xlu0 %1222, %v583
        %v1224 = vpop.permute.xlu0 %1223
        %1227 = vset.pattern.permute.xlu0 0
        %1228 = vperm.xlu0 %1227, %v584
        %v1229 = vpop.permute.xlu0 %1228
        %1232 = vset.pattern.permute.xlu0 0
        %1233 = vperm.xlu0 %1232, %v585
        %v1234 = vpop.permute.xlu0 %1233
        %1237 = vset.pattern.permute.xlu0 0
        %1238 = vperm.xlu0 %1237, %v586
        %v1239 = vpop.permute.xlu0 %1238
        %1242 = vset.pattern.permute.xlu0 0
        %1243 = vperm.xlu0 %1242, %v587
        %v1244 = vpop.permute.xlu0 %1243
        %1247 = vset.pattern.permute.xlu0 0
        %1248 = vperm.xlu0 %1247, %v588
        %v1249 = vpop.permute.xlu0 %1248
        %1252 = vset.pattern.permute.xlu0 0
        %1253 = vperm.xlu0 %1252, %v589
        %v1254 = vpop.permute.xlu0 %1253
        %1257 = vset.pattern.permute.xlu0 0
        %1258 = vperm.xlu0 %1257, %v590
        %v1259 = vpop.permute.xlu0 %1258
        %1262 = vset.pattern.permute.xlu0 0
        %1263 = vperm.xlu0 %1262, %v591
        %v1264 = vpop.permute.xlu0 %1263
        %1267 = vset.pattern.permute.xlu0 0
        %1268 = vperm.xlu0 %1267, %v592
        %v1269 = vpop.permute.xlu0 %1268
        %1272 = vset.pattern.permute.xlu0 0
        %1273 = vperm.xlu0 %1272, %v593
        %v1274 = vpop.permute.xlu0 %1273
        %1277 = vset.pattern.permute.xlu0 0
        %1278 = vperm.xlu0 %1277, %v594
        %v1279 = vpop.permute.xlu0 %1278
        %1282 = vset.pattern.permute.xlu0 0
        %1283 = vperm.xlu0 %1282, %v595
        %v1284 = vpop.permute.xlu0 %1283
        %1287 = vset.pattern.permute.xlu0 0
        %1288 = vperm.xlu0 %1287, %v596
        %v1289 = vpop.permute.xlu0 %1288
        %1292 = vset.pattern.permute.xlu0 0
        %1293 = vperm.xlu0 %1292, %v597
        %v1294 = vpop.permute.xlu0 %1293
        %1297 = vset.pattern.permute.xlu0 0
        %1298 = vperm.xlu0 %1297, %v598
        %v1299 = vpop.permute.xlu0 %1298
        %1302 = vset.pattern.permute.xlu0 0
        %1303 = vperm.xlu0 %1302, %v599
        %v1304 = vpop.permute.xlu0 %1303
        %1307 = vset.pattern.permute.xlu0 0
        %1308 = vperm.xlu0 %1307, %v600
        %v1309 = vpop.permute.xlu0 %1308
        %1312 = vset.pattern.permute.xlu0 0
        %1313 = vperm.xlu0 %1312, %v601
        %v1314 = vpop.permute.xlu0 %1313
        %1317 = vset.pattern.permute.xlu0 0
        %1318 = vperm.xlu0 %1317, %v602
        %v1319 = vpop.permute.xlu0 %1318
        %1322 = vset.pattern.permute.xlu0 0
        %1323 = vperm.xlu0 %1322, %v603
        %v1324 = vpop.permute.xlu0 %1323
        %1327 = vset.pattern.permute.xlu0 0
        %1328 = vperm.xlu0 %1327, %v604
        %v1329 = vpop.permute.xlu0 %1328
        %1332 = vset.pattern.permute.xlu0 0
        %1333 = vperm.xlu0 %1332, %v605
        %v1334 = vpop.permute.xlu0 %1333
        %1337 = vset.pattern.permute.xlu0 0
        %1338 = vperm.xlu0 %1337, %v606
        %v1339 = vpop.permute.xlu0 %1338
        %1342 = vset.pattern.permute.xlu0 0
        %1343 = vperm.xlu0 %1342, %v607
        %v1344 = vpop.permute.xlu0 %1343
        %1347 = vset.pattern.permute.xlu0 0
        %1348 = vperm.xlu0 %1347, %v608
        %v1349 = vpop.permute.xlu0 %1348
        %1352 = vset.pattern.permute.xlu0 0
        %1353 = vperm.xlu0 %1352, %v609
        %v1354 = vpop.permute.xlu0 %1353
        %1357 = vset.pattern.permute.xlu0 0
        %1358 = vperm.xlu0 %1357, %v610
        %v1359 = vpop.permute.xlu0 %1358
        %1362 = vset.pattern.permute.xlu0 0
        %1363 = vperm.xlu0 %1362, %v611
        %v1364 = vpop.permute.xlu0 %1363
        %1367 = vset.pattern.permute.xlu0 0
        %1368 = vperm.xlu0 %1367, %v612
        %v1369 = vpop.permute.xlu0 %1368
        %1372 = vset.pattern.permute.xlu0 0
        %1373 = vperm.xlu0 %1372, %v613
        %v1374 = vpop.permute.xlu0 %1373
        %1377 = vset.pattern.permute.xlu0 0
        %1378 = vperm.xlu0 %1377, %v614
        %v1379 = vpop.permute.xlu0 %1378
        %1382 = vset.pattern.permute.xlu0 0
        %1383 = vperm.xlu0 %1382, %v615
        %v1384 = vpop.permute.xlu0 %1383
        %1387 = vset.pattern.permute.xlu0 0
        %1388 = vperm.xlu0 %1387, %v616
        %v1389 = vpop.permute.xlu0 %1388
        %1392 = vset.pattern.permute.xlu0 0
        %1393 = vperm.xlu0 %1392, %v617
        %v1394 = vpop.permute.xlu0 %1393
        %1397 = vset.pattern.permute.xlu0 0
        %1398 = vperm.xlu0 %1397, %v618
        %v1399 = vpop.permute.xlu0 %1398
        %1402 = vset.pattern.permute.xlu0 0
        %1403 = vperm.xlu0 %1402, %v619
        %v1404 = vpop.permute.xlu0 %1403
        %1407 = vset.pattern.permute.xlu0 0
        %1408 = vperm.xlu0 %1407, %v620
        %v1409 = vpop.permute.xlu0 %1408
        %1412 = vset.pattern.permute.xlu0 0
        %1413 = vperm.xlu0 %1412, %v621
        %v1414 = vpop.permute.xlu0 %1413
        %1417 = vset.pattern.permute.xlu0 0
        %1418 = vperm.xlu0 %1417, %v622
        %v1419 = vpop.permute.xlu0 %1418
        %1422 = vset.pattern.permute.xlu0 0
        %1423 = vperm.xlu0 %1422, %v623
        %v1424 = vpop.permute.xlu0 %1423
        %1427 = vset.pattern.permute.xlu0 0
        %1428 = vperm.xlu0 %1427, %v624
        %v1429 = vpop.permute.xlu0 %1428
        %1432 = vset.pattern.permute.xlu0 0
        %1433 = vperm.xlu0 %1432, %v625
        %v1434 = vpop.permute.xlu0 %1433
        %1437 = vset.pattern.permute.xlu0 0
        %1438 = vperm.xlu0 %1437, %v626
        %v1439 = vpop.permute.xlu0 %1438
        %1442 = vset.pattern.permute.xlu0 0
        %1443 = vperm.xlu0 %1442, %v627
        %v1444 = vpop.permute.xlu0 %1443
        %1447 = vset.pattern.permute.xlu0 0
        %1448 = vperm.xlu0 %1447, %v628
        %v1449 = vpop.permute.xlu0 %1448
        %1452 = vset.pattern.permute.xlu0 0
        %1453 = vperm.xlu0 %1452, %v629
        %v1454 = vpop.permute.xlu0 %1453
        %1457 = vset.pattern.permute.xlu0 0
        %1458 = vperm.xlu0 %1457, %v630
        %v1459 = vpop.permute.xlu0 %1458
        %1462 = vset.pattern.permute.xlu0 0
        %1463 = vperm.xlu0 %1462, %v631
        %v1464 = vpop.permute.xlu0 %1463
        %1467 = vset.pattern.permute.xlu0 0
        %1468 = vperm.xlu0 %1467, %v632
        %v1469 = vpop.permute.xlu0 %1468
        %1472 = vset.pattern.permute.xlu0 0
        %1473 = vperm.xlu0 %1472, %v633
        %v1474 = vpop.permute.xlu0 %1473
        %1477 = vset.pattern.permute.xlu0 0
        %1478 = vperm.xlu0 %1477, %v634
        %v1479 = vpop.permute.xlu0 %1478
        %1482 = vset.pattern.permute.xlu0 0
        %1483 = vperm.xlu0 %1482, %v635
        %v1484 = vpop.permute.xlu0 %1483
        %1487 = vset.pattern.permute.xlu0 0
        %1488 = vperm.xlu0 %1487, %v636
        %v1489 = vpop.permute.xlu0 %1488
        %1492 = vset.pattern.permute.xlu0 0
        %1493 = vperm.xlu0 %1492, %v637
        %v1494 = vpop.permute.xlu0 %1493
        %1497 = vset.pattern.permute.xlu0 0
        %1498 = vperm.xlu0 %1497, %v638
        %v1499 = vpop.permute.xlu0 %1498
        %1502 = vset.pattern.permute.xlu0 0
        %1503 = vperm.xlu0 %1502, %v639
        %v1504 = vpop.permute.xlu0 %1503
        %1507 = vset.pattern.permute.xlu0 0
        %1508 = vperm.xlu0 %1507, %v640
        %v1509 = vpop.permute.xlu0 %1508
        %1512 = vset.pattern.permute.xlu0 0
        %1513 = vperm.xlu0 %1512, %v641
        %v1514 = vpop.permute.xlu0 %1513
        %1517 = vset.pattern.permute.xlu0 0
        %1518 = vperm.xlu0 %1517, %v642
        %v1519 = vpop.permute.xlu0 %1518
        %1522 = vset.pattern.permute.xlu0 0
        %1523 = vperm.xlu0 %1522, %v643
        %v1524 = vpop.permute.xlu0 %1523
        %1527 = vset.pattern.permute.xlu0 0
        %1528 = vperm.xlu0 %1527, %v644
        %v1529 = vpop.permute.xlu0 %1528
        %1532 = vset.pattern.permute.xlu0 0
        %1533 = vperm.xlu0 %1532, %v645
        %v1534 = vpop.permute.xlu0 %1533
        %1537 = vset.pattern.permute.xlu0 0
        %1538 = vperm.xlu0 %1537, %v646
        %v1539 = vpop.permute.xlu0 %1538
        %1542 = vset.pattern.permute.xlu0 0
        %1543 = vperm.xlu0 %1542, %v647
        %v1544 = vpop.permute.xlu0 %1543
        %1547 = vset.pattern.permute.xlu0 0
        %1548 = vperm.xlu0 %1547, %v648
        %v1549 = vpop.permute.xlu0 %1548
        %1552 = vset.pattern.permute.xlu0 0
        %1553 = vperm.xlu0 %1552, %v649
        %v1554 = vpop.permute.xlu0 %1553
        %1557 = vset.pattern.permute.xlu0 0
        %1558 = vperm.xlu0 %1557, %v650
        %v1559 = vpop.permute.xlu0 %1558
        %1562 = vset.pattern.permute.xlu0 0
        %1563 = vperm.xlu0 %1562, %v651
        %v1564 = vpop.permute.xlu0 %1563
        %1567 = vset.pattern.permute.xlu0 0
        %1568 = vperm.xlu0 %1567, %v652
        %v1569 = vpop.permute.xlu0 %1568
        %1572 = vset.pattern.permute.xlu0 0
        %1573 = vperm.xlu0 %1572, %v653
        %v1574 = vpop.permute.xlu0 %1573
        %1577 = vset.pattern.permute.xlu0 0
        %1578 = vperm.xlu0 %1577, %v654
        %v1579 = vpop.permute.xlu0 %1578
        %1582 = vset.pattern.permute.xlu0 0
        %1583 = vperm.xlu0 %1582, %v655
        %v1584 = vpop.permute.xlu0 %1583
        %1587 = vset.pattern.permute.xlu0 0
        %1588 = vperm.xlu0 %1587, %v656
        %v1589 = vpop.permute.xlu0 %1588
        %1592 = vset.pattern.permute.xlu0 0
        %1593 = vperm.xlu0 %1592, %v657
        %v1594 = vpop.permute.xlu0 %1593
        %1597 = vset.pattern.permute.xlu0 0
        %1598 = vperm.xlu0 %1597, %v658
        %v1599 = vpop.permute.xlu0 %1598
        %1602 = vset.pattern.permute.xlu0 0
        %1603 = vperm.xlu0 %1602, %v659
        %v1604 = vpop.permute.xlu0 %1603
        %1607 = vset.pattern.permute.xlu0 0
        %1608 = vperm.xlu0 %1607, %v660
        %v1609 = vpop.permute.xlu0 %1608
        %1612 = vset.pattern.permute.xlu0 0
        %1613 = vperm.xlu0 %1612, %v661
        %v1614 = vpop.permute.xlu0 %1613
        %1617 = vset.pattern.permute.xlu0 0
        %1618 = vperm.xlu0 %1617, %v662
        %v1619 = vpop.permute.xlu0 %1618
        %1622 = vset.pattern.permute.xlu0 0
        %1623 = vperm.xlu0 %1622, %v663
        %v1624 = vpop.permute.xlu0 %1623
        %1627 = vset.pattern.permute.xlu0 0
        %1628 = vperm.xlu0 %1627, %v664
        %v1629 = vpop.permute.xlu0 %1628
        %1632 = vset.pattern.permute.xlu0 0
        %1633 = vperm.xlu0 %1632, %v665
        %v1634 = vpop.permute.xlu0 %1633
        %1637 = vset.pattern.permute.xlu0 0
        %1638 = vperm.xlu0 %1637, %v666
        %v1639 = vpop.permute.xlu0 %1638
        %1642 = vset.pattern.permute.xlu0 0
        %1643 = vperm.xlu0 %1642, %v667
        %v1644 = vpop.permute.xlu0 %1643
        %1647 = vset.pattern.permute.xlu0 0
        %1648 = vperm.xlu0 %1647, %v668
        %v1649 = vpop.permute.xlu0 %1648
        %1652 = vset.pattern.permute.xlu0 0
        %1653 = vperm.xlu0 %1652, %v669
        %v1654 = vpop.permute.xlu0 %1653
        %1657 = vset.pattern.permute.xlu0 0
        %1658 = vperm.xlu0 %1657, %v670
        %v1659 = vpop.permute.xlu0 %1658
        %1662 = vset.pattern.permute.xlu0 0
        %1663 = vperm.xlu0 %1662, %v671
        %v1664 = vpop.permute.xlu0 %1663
        %1667 = vset.pattern.permute.xlu0 0
        %1668 = vperm.xlu0 %1667, %v672
        %v1669 = vpop.permute.xlu0 %1668
        %1672 = vset.pattern.permute.xlu0 0
        %1673 = vperm.xlu0 %1672, %v673
        %v1674 = vpop.permute.xlu0 %1673
        %1677 = vset.pattern.permute.xlu0 0
        %1678 = vperm.xlu0 %1677, %v674
        %v1679 = vpop.permute.xlu0 %1678
        %1682 = vset.pattern.permute.xlu0 0
        %1683 = vperm.xlu0 %1682, %v675
        %v1684 = vpop.permute.xlu0 %1683
        %1687 = vset.pattern.permute.xlu0 0
        %1688 = vperm.xlu0 %1687, %v676
        %v1689 = vpop.permute.xlu0 %1688
        %1692 = vset.pattern.permute.xlu0 0
        %1693 = vperm.xlu0 %1692, %v677
        %v1694 = vpop.permute.xlu0 %1693
        %1697 = vset.pattern.permute.xlu0 0
        %1698 = vperm.xlu0 %1697, %v678
        %v1699 = vpop.permute.xlu0 %1698
        %1702 = vset.pattern.permute.xlu0 0
        %1703 = vperm.xlu0 %1702, %v679
        %v1704 = vpop.permute.xlu0 %1703
        %1707 = vset.pattern.permute.xlu0 0
        %1708 = vperm.xlu0 %1707, %v680
        %v1709 = vpop.permute.xlu0 %1708
        %1712 = vset.pattern.permute.xlu0 0
        %1713 = vperm.xlu0 %1712, %v681
        %v1714 = vpop.permute.xlu0 %1713
        %1717 = vset.pattern.permute.xlu0 0
        %1718 = vperm.xlu0 %1717, %v682
        %v1719 = vpop.permute.xlu0 %1718
        %1722 = vset.pattern.permute.xlu0 0
        %1723 = vperm.xlu0 %1722, %v683
        %v1724 = vpop.permute.xlu0 %1723
        %1727 = vset.pattern.permute.xlu0 0
        %1728 = vperm.xlu0 %1727, %v684
        %v1729 = vpop.permute.xlu0 %1728
        %1732 = vset.pattern.permute.xlu0 0
        %1733 = vperm.xlu0 %1732, %v685
        %v1734 = vpop.permute.xlu0 %1733
        %1737 = vset.pattern.permute.xlu0 0
        %1738 = vperm.xlu0 %1737, %v686
        %v1739 = vpop.permute.xlu0 %1738
        %1742 = vset.pattern.permute.xlu0 0
        %1743 = vperm.xlu0 %1742, %v687
        %v1744 = vpop.permute.xlu0 %1743
        %1747 = vset.pattern.permute.xlu0 0
        %1748 = vperm.xlu0 %1747, %v688
        %v1749 = vpop.permute.xlu0 %1748
        %1752 = vset.pattern.permute.xlu0 0
        %1753 = vperm.xlu0 %1752, %v689
        %v1754 = vpop.permute.xlu0 %1753
        %1757 = vset.pattern.permute.xlu0 0
        %1758 = vperm.xlu0 %1757, %v690
        %v1759 = vpop.permute.xlu0 %1758
        %1762 = vset.pattern.permute.xlu0 0
        %1763 = vperm.xlu0 %1762, %v691
        %v1764 = vpop.permute.xlu0 %1763
        %1767 = vset.pattern.permute.xlu0 0
        %1768 = vperm.xlu0 %1767, %v692
        %v1769 = vpop.permute.xlu0 %1768
        %1772 = vset.pattern.permute.xlu0 0
        %1773 = vperm.xlu0 %1772, %v693
        %v1774 = vpop.permute.xlu0 %1773
        %1777 = vset.pattern.permute.xlu0 0
        %1778 = vperm.xlu0 %1777, %v694
        %v1779 = vpop.permute.xlu0 %1778
        %1782 = vset.pattern.permute.xlu0 0
        %1783 = vperm.xlu0 %1782, %v695
        %v1784 = vpop.permute.xlu0 %1783
        %1787 = vset.pattern.permute.xlu0 0
        %1788 = vperm.xlu0 %1787, %v696
        %v1789 = vpop.permute.xlu0 %1788
        %1792 = vset.pattern.permute.xlu0 0
        %1793 = vperm.xlu0 %1792, %v697
        %v1794 = vpop.permute.xlu0 %1793
        %1797 = vset.pattern.permute.xlu0 0
        %1798 = vperm.xlu0 %1797, %v698
        %v1799 = vpop.permute.xlu0 %1798
        %1802 = vset.pattern.permute.xlu0 0
        %1803 = vperm.xlu0 %1802, %v699
        %v1804 = vpop.permute.xlu0 %1803
        %1807 = vset.pattern.permute.xlu0 0
        %1808 = vperm.xlu0 %1807, %v700
        %v1809 = vpop.permute.xlu0 %1808
        %1812 = vset.pattern.permute.xlu0 0
        %1813 = vperm.xlu0 %1812, %v701
        %v1814 = vpop.permute.xlu0 %1813
        %1817 = vset.pattern.permute.xlu0 0
        %1818 = vperm.xlu0 %1817, %v702
        %v1819 = vpop.permute.xlu0 %1818
        %1822 = vset.pattern.permute.xlu0 0
        %1823 = vperm.xlu0 %1822, %v703
        %v1824 = vpop.permute.xlu0 %1823
        %1827 = vset.pattern.permute.xlu0 0
        %1828 = vperm.xlu0 %1827, %v704
        %v1829 = vpop.permute.xlu0 %1828
        %1832 = vset.pattern.permute.xlu0 0
        %1833 = vperm.xlu0 %1832, %v705
        %v1834 = vpop.permute.xlu0 %1833
        %1837 = vset.pattern.permute.xlu0 0
        %1838 = vperm.xlu0 %1837, %v706
        %v1839 = vpop.permute.xlu0 %1838
        %1842 = vset.pattern.permute.xlu0 0
        %1843 = vperm.xlu0 %1842, %v707
        %v1844 = vpop.permute.xlu0 %1843
        %1847 = vset.pattern.permute.xlu0 0
        %1848 = vperm.xlu0 %1847, %v708
        %v1849 = vpop.permute.xlu0 %1848
        %1852 = vset.pattern.permute.xlu0 0
        %1853 = vperm.xlu0 %1852, %v709
        %v1854 = vpop.permute.xlu0 %1853
        %1857 = vset.pattern.permute.xlu0 0
        %1858 = vperm.xlu0 %1857, %v710
        %v1859 = vpop.permute.xlu0 %1858
        %1862 = vset.pattern.permute.xlu0 0
        %1863 = vperm.xlu0 %1862, %v711
        %v1864 = vpop.permute.xlu0 %1863
        %1867 = vset.pattern.permute.xlu0 0
        %1868 = vperm.xlu0 %1867, %v712
        %v1869 = vpop.permute.xlu0 %1868
        %1872 = vset.pattern.permute.xlu0 0
        %1873 = vperm.xlu0 %1872, %v713
        %v1874 = vpop.permute.xlu0 %1873
        %1877 = vset.pattern.permute.xlu0 0
        %1878 = vperm.xlu0 %1877, %v714
        %v1879 = vpop.permute.xlu0 %1878
        %1882 = vset.pattern.permute.xlu0 0
        %1883 = vperm.xlu0 %1882, %v715
        %v1884 = vpop.permute.xlu0 %1883
        %1887 = vset.pattern.permute.xlu0 0
        %1888 = vperm.xlu0 %1887, %v716
        %v1889 = vpop.permute.xlu0 %1888
        %1892 = vset.pattern.permute.xlu0 0
        %1893 = vperm.xlu0 %1892, %v717
        %v1894 = vpop.permute.xlu0 %1893
        %1897 = vset.pattern.permute.xlu0 0
        %1898 = vperm.xlu0 %1897, %v718
        %v1899 = vpop.permute.xlu0 %1898
        %1902 = vset.pattern.permute.xlu0 0
        %1903 = vperm.xlu0 %1902, %v719
        %v1904 = vpop.permute.xlu0 %1903
        %1907 = vset.pattern.permute.xlu0 0
        %1908 = vperm.xlu0 %1907, %v720
        %v1909 = vpop.permute.xlu0 %1908
        %1912 = vset.pattern.permute.xlu0 0
        %1913 = vperm.xlu0 %1912, %v721
        %v1914 = vpop.permute.xlu0 %1913
        %1917 = vset.pattern.permute.xlu0 0
        %1918 = vperm.xlu0 %1917, %v722
        %v1919 = vpop.permute.xlu0 %1918
        %1922 = vset.pattern.permute.xlu0 0
        %1923 = vperm.xlu0 %1922, %v723
        %v1924 = vpop.permute.xlu0 %1923
        %1927 = vset.pattern.permute.xlu0 0
        %1928 = vperm.xlu0 %1927, %v724
        %v1929 = vpop.permute.xlu0 %1928
        %1932 = vset.pattern.permute.xlu0 0
        %1933 = vperm.xlu0 %1932, %v725
        %v1934 = vpop.permute.xlu0 %1933
        %1937 = vset.pattern.permute.xlu0 0
        %1938 = vperm.xlu0 %1937, %v726
        %v1939 = vpop.permute.xlu0 %1938
        %1942 = vset.pattern.permute.xlu0 0
        %1943 = vperm.xlu0 %1942, %v727
        %v1944 = vpop.permute.xlu0 %1943
        %1947 = vset.pattern.permute.xlu0 0
        %1948 = vperm.xlu0 %1947, %v728
        %v1949 = vpop.permute.xlu0 %1948
        %1952 = vset.pattern.permute.xlu0 0
        %1953 = vperm.xlu0 %1952, %v729
        %v1954 = vpop.permute.xlu0 %1953
        %1957 = vset.pattern.permute.xlu0 0
        %1958 = vperm.xlu0 %1957, %v730
        %v1959 = vpop.permute.xlu0 %1958
        %1962 = vset.pattern.permute.xlu0 0
        %1963 = vperm.xlu0 %1962, %v731
        %v1964 = vpop.permute.xlu0 %1963
        %1967 = vset.pattern.permute.xlu0 0
        %1968 = vperm.xlu0 %1967, %v732
        %v1969 = vpop.permute.xlu0 %1968
        %1972 = vset.pattern.permute.xlu0 0
        %1973 = vperm.xlu0 %1972, %v733
        %v1974 = vpop.permute.xlu0 %1973
        %1977 = vset.pattern.permute.xlu0 0
        %1978 = vperm.xlu0 %1977, %v734
        %v1979 = vpop.permute.xlu0 %1978
        %1982 = vset.pattern.permute.xlu0 0
        %1983 = vperm.xlu0 %1982, %v735
        %v1984 = vpop.permute.xlu0 %1983
        %1987 = vset.pattern.permute.xlu0 0
        %1988 = vperm.xlu0 %1987, %v736
        %v1989 = vpop.permute.xlu0 %1988
        %1992 = vset.pattern.permute.xlu0 0
        %1993 = vperm.xlu0 %1992, %v737
        %v1994 = vpop.permute.xlu0 %1993
        %1997 = vset.pattern.permute.xlu0 0
        %1998 = vperm.xlu0 %1997, %v738
        %v1999 = vpop.permute.xlu0 %1998
        %2002 = vset.pattern.permute.xlu0 0
        %2003 = vperm.xlu0 %2002, %v739
        %v2004 = vpop.permute.xlu0 %2003
        %2007 = vset.pattern.permute.xlu0 0
        %2008 = vperm.xlu0 %2007, %v740
        %v2009 = vpop.permute.xlu0 %2008
        %2012 = vset.pattern.permute.xlu0 0
        %2013 = vperm.xlu0 %2012, %v741
        %v2014 = vpop.permute.xlu0 %2013
        %2017 = vset.pattern.permute.xlu0 0
        %2018 = vperm.xlu0 %2017, %v742
        %v2019 = vpop.permute.xlu0 %2018
        %2022 = vset.pattern.permute.xlu0 0
        %2023 = vperm.xlu0 %2022, %v743
        %v2024 = vpop.permute.xlu0 %2023
        %2027 = vset.pattern.permute.xlu0 0
        %2028 = vperm.xlu0 %2027, %v744
        %v2029 = vpop.permute.xlu0 %2028
        %2032 = vset.pattern.permute.xlu0 0
        %2033 = vperm.xlu0 %2032, %v745
        %v2034 = vpop.permute.xlu0 %2033
        %v2036 = vmul.f32 %v230, %v749
        %v2037 = vmul.f32 %v231, %v754
        %v2038 = vmul.f32 %v232, %v759
        %v2039 = vmul.f32 %v233, %v764
        %v2040 = vmul.f32 %v234, %v769
        %v2041 = vmul.f32 %v235, %v774
        %v2042 = vmul.f32 %v236, %v779
        %v2043 = vmul.f32 %v237, %v784
        %v2044 = vmul.f32 %v238, %v789
        %v2045 = vmul.f32 %v239, %v794
        %v2046 = vmul.f32 %v240, %v799
        %v2047 = vmul.f32 %v241, %v804
        %v2048 = vmul.f32 %v242, %v809
        %v2049 = vmul.f32 %v243, %v814
        %v2050 = vmul.f32 %v244, %v819
        %v2051 = vmul.f32 %v245, %v824
        %v2052 = vmul.f32 %v246, %v829
        %v2053 = vmul.f32 %v247, %v834
        %v2054 = vmul.f32 %v248, %v839
        %v2055 = vmul.f32 %v249, %v844
        %v2056 = vmul.f32 %v250, %v849
        %v2057 = vmul.f32 %v251, %v854
        %v2058 = vmul.f32 %v252, %v859
        %v2059 = vmul.f32 %v253, %v864
        %v2060 = vmul.f32 %v254, %v869
        %v2061 = vmul.f32 %v255, %v874
        %v2062 = vmul.f32 %v256, %v879
        %v2063 = vmul.f32 %v257, %v884
        %v2064 = vmul.f32 %v258, %v889
        %v2065 = vmul.f32 %v259, %v894
        %v2066 = vmul.f32 %v260, %v899
        %v2067 = vmul.f32 %v261, %v904
        %v2068 = vmul.f32 %v262, %v909
        %v2069 = vmul.f32 %v263, %v914
        %v2070 = vmul.f32 %v264, %v919
        %v2071 = vmul.f32 %v265, %v924
        %v2072 = vmul.f32 %v266, %v929
        %v2073 = vmul.f32 %v267, %v934
        %v2074 = vmul.f32 %v268, %v939
        %v2075 = vmul.f32 %v269, %v944
        %v2076 = vmul.f32 %v270, %v949
        %v2077 = vmul.f32 %v271, %v954
        %v2078 = vmul.f32 %v272, %v959
        %v2079 = vmul.f32 %v273, %v964
        %v2080 = vmul.f32 %v274, %v969
        %v2081 = vmul.f32 %v275, %v974
        %v2082 = vmul.f32 %v276, %v979
        %v2083 = vmul.f32 %v277, %v984
        %v2084 = vmul.f32 %v278, %v989
        %v2085 = vmul.f32 %v279, %v994
        %v2086 = vmul.f32 %v280, %v999
        %v2087 = vmul.f32 %v281, %v1004
        %v2088 = vmul.f32 %v282, %v1009
        %v2089 = vmul.f32 %v283, %v1014
        %v2090 = vmul.f32 %v284, %v1019
        %v2091 = vmul.f32 %v285, %v1024
        %v2092 = vmul.f32 %v286, %v1029
        %v2093 = vmul.f32 %v287, %v1034
        %v2094 = vmul.f32 %v288, %v1039
        %v2095 = vmul.f32 %v289, %v1044
        %v2096 = vmul.f32 %v290, %v1049
        %v2097 = vmul.f32 %v291, %v1054
        %v2098 = vmul.f32 %v292, %v1059
        %v2099 = vmul.f32 %v293, %v1064
        %v2100 = vmul.f32 %v294, %v1069
        %v2101 = vmul.f32 %v295, %v1074
        %v2102 = vmul.f32 %v296, %v1079
        %v2103 = vmul.f32 %v297, %v1084
        %v2104 = vmul.f32 %v298, %v1089
        %v2105 = vmul.f32 %v299, %v1094
        %v2106 = vmul.f32 %v300, %v1099
        %v2107 = vmul.f32 %v301, %v1104
        %v2108 = vmul.f32 %v302, %v1109
        %v2109 = vmul.f32 %v303, %v1114
        %v2110 = vmul.f32 %v304, %v1119
        %v2111 = vmul.f32 %v305, %v1124
        %v2112 = vmul.f32 %v306, %v1129
        %v2113 = vmul.f32 %v307, %v1134
        %v2114 = vmul.f32 %v308, %v1139
        %v2115 = vmul.f32 %v309, %v1144
        %v2116 = vmul.f32 %v310, %v1149
        %v2117 = vmul.f32 %v311, %v1154
        %v2118 = vmul.f32 %v312, %v1159
        %v2119 = vmul.f32 %v313, %v1164
        %v2120 = vmul.f32 %v314, %v1169
        %v2121 = vmul.f32 %v315, %v1174
        %v2122 = vmul.f32 %v316, %v1179
        %v2123 = vmul.f32 %v317, %v1184
        %v2124 = vmul.f32 %v318, %v1189
        %v2125 = vmul.f32 %v319, %v1194
        %v2126 = vmul.f32 %v320, %v1199
        %v2127 = vmul.f32 %v321, %v1204
        %v2128 = vmul.f32 %v322, %v1209
        %v2129 = vmul.f32 %v323, %v1214
        %v2130 = vmul.f32 %v324, %v1219
        %v2131 = vmul.f32 %v325, %v1224
        %v2132 = vmul.f32 %v326, %v1229
        %v2133 = vmul.f32 %v327, %v1234
        %v2134 = vmul.f32 %v328, %v1239
        %v2135 = vmul.f32 %v329, %v1244
        %v2136 = vmul.f32 %v330, %v1249
        %v2137 = vmul.f32 %v331, %v1254
        %v2138 = vmul.f32 %v332, %v1259
        %v2139 = vmul.f32 %v333, %v1264
        %v2140 = vmul.f32 %v334, %v1269
        %v2141 = vmul.f32 %v335, %v1274
        %v2142 = vmul.f32 %v336, %v1279
        %v2143 = vmul.f32 %v337, %v1284
        %v2144 = vmul.f32 %v338, %v1289
        %v2145 = vmul.f32 %v339, %v1294
        %v2146 = vmul.f32 %v340, %v1299
        %v2147 = vmul.f32 %v341, %v1304
        %v2148 = vmul.f32 %v342, %v1309
        %v2149 = vmul.f32 %v343, %v1314
        %v2150 = vmul.f32 %v344, %v1319
        %v2151 = vmul.f32 %v345, %v1324
        %v2152 = vmul.f32 %v346, %v1329
        %v2153 = vmul.f32 %v347, %v1334
        %v2154 = vmul.f32 %v348, %v1339
        %v2155 = vmul.f32 %v349, %v1344
        %v2156 = vmul.f32 %v350, %v1349
        %v2157 = vmul.f32 %v351, %v1354
        %v2158 = vmul.f32 %v352, %v1359
        %v2159 = vmul.f32 %v353, %v1364
        %v2160 = vmul.f32 %v354, %v1369
        %v2161 = vmul.f32 %v355, %v1374
        %v2162 = vmul.f32 %v356, %v1379
        %v2163 = vmul.f32 %v357, %v1384
        %v2164 = vmul.f32 %v358, %v1389
        %v2165 = vmul.f32 %v359, %v1394
        %v2166 = vmul.f32 %v360, %v1399
        %v2167 = vmul.f32 %v361, %v1404
        %v2168 = vmul.f32 %v362, %v1409
        %v2169 = vmul.f32 %v363, %v1414
        %v2170 = vmul.f32 %v364, %v1419
        %v2171 = vmul.f32 %v365, %v1424
        %v2172 = vmul.f32 %v366, %v1429
        %v2173 = vmul.f32 %v367, %v1434
        %v2174 = vmul.f32 %v368, %v1439
        %v2175 = vmul.f32 %v369, %v1444
        %v2176 = vmul.f32 %v370, %v1449
        %v2177 = vmul.f32 %v371, %v1454
        %v2178 = vmul.f32 %v372, %v1459
        %v2179 = vmul.f32 %v373, %v1464
        %v2180 = vmul.f32 %v374, %v1469
        %v2181 = vmul.f32 %v375, %v1474
        %v2182 = vmul.f32 %v376, %v1479
        %v2183 = vmul.f32 %v377, %v1484
        %v2184 = vmul.f32 %v378, %v1489
        %v2185 = vmul.f32 %v379, %v1494
        %v2186 = vmul.f32 %v380, %v1499
        %v2187 = vmul.f32 %v381, %v1504
        %v2188 = vmul.f32 %v382, %v1509
        %v2189 = vmul.f32 %v383, %v1514
        %v2190 = vmul.f32 %v384, %v1519
        %v2191 = vmul.f32 %v385, %v1524
        %v2192 = vmul.f32 %v386, %v1529
        %v2193 = vmul.f32 %v387, %v1534
        %v2194 = vmul.f32 %v388, %v1539
        %v2195 = vmul.f32 %v389, %v1544
        %v2196 = vmul.f32 %v390, %v1549
        %v2197 = vmul.f32 %v391, %v1554
        %v2198 = vmul.f32 %v392, %v1559
        %v2199 = vmul.f32 %v393, %v1564
        %v2200 = vmul.f32 %v394, %v1569
        %v2201 = vmul.f32 %v395, %v1574
        %v2202 = vmul.f32 %v396, %v1579
        %v2203 = vmul.f32 %v397, %v1584
        %v2204 = vmul.f32 %v398, %v1589
        %v2205 = vmul.f32 %v399, %v1594
        %v2206 = vmul.f32 %v400, %v1599
        %v2207 = vmul.f32 %v401, %v1604
        %v2208 = vmul.f32 %v402, %v1609
        %v2209 = vmul.f32 %v403, %v1614
        %v2210 = vmul.f32 %v404, %v1619
        %v2211 = vmul.f32 %v405, %v1624
        %v2212 = vmul.f32 %v406, %v1629
        %v2213 = vmul.f32 %v407, %v1634
        %v2214 = vmul.f32 %v408, %v1639
        %v2215 = vmul.f32 %v409, %v1644
        %v2216 = vmul.f32 %v410, %v1649
        %v2217 = vmul.f32 %v411, %v1654
        %v2218 = vmul.f32 %v412, %v1659
        %v2219 = vmul.f32 %v413, %v1664
        %v2220 = vmul.f32 %v414, %v1669
        %v2221 = vmul.f32 %v415, %v1674
        %v2222 = vmul.f32 %v416, %v1679
        %v2223 = vmul.f32 %v417, %v1684
        %v2224 = vmul.f32 %v418, %v1689
        %v2225 = vmul.f32 %v419, %v1694
        %v2226 = vmul.f32 %v420, %v1699
        %v2227 = vmul.f32 %v421, %v1704
        %v2228 = vmul.f32 %v422, %v1709
        %v2229 = vmul.f32 %v423, %v1714
        %v2230 = vmul.f32 %v424, %v1719
        %v2231 = vmul.f32 %v425, %v1724
        %v2232 = vmul.f32 %v426, %v1729
        %v2233 = vmul.f32 %v427, %v1734
        %v2234 = vmul.f32 %v428, %v1739
        %v2235 = vmul.f32 %v429, %v1744
        %v2236 = vmul.f32 %v430, %v1749
        %v2237 = vmul.f32 %v431, %v1754
        %v2238 = vmul.f32 %v432, %v1759
        %v2239 = vmul.f32 %v433, %v1764
        %v2240 = vmul.f32 %v434, %v1769
        %v2241 = vmul.f32 %v435, %v1774
        %v2242 = vmul.f32 %v436, %v1779
        %v2243 = vmul.f32 %v437, %v1784
        %v2244 = vmul.f32 %v438, %v1789
        %v2245 = vmul.f32 %v439, %v1794
        %v2246 = vmul.f32 %v440, %v1799
        %v2247 = vmul.f32 %v441, %v1804
        %v2248 = vmul.f32 %v442, %v1809
        %v2249 = vmul.f32 %v443, %v1814
        %v2250 = vmul.f32 %v444, %v1819
        %v2251 = vmul.f32 %v445, %v1824
        %v2252 = vmul.f32 %v446, %v1829
        %v2253 = vmul.f32 %v447, %v1834
        %v2254 = vmul.f32 %v448, %v1839
        %v2255 = vmul.f32 %v449, %v1844
        %v2256 = vmul.f32 %v450, %v1849
        %v2257 = vmul.f32 %v451, %v1854
        %v2258 = vmul.f32 %v452, %v1859
        %v2259 = vmul.f32 %v453, %v1864
        %v2260 = vmul.f32 %v454, %v1869
        %v2261 = vmul.f32 %v455, %v1874
        %v2262 = vmul.f32 %v456, %v1879
        %v2263 = vmul.f32 %v457, %v1884
        %v2264 = vmul.f32 %v458, %v1889
        %v2265 = vmul.f32 %v459, %v1894
        %v2266 = vmul.f32 %v460, %v1899
        %v2267 = vmul.f32 %v461, %v1904
        %v2268 = vmul.f32 %v462, %v1909
        %v2269 = vmul.f32 %v463, %v1914
        %v2270 = vmul.f32 %v464, %v1919
        %v2271 = vmul.f32 %v465, %v1924
        %v2272 = vmul.f32 %v466, %v1929
        %v2273 = vmul.f32 %v467, %v1934
        %v2274 = vmul.f32 %v468, %v1939
        %v2275 = vmul.f32 %v469, %v1944
        %v2276 = vmul.f32 %v470, %v1949
        %v2277 = vmul.f32 %v471, %v1954
        %v2278 = vmul.f32 %v472, %v1959
        %v2279 = vmul.f32 %v473, %v1964
        %v2280 = vmul.f32 %v474, %v1969
        %v2281 = vmul.f32 %v475, %v1974
        %v2282 = vmul.f32 %v476, %v1979
        %v2283 = vmul.f32 %v477, %v1984
        %v2284 = vmul.f32 %v478, %v1989
        %v2285 = vmul.f32 %v479, %v1994
        %v2286 = vmul.f32 %v480, %v1999
        %v2287 = vmul.f32 %v481, %v2004
        %v2288 = vmul.f32 %v482, %v2009
        %v2289 = vmul.f32 %v483, %v2014
        %v2290 = vmul.f32 %v484, %v2019
        %v2291 = vmul.f32 %v485, %v2024
        %v2292 = vmul.f32 %v486, %v2029
        %v2293 = vmul.f32 %v487, %v2034
        %v2294 = vpack.c.bf16 %v2037, %v2036
        %v2295 = vpack.c.bf16 %v2039, %v2038
        %v2296 = vpack.c.bf16 %v2041, %v2040
        %v2297 = vpack.c.bf16 %v2043, %v2042
        %v2298 = vpack.c.bf16 %v2045, %v2044
        %v2299 = vpack.c.bf16 %v2047, %v2046
        %v2300 = vpack.c.bf16 %v2049, %v2048
        %v2301 = vpack.c.bf16 %v2051, %v2050
        %v2302 = vpack.c.bf16 %v2053, %v2052
        %v2303 = vpack.c.bf16 %v2055, %v2054
        %v2304 = vpack.c.bf16 %v2057, %v2056
        %v2305 = vpack.c.bf16 %v2059, %v2058
        %v2306 = vpack.c.bf16 %v2061, %v2060
        %v2307 = vpack.c.bf16 %v2063, %v2062
        %v2308 = vpack.c.bf16 %v2065, %v2064
        %v2309 = vpack.c.bf16 %v2067, %v2066
        %v2310 = vpack.c.bf16 %v2069, %v2068
        %v2311 = vpack.c.bf16 %v2071, %v2070
        %v2312 = vpack.c.bf16 %v2073, %v2072
        %v2313 = vpack.c.bf16 %v2075, %v2074
        %v2314 = vpack.c.bf16 %v2077, %v2076
        %v2315 = vpack.c.bf16 %v2079, %v2078
        %v2316 = vpack.c.bf16 %v2081, %v2080
        %v2317 = vpack.c.bf16 %v2083, %v2082
        %v2318 = vpack.c.bf16 %v2085, %v2084
        %v2319 = vpack.c.bf16 %v2087, %v2086
        %v2320 = vpack.c.bf16 %v2089, %v2088
        %v2321 = vpack.c.bf16 %v2091, %v2090
        %v2322 = vpack.c.bf16 %v2093, %v2092
        %v2323 = vpack.c.bf16 %v2095, %v2094
        %v2324 = vpack.c.bf16 %v2097, %v2096
        %v2325 = vpack.c.bf16 %v2099, %v2098
        %v2326 = vpack.c.bf16 %v2101, %v2100
        %v2327 = vpack.c.bf16 %v2103, %v2102
        %v2328 = vpack.c.bf16 %v2105, %v2104
        %v2329 = vpack.c.bf16 %v2107, %v2106
        %v2330 = vpack.c.bf16 %v2109, %v2108
        %v2331 = vpack.c.bf16 %v2111, %v2110
        %v2332 = vpack.c.bf16 %v2113, %v2112
        %v2333 = vpack.c.bf16 %v2115, %v2114
        %v2334 = vpack.c.bf16 %v2117, %v2116
        %v2335 = vpack.c.bf16 %v2119, %v2118
        %v2336 = vpack.c.bf16 %v2121, %v2120
        %v2337 = vpack.c.bf16 %v2123, %v2122
        %v2338 = vpack.c.bf16 %v2125, %v2124
        %v2339 = vpack.c.bf16 %v2127, %v2126
        %v2340 = vpack.c.bf16 %v2129, %v2128
        %v2341 = vpack.c.bf16 %v2131, %v2130
        %v2342 = vpack.c.bf16 %v2133, %v2132
        %v2343 = vpack.c.bf16 %v2135, %v2134
        %v2344 = vpack.c.bf16 %v2137, %v2136
        %v2345 = vpack.c.bf16 %v2139, %v2138
        %v2346 = vpack.c.bf16 %v2141, %v2140
        %v2347 = vpack.c.bf16 %v2143, %v2142
        %v2348 = vpack.c.bf16 %v2145, %v2144
        %v2349 = vpack.c.bf16 %v2147, %v2146
        %v2350 = vpack.c.bf16 %v2149, %v2148
        %v2351 = vpack.c.bf16 %v2151, %v2150
        %v2352 = vpack.c.bf16 %v2153, %v2152
        %v2353 = vpack.c.bf16 %v2155, %v2154
        %v2354 = vpack.c.bf16 %v2157, %v2156
        %v2355 = vpack.c.bf16 %v2159, %v2158
        %v2356 = vpack.c.bf16 %v2161, %v2160
        %v2357 = vpack.c.bf16 %v2163, %v2162
        %v2358 = vpack.c.bf16 %v2165, %v2164
        %v2359 = vpack.c.bf16 %v2167, %v2166
        %v2360 = vpack.c.bf16 %v2169, %v2168
        %v2361 = vpack.c.bf16 %v2171, %v2170
        %v2362 = vpack.c.bf16 %v2173, %v2172
        %v2363 = vpack.c.bf16 %v2175, %v2174
        %v2364 = vpack.c.bf16 %v2177, %v2176
        %v2365 = vpack.c.bf16 %v2179, %v2178
        %v2366 = vpack.c.bf16 %v2181, %v2180
        %v2367 = vpack.c.bf16 %v2183, %v2182
        %v2368 = vpack.c.bf16 %v2185, %v2184
        %v2369 = vpack.c.bf16 %v2187, %v2186
        %v2370 = vpack.c.bf16 %v2189, %v2188
        %v2371 = vpack.c.bf16 %v2191, %v2190
        %v2372 = vpack.c.bf16 %v2193, %v2192
        %v2373 = vpack.c.bf16 %v2195, %v2194
        %v2374 = vpack.c.bf16 %v2197, %v2196
        %v2375 = vpack.c.bf16 %v2199, %v2198
        %v2376 = vpack.c.bf16 %v2201, %v2200
        %v2377 = vpack.c.bf16 %v2203, %v2202
        %v2378 = vpack.c.bf16 %v2205, %v2204
        %v2379 = vpack.c.bf16 %v2207, %v2206
        %v2380 = vpack.c.bf16 %v2209, %v2208
        %v2381 = vpack.c.bf16 %v2211, %v2210
        %v2382 = vpack.c.bf16 %v2213, %v2212
        %v2383 = vpack.c.bf16 %v2215, %v2214
        %v2384 = vpack.c.bf16 %v2217, %v2216
        %v2385 = vpack.c.bf16 %v2219, %v2218
        %v2386 = vpack.c.bf16 %v2221, %v2220
        %v2387 = vpack.c.bf16 %v2223, %v2222
        %v2388 = vpack.c.bf16 %v2225, %v2224
        %v2389 = vpack.c.bf16 %v2227, %v2226
        %v2390 = vpack.c.bf16 %v2229, %v2228
        %v2391 = vpack.c.bf16 %v2231, %v2230
        %v2392 = vpack.c.bf16 %v2233, %v2232
        %v2393 = vpack.c.bf16 %v2235, %v2234
        %v2394 = vpack.c.bf16 %v2237, %v2236
        %v2395 = vpack.c.bf16 %v2239, %v2238
        %v2396 = vpack.c.bf16 %v2241, %v2240
        %v2397 = vpack.c.bf16 %v2243, %v2242
        %v2398 = vpack.c.bf16 %v2245, %v2244
        %v2399 = vpack.c.bf16 %v2247, %v2246
        %v2400 = vpack.c.bf16 %v2249, %v2248
        %v2401 = vpack.c.bf16 %v2251, %v2250
        %v2402 = vpack.c.bf16 %v2253, %v2252
        %v2403 = vpack.c.bf16 %v2255, %v2254
        %v2404 = vpack.c.bf16 %v2257, %v2256
        %v2405 = vpack.c.bf16 %v2259, %v2258
        %v2406 = vpack.c.bf16 %v2261, %v2260
        %v2407 = vpack.c.bf16 %v2263, %v2262
        %v2408 = vpack.c.bf16 %v2265, %v2264
        %v2409 = vpack.c.bf16 %v2267, %v2266
        %v2410 = vpack.c.bf16 %v2269, %v2268
        %v2411 = vpack.c.bf16 %v2271, %v2270
        %v2412 = vpack.c.bf16 %v2273, %v2272
        %v2413 = vpack.c.bf16 %v2275, %v2274
        %v2414 = vpack.c.bf16 %v2277, %v2276
        %v2415 = vpack.c.bf16 %v2279, %v2278
        %v2416 = vpack.c.bf16 %v2281, %v2280
        %v2417 = vpack.c.bf16 %v2283, %v2282
        %v2418 = vpack.c.bf16 %v2285, %v2284
        %v2419 = vpack.c.bf16 %v2287, %v2286
        %v2420 = vpack.c.bf16 %v2289, %v2288
        %v2421 = vpack.c.bf16 %v2291, %v2290
        %v2422 = vpack.c.bf16 %v2293, %v2292
        %v2423 = vld [vmem:[%s222] sm:$0xff]
        %v2424 = vld [vmem:[%s222 + $0x8] sm:$0xff]
        %v2425 = vld [vmem:[%s222 + $0x10] sm:$0xff]
        %v2426 = vld [vmem:[%s222 + $0x18] sm:$0xff]
        %v2427 = vld [vmem:[%s222 + $0x20] sm:$0xff]
        %v2428 = vld [vmem:[%s222 + $0x28] sm:$0xff]
        %v2429 = vld [vmem:[%s222 + $0x30] sm:$0xff]
        %v2430 = vld [vmem:[%s222 + $0x38] sm:$0xff]
        %v2431 = vld [vmem:[%s222 + $0x40] sm:$0xf]
        %v2432 = vld [vmem:[%s222 + $0x44] sm:$0xff]
        %v2433 = vld [vmem:[%s222 + $0x4c] sm:$0xff]
        %v2434 = vld [vmem:[%s222 + $0x54] sm:$0xff]
        %v2435 = vld [vmem:[%s222 + $0x5c] sm:$0xff]
        %v2436 = vld [vmem:[%s222 + $0x64] sm:$0xff]
        %v2437 = vld [vmem:[%s222 + $0x6c] sm:$0xff]
        %v2438 = vld [vmem:[%s222 + $0x74] sm:$0xff]
        %v2439 = vld [vmem:[%s222 + $0x7c] sm:$0xff]
        %v2440 = vld [vmem:[%s222 + $0x84] sm:$0xf]
        %v2441 = vld [vmem:[%s222 + $0x88] sm:$0xff]
        %v2442 = vld [vmem:[%s222 + $0x90] sm:$0xff]
        %v2443 = vld [vmem:[%s222 + $0x98] sm:$0xff]
        %v2444 = vld [vmem:[%s222 + $0xa0] sm:$0xff]
        %v2445 = vld [vmem:[%s222 + $0xa8] sm:$0xff]
        %v2446 = vld [vmem:[%s222 + $0xb0] sm:$0xff]
        %v2447 = vld [vmem:[%s222 + $0xb8] sm:$0xff]
        %v2448 = vld [vmem:[%s222 + $0xc0] sm:$0xff]
        %v2449 = vld [vmem:[%s222 + $0xc8] sm:$0xf]
        %v2450 = vld [vmem:[%s222 + $0xcc] sm:$0xff]
        %v2451 = vld [vmem:[%s222 + $0xd4] sm:$0xff]
        %v2452 = vld [vmem:[%s222 + $0xdc] sm:$0xff]
        %v2453 = vld [vmem:[%s222 + $0xe4] sm:$0xff]
        %v2454 = vld [vmem:[%s222 + $0xec] sm:$0xff]
        %v2455 = vld [vmem:[%s222 + $0xf4] sm:$0xff]
        %v2456 = vld [vmem:[%s222 + $0xfc] sm:$0xff]
        %v2457 = vld [vmem:[%s222 + $0x104] sm:$0xff]
        %v2458 = vld [vmem:[%s222 + $0x10c] sm:$0xf]
        %v2459 = vld [vmem:[%s222 + $0x110] sm:$0xff]
        %v2460 = vld [vmem:[%s222 + $0x118] sm:$0xff]
        %v2461 = vld [vmem:[%s222 + $0x120] sm:$0xff]
        %v2462 = vld [vmem:[%s222 + $0x128] sm:$0xff]
        %v2463 = vld [vmem:[%s222 + $0x130] sm:$0xff]
        %v2464 = vld [vmem:[%s222 + $0x138] sm:$0xff]
        %v2465 = vld [vmem:[%s222 + $0x140] sm:$0xff]
        %v2466 = vld [vmem:[%s222 + $0x148] sm:$0xff]
        %v2467 = vld [vmem:[%s222 + $0x150] sm:$0xf]
        %v2468 = vld [vmem:[%s222 + $0x154] sm:$0xff]
        %v2469 = vld [vmem:[%s222 + $0x15c] sm:$0xff]
        %v2470 = vld [vmem:[%s222 + $0x164] sm:$0xff]
        %v2471 = vld [vmem:[%s222 + $0x16c] sm:$0xff]
        %v2472 = vld [vmem:[%s222 + $0x174] sm:$0xff]
        %v2473 = vld [vmem:[%s222 + $0x17c] sm:$0xff]
        %v2474 = vld [vmem:[%s222 + $0x184] sm:$0xff]
        %v2475 = vld [vmem:[%s222 + $0x18c] sm:$0xff]
        %v2476 = vld [vmem:[%s222 + $0x194] sm:$0xf]
        %v2477 = vld [vmem:[%s222 + $0x198] sm:$0xff]
        %v2478 = vld [vmem:[%s222 + $0x1a0] sm:$0xff]
        %v2479 = vld [vmem:[%s222 + $0x1a8] sm:$0xff]
        %v2480 = vld [vmem:[%s222 + $0x1b0] sm:$0xff]
        %v2481 = vld [vmem:[%s222 + $0x1b8] sm:$0xff]
        %v2482 = vld [vmem:[%s222 + $0x1c0] sm:$0xff]
        %v2483 = vld [vmem:[%s222 + $0x1c8] sm:$0xff]
        %v2484 = vld [vmem:[%s222 + $0x1d0] sm:$0xff]
        %v2485 = vld [vmem:[%s222 + $0x1d8] sm:$0xf]
        %v2486 = vld [vmem:[%s222 + $0x1dc] sm:$0xff]
        %v2487 = vld [vmem:[%s222 + $0x1e4] sm:$0xff]
        %v2488 = vld [vmem:[%s222 + $0x1ec] sm:$0xff]
        %v2489 = vld [vmem:[%s222 + $0x1f4] sm:$0xff]
        %v2490 = vld [vmem:[%s222 + $0x1fc] sm:$0xff]
        %v2491 = vld [vmem:[%s222 + $0x204] sm:$0xff]
        %v2492 = vld [vmem:[%s222 + $0x20c] sm:$0xff]
        %v2493 = vld [vmem:[%s222 + $0x214] sm:$0xff]
        %v2494 = vld [vmem:[%s222 + $0x21c] sm:$0xf]
        %v2495 = vld [vmem:[%s222 + $0x220] sm:$0xff]
        %v2496 = vld [vmem:[%s222 + $0x228] sm:$0xff]
        %v2497 = vld [vmem:[%s222 + $0x230] sm:$0xff]
        %v2498 = vld [vmem:[%s222 + $0x238] sm:$0xff]
        %v2499 = vld [vmem:[%s222 + $0x240] sm:$0xff]
        %v2500 = vld [vmem:[%s222 + $0x248] sm:$0xff]
        %v2501 = vld [vmem:[%s222 + $0x250] sm:$0xff]
        %v2502 = vld [vmem:[%s222 + $0x258] sm:$0xff]
        %v2503 = vld [vmem:[%s222 + $0x260] sm:$0xf]
        %v2504 = vld [vmem:[%s222 + $0x264] sm:$0xff]
        %v2505 = vld [vmem:[%s222 + $0x26c] sm:$0xff]
        %v2506 = vld [vmem:[%s222 + $0x274] sm:$0xff]
        %v2507 = vld [vmem:[%s222 + $0x27c] sm:$0xff]
        %v2508 = vld [vmem:[%s222 + $0x284] sm:$0xff]
        %v2509 = vld [vmem:[%s222 + $0x28c] sm:$0xff]
        %v2510 = vld [vmem:[%s222 + $0x294] sm:$0xff]
        %v2511 = vld [vmem:[%s222 + $0x29c] sm:$0xff]
        %v2512 = vld [vmem:[%s222 + $0x2a4] sm:$0xf]
        %v2513 = vld [vmem:[%s222 + $0x2a8] sm:$0xff]
        %v2514 = vld [vmem:[%s222 + $0x2b0] sm:$0xff]
        %v2515 = vld [vmem:[%s222 + $0x2b8] sm:$0xff]
        %v2516 = vld [vmem:[%s222 + $0x2c0] sm:$0xff]
        %v2517 = vld [vmem:[%s222 + $0x2c8] sm:$0xff]
        %v2518 = vld [vmem:[%s222 + $0x2d0] sm:$0xff]
        %v2519 = vld [vmem:[%s222 + $0x2d8] sm:$0xff]
        %v2520 = vld [vmem:[%s222 + $0x2e0] sm:$0xff]
        %v2521 = vld [vmem:[%s222 + $0x2e8] sm:$0xf]
        %v2522 = vld [vmem:[%s222 + $0x2ec] sm:$0xff]
        %v2523 = vld [vmem:[%s222 + $0x2f4] sm:$0xff]
        %v2524 = vld [vmem:[%s222 + $0x2fc] sm:$0xff]
        %v2525 = vld [vmem:[%s222 + $0x304] sm:$0xff]
        %v2526 = vld [vmem:[%s222 + $0x30c] sm:$0xff]
        %v2527 = vld [vmem:[%s222 + $0x314] sm:$0xff]
        %v2528 = vld [vmem:[%s222 + $0x31c] sm:$0xff]
        %v2529 = vld [vmem:[%s222 + $0x324] sm:$0xff]
        %v2530 = vld [vmem:[%s222 + $0x32c] sm:$0xf]
        %v2531 = vld [vmem:[%s222 + $0x330] sm:$0xff]
        %v2532 = vld [vmem:[%s222 + $0x338] sm:$0xff]
        %v2533 = vld [vmem:[%s222 + $0x340] sm:$0xff]
        %v2534 = vld [vmem:[%s222 + $0x348] sm:$0xff]
        %v2535 = vld [vmem:[%s222 + $0x350] sm:$0xff]
        %v2536 = vld [vmem:[%s222 + $0x358] sm:$0xff]
        %v2537 = vld [vmem:[%s222 + $0x360] sm:$0xff]
        %v2538 = vld [vmem:[%s222 + $0x368] sm:$0xff]
        %v2539 = vld [vmem:[%s222 + $0x370] sm:$0xf]
        %v2540 = vld [vmem:[%s222 + $0x374] sm:$0xff]
        %v2541 = vld [vmem:[%s222 + $0x37c] sm:$0xff]
        %v2542 = vld [vmem:[%s222 + $0x384] sm:$0xff]
        %v2543 = vld [vmem:[%s222 + $0x38c] sm:$0xff]
        %v2544 = vld [vmem:[%s222 + $0x394] sm:$0xff]
        %v2545 = vld [vmem:[%s222 + $0x39c] sm:$0xff]
        %v2546 = vld [vmem:[%s222 + $0x3a4] sm:$0xff]
        %v2547 = vld [vmem:[%s222 + $0x3ac] sm:$0xff]
        %v2548 = vld [vmem:[%s222 + $0x3b4] sm:$0xf]
        %v2549 = vld [vmem:[%s222 + $0x3b8] sm:$0xff]
        %v2550 = vld [vmem:[%s222 + $0x3c0] sm:$0xff]
        %v2551 = vld [vmem:[%s222 + $0x3c8] sm:$0xff]
        %v2552 = vld [vmem:[%s222 + $0x3d0] sm:$0xff]
        %v2553 = vld [vmem:[%s222 + $0x3d8] sm:$0xff]
        %v2554 = vld [vmem:[%s222 + $0x3e0] sm:$0xff]
        %v2555 = vld [vmem:[%s222 + $0x3e8] sm:$0xff]
        %v2556 = vld [vmem:[%s222 + $0x3f0] sm:$0xff]
        %v2557 = vld [vmem:[%s222 + $0x3f8] sm:$0xf]
        %v2558 = vld [vmem:[%s222 + $0x3fc] sm:$0xff]
        %v2559 = vld [vmem:[%s222 + $0x404] sm:$0xff]
        %v2560 = vld [vmem:[%s222 + $0x40c] sm:$0xff]
        %v2561 = vld [vmem:[%s222 + $0x414] sm:$0xff]
        %v2562 = vld [vmem:[%s222 + $0x41c] sm:$0xff]
        %v2563 = vld [vmem:[%s222 + $0x424] sm:$0xff]
        %v2564 = vld [vmem:[%s222 + $0x42c] sm:$0xff]
        %v2565 = vld [vmem:[%s222 + $0x434] sm:$0xff]
        %v2566 = vld [vmem:[%s222 + $0x43c] sm:$0xf]
        %v2567 = vld [vmem:[%s222 + $0x440] sm:$0xff]
        %v2568 = vld [vmem:[%s222 + $0x448] sm:$0xff]
        %v2569 = vld [vmem:[%s222 + $0x450] sm:$0xff]
        %v2570 = vld [vmem:[%s222 + $0x458] sm:$0xff]
        %v2571 = vld [vmem:[%s222 + $0x460] sm:$0xff]
        %v2572 = vld [vmem:[%s222 + $0x468] sm:$0xff]
        %v2573 = vld [vmem:[%s222 + $0x470] sm:$0xff]
        %v2574 = vld [vmem:[%s222 + $0x478] sm:$0xff]
        %v2575 = vld [vmem:[%s222 + $0x480] sm:$0xf]
        %v2576 = vld [vmem:[%s222 + $0x484] sm:$0xff]
        %v2577 = vld [vmem:[%s222 + $0x48c] sm:$0xff]
        %v2578 = vld [vmem:[%s222 + $0x494] sm:$0xff]
        %v2579 = vld [vmem:[%s222 + $0x49c] sm:$0xff]
        %v2580 = vld [vmem:[%s222 + $0x4a4] sm:$0xff]
        %v2581 = vld [vmem:[%s222 + $0x4ac] sm:$0xff]
        %v2582 = vld [vmem:[%s222 + $0x4b4] sm:$0xff]
        %v2583 = vld [vmem:[%s222 + $0x4bc] sm:$0xff]
        %v2584 = vld [vmem:[%s222 + $0x4c4] sm:$0xf]
        %v2585 = vld [vmem:[%s222 + $0x4c8] sm:$0xff]
        %v2586 = vld [vmem:[%s222 + $0x4d0] sm:$0xff]
        %v2587 = vld [vmem:[%s222 + $0x4d8] sm:$0xff]
        %v2588 = vld [vmem:[%s222 + $0x4e0] sm:$0xff]
        %v2589 = vld [vmem:[%s222 + $0x4e8] sm:$0xff]
        %v2590 = vld [vmem:[%s222 + $0x4f0] sm:$0xff]
        %v2591 = vld [vmem:[%s222 + $0x4f8] sm:$0xff]
        %v2592 = vld [vmem:[%s222 + $0x500] sm:$0xff]
        %v2593 = vld [vmem:[%s222 + $0x508] sm:$0xf]
        %v2594 = vld [vmem:[%s222 + $0x50c] sm:$0xff]
        %v2595 = vld [vmem:[%s222 + $0x514] sm:$0xff]
        %v2596 = vld [vmem:[%s222 + $0x51c] sm:$0xff]
        %v2597 = vld [vmem:[%s222 + $0x524] sm:$0xff]
        %v2598 = vld [vmem:[%s222 + $0x52c] sm:$0xff]
        %v2599 = vld [vmem:[%s222 + $0x534] sm:$0xff]
        %v2600 = vld [vmem:[%s222 + $0x53c] sm:$0xff]
        %v2601 = vld [vmem:[%s222 + $0x544] sm:$0xff]
        %v2602 = vld [vmem:[%s222 + $0x54c] sm:$0xf]
        %v2603 = vld [vmem:[%s222 + $0x550] sm:$0xff]
        %v2604 = vld [vmem:[%s222 + $0x558] sm:$0xff]
        %v2605 = vld [vmem:[%s222 + $0x560] sm:$0xff]
        %v2606 = vld [vmem:[%s222 + $0x568] sm:$0xff]
        %v2607 = vld [vmem:[%s222 + $0x570] sm:$0xff]
        %v2608 = vld [vmem:[%s222 + $0x578] sm:$0xff]
        %v2609 = vld [vmem:[%s222 + $0x580] sm:$0xff]
        %v2610 = vld [vmem:[%s222 + $0x588] sm:$0xff]
        %v2611 = vld [vmem:[%s222 + $0x590] sm:$0xf]
        %v2612 = vld [vmem:[%s222 + $0x594] sm:$0xff]
        %v2613 = vld [vmem:[%s222 + $0x59c] sm:$0xff]
        %v2614 = vld [vmem:[%s222 + $0x5a4] sm:$0xff]
        %v2615 = vld [vmem:[%s222 + $0x5ac] sm:$0xff]
        %v2616 = vld [vmem:[%s222 + $0x5b4] sm:$0xff]
        %v2617 = vld [vmem:[%s222 + $0x5bc] sm:$0xff]
        %v2618 = vld [vmem:[%s222 + $0x5c4] sm:$0xff]
        %v2619 = vld [vmem:[%s222 + $0x5cc] sm:$0xff]
        %v2620 = vld [vmem:[%s222 + $0x5d4] sm:$0xf]
        %v2819 = vunpack.c.l.b16 %v2423
        %v2820 = vunpack.c.h.b16 %v2423
        %v2821 = vunpack.c.l.b16 %v2424
        %v2822 = vunpack.c.h.b16 %v2424
        %v2823 = vunpack.c.l.b16 %v2425
        %v2824 = vunpack.c.h.b16 %v2425
        %v2825 = vunpack.c.l.b16 %v2426
        %v2826 = vunpack.c.h.b16 %v2426
        %v2827 = vunpack.c.l.b16 %v2427
        %v2828 = vunpack.c.h.b16 %v2427
        %v2829 = vunpack.c.l.b16 %v2428
        %v2830 = vunpack.c.h.b16 %v2428
        %v2831 = vunpack.c.l.b16 %v2429
        %v2832 = vunpack.c.h.b16 %v2429
        %v2833 = vunpack.c.l.b16 %v2430
        %v2834 = vunpack.c.h.b16 %v2430
        %v2835 = vunpack.c.l.b16 %v2431
        %v2836 = vunpack.c.l.b16 %v2432
        %v2837 = vunpack.c.h.b16 %v2432
        %v2838 = vunpack.c.l.b16 %v2433
        %v2839 = vunpack.c.h.b16 %v2433
        %v2840 = vunpack.c.l.b16 %v2434
        %v2841 = vunpack.c.h.b16 %v2434
        %v2842 = vunpack.c.l.b16 %v2435
        %v2843 = vunpack.c.h.b16 %v2435
        %v2844 = vunpack.c.l.b16 %v2436
        %v2845 = vunpack.c.h.b16 %v2436
        %v2846 = vunpack.c.l.b16 %v2437
        %v2847 = vunpack.c.h.b16 %v2437
        %v2848 = vunpack.c.l.b16 %v2438
        %v2849 = vunpack.c.h.b16 %v2438
        %v2850 = vunpack.c.l.b16 %v2439
        %v2851 = vunpack.c.h.b16 %v2439
        %v2852 = vunpack.c.l.b16 %v2440
        %v2853 = vunpack.c.l.b16 %v2441
        %v2854 = vunpack.c.h.b16 %v2441
        %v2855 = vunpack.c.l.b16 %v2442
        %v2856 = vunpack.c.h.b16 %v2442
        %v2857 = vunpack.c.l.b16 %v2443
        %v2858 = vunpack.c.h.b16 %v2443
        %v2859 = vunpack.c.l.b16 %v2444
        %v2860 = vunpack.c.h.b16 %v2444
        %v2861 = vunpack.c.l.b16 %v2445
        %v2862 = vunpack.c.h.b16 %v2445
        %v2863 = vunpack.c.l.b16 %v2446
        %v2864 = vunpack.c.h.b16 %v2446
        %v2865 = vunpack.c.l.b16 %v2447
        %v2866 = vunpack.c.h.b16 %v2447
        %v2867 = vunpack.c.l.b16 %v2448
        %v2868 = vunpack.c.h.b16 %v2448
        %v2869 = vunpack.c.l.b16 %v2449
        %v2870 = vunpack.c.l.b16 %v2450
        %v2871 = vunpack.c.h.b16 %v2450
        %v2872 = vunpack.c.l.b16 %v2451
        %v2873 = vunpack.c.h.b16 %v2451
        %v2874 = vunpack.c.l.b16 %v2452
        %v2875 = vunpack.c.h.b16 %v2452
        %v2876 = vunpack.c.l.b16 %v2453
        %v2877 = vunpack.c.h.b16 %v2453
        %v2878 = vunpack.c.l.b16 %v2454
        %v2879 = vunpack.c.h.b16 %v2454
        %v2880 = vunpack.c.l.b16 %v2455
        %v2881 = vunpack.c.h.b16 %v2455
        %v2882 = vunpack.c.l.b16 %v2456
        %v2883 = vunpack.c.h.b16 %v2456
        %v2884 = vunpack.c.l.b16 %v2457
        %v2885 = vunpack.c.h.b16 %v2457
        %v2886 = vunpack.c.l.b16 %v2458
        %v2887 = vunpack.c.l.b16 %v2459
        %v2888 = vunpack.c.h.b16 %v2459
        %v2889 = vunpack.c.l.b16 %v2460
        %v2890 = vunpack.c.h.b16 %v2460
        %v2891 = vunpack.c.l.b16 %v2461
        %v2892 = vunpack.c.h.b16 %v2461
        %v2893 = vunpack.c.l.b16 %v2462
        %v2894 = vunpack.c.h.b16 %v2462
        %v2895 = vunpack.c.l.b16 %v2463
        %v2896 = vunpack.c.h.b16 %v2463
        %v2897 = vunpack.c.l.b16 %v2464
        %v2898 = vunpack.c.h.b16 %v2464
        %v2899 = vunpack.c.l.b16 %v2465
        %v2900 = vunpack.c.h.b16 %v2465
        %v2901 = vunpack.c.l.b16 %v2466
        %v2902 = vunpack.c.h.b16 %v2466
        %v2903 = vunpack.c.l.b16 %v2467
        %v2904 = vunpack.c.l.b16 %v2468
        %v2905 = vunpack.c.h.b16 %v2468
        %v2906 = vunpack.c.l.b16 %v2469
        %v2907 = vunpack.c.h.b16 %v2469
        %v2908 = vunpack.c.l.b16 %v2470
        %v2909 = vunpack.c.h.b16 %v2470
        %v2910 = vunpack.c.l.b16 %v2471
        %v2911 = vunpack.c.h.b16 %v2471
        %v2912 = vunpack.c.l.b16 %v2472
        %v2913 = vunpack.c.h.b16 %v2472
        %v2914 = vunpack.c.l.b16 %v2473
        %v2915 = vunpack.c.h.b16 %v2473
        %v2916 = vunpack.c.l.b16 %v2474
        %v2917 = vunpack.c.h.b16 %v2474
        %v2918 = vunpack.c.l.b16 %v2475
        %v2919 = vunpack.c.h.b16 %v2475
        %v2920 = vunpack.c.l.b16 %v2476
        %v2921 = vunpack.c.l.b16 %v2477
        %v2922 = vunpack.c.h.b16 %v2477
        %v2923 = vunpack.c.l.b16 %v2478
        %v2924 = vunpack.c.h.b16 %v2478
        %v2925 = vunpack.c.l.b16 %v2479
        %v2926 = vunpack.c.h.b16 %v2479
        %v2927 = vunpack.c.l.b16 %v2480
        %v2928 = vunpack.c.h.b16 %v2480
        %v2929 = vunpack.c.l.b16 %v2481
        %v2930 = vunpack.c.h.b16 %v2481
        %v2931 = vunpack.c.l.b16 %v2482
        %v2932 = vunpack.c.h.b16 %v2482
        %v2933 = vunpack.c.l.b16 %v2483
        %v2934 = vunpack.c.h.b16 %v2483
        %v2935 = vunpack.c.l.b16 %v2484
        %v2936 = vunpack.c.h.b16 %v2484
        %v2937 = vunpack.c.l.b16 %v2485
        %v2938 = vunpack.c.l.b16 %v2486
        %v2939 = vunpack.c.h.b16 %v2486
        %v2940 = vunpack.c.l.b16 %v2487
        %v2941 = vunpack.c.h.b16 %v2487
        %v2942 = vunpack.c.l.b16 %v2488
        %v2943 = vunpack.c.h.b16 %v2488
        %v2944 = vunpack.c.l.b16 %v2489
        %v2945 = vunpack.c.h.b16 %v2489
        %v2946 = vunpack.c.l.b16 %v2490
        %v2947 = vunpack.c.h.b16 %v2490
        %v2948 = vunpack.c.l.b16 %v2491
        %v2949 = vunpack.c.h.b16 %v2491
        %v2950 = vunpack.c.l.b16 %v2492
        %v2951 = vunpack.c.h.b16 %v2492
        %v2952 = vunpack.c.l.b16 %v2493
        %v2953 = vunpack.c.h.b16 %v2493
        %v2954 = vunpack.c.l.b16 %v2494
        %v2955 = vunpack.c.l.b16 %v2495
        %v2956 = vunpack.c.h.b16 %v2495
        %v2957 = vunpack.c.l.b16 %v2496
        %v2958 = vunpack.c.h.b16 %v2496
        %v2959 = vunpack.c.l.b16 %v2497
        %v2960 = vunpack.c.h.b16 %v2497
        %v2961 = vunpack.c.l.b16 %v2498
        %v2962 = vunpack.c.h.b16 %v2498
        %v2963 = vunpack.c.l.b16 %v2499
        %v2964 = vunpack.c.h.b16 %v2499
        %v2965 = vunpack.c.l.b16 %v2500
        %v2966 = vunpack.c.h.b16 %v2500
        %v2967 = vunpack.c.l.b16 %v2501
        %v2968 = vunpack.c.h.b16 %v2501
        %v2969 = vunpack.c.l.b16 %v2502
        %v2970 = vunpack.c.h.b16 %v2502
        %v2971 = vunpack.c.l.b16 %v2503
        %v2972 = vunpack.c.l.b16 %v2504
        %v2973 = vunpack.c.h.b16 %v2504
        %v2974 = vunpack.c.l.b16 %v2505
        %v2975 = vunpack.c.h.b16 %v2505
        %v2976 = vunpack.c.l.b16 %v2506
        %v2977 = vunpack.c.h.b16 %v2506
        %v2978 = vunpack.c.l.b16 %v2507
        %v2979 = vunpack.c.h.b16 %v2507
        %v2980 = vunpack.c.l.b16 %v2508
        %v2981 = vunpack.c.h.b16 %v2508
        %v2982 = vunpack.c.l.b16 %v2509
        %v2983 = vunpack.c.h.b16 %v2509
        %v2984 = vunpack.c.l.b16 %v2510
        %v2985 = vunpack.c.h.b16 %v2510
        %v2986 = vunpack.c.l.b16 %v2511
        %v2987 = vunpack.c.h.b16 %v2511
        %v2988 = vunpack.c.l.b16 %v2512
        %v2989 = vunpack.c.l.b16 %v2513
        %v2990 = vunpack.c.h.b16 %v2513
        %v2991 = vunpack.c.l.b16 %v2514
        %v2992 = vunpack.c.h.b16 %v2514
        %v2993 = vunpack.c.l.b16 %v2515
        %v2994 = vunpack.c.h.b16 %v2515
        %v2995 = vunpack.c.l.b16 %v2516
        %v2996 = vunpack.c.h.b16 %v2516
        %v2997 = vunpack.c.l.b16 %v2517
        %v2998 = vunpack.c.h.b16 %v2517
        %v2999 = vunpack.c.l.b16 %v2518
        %v3000 = vunpack.c.h.b16 %v2518
        %v3001 = vunpack.c.l.b16 %v2519
        %v3002 = vunpack.c.h.b16 %v2519
        %v3003 = vunpack.c.l.b16 %v2520
        %v3004 = vunpack.c.h.b16 %v2520
        %v3005 = vunpack.c.l.b16 %v2521
        %v3006 = vunpack.c.l.b16 %v2522
        %v3007 = vunpack.c.h.b16 %v2522
        %v3008 = vunpack.c.l.b16 %v2523
        %v3009 = vunpack.c.h.b16 %v2523
        %v3010 = vunpack.c.l.b16 %v2524
        %v3011 = vunpack.c.h.b16 %v2524
        %v3012 = vunpack.c.l.b16 %v2525
        %v3013 = vunpack.c.h.b16 %v2525
        %v3014 = vunpack.c.l.b16 %v2526
        %v3015 = vunpack.c.h.b16 %v2526
        %v3016 = vunpack.c.l.b16 %v2527
        %v3017 = vunpack.c.h.b16 %v2527
        %v3018 = vunpack.c.l.b16 %v2528
        %v3019 = vunpack.c.h.b16 %v2528
        %v3020 = vunpack.c.l.b16 %v2529
        %v3021 = vunpack.c.h.b16 %v2529
        %v3022 = vunpack.c.l.b16 %v2530
        %v3023 = vunpack.c.l.b16 %v2531
        %v3024 = vunpack.c.h.b16 %v2531
        %v3025 = vunpack.c.l.b16 %v2532
        %v3026 = vunpack.c.h.b16 %v2532
        %v3027 = vunpack.c.l.b16 %v2533
        %v3028 = vunpack.c.h.b16 %v2533
        %v3029 = vunpack.c.l.b16 %v2534
        %v3030 = vunpack.c.h.b16 %v2534
        %v3031 = vunpack.c.l.b16 %v2535
        %v3032 = vunpack.c.h.b16 %v2535
        %v3033 = vunpack.c.l.b16 %v2536
        %v3034 = vunpack.c.h.b16 %v2536
        %v3035 = vunpack.c.l.b16 %v2537
        %v3036 = vunpack.c.h.b16 %v2537
        %v3037 = vunpack.c.l.b16 %v2538
        %v3038 = vunpack.c.h.b16 %v2538
        %v3039 = vunpack.c.l.b16 %v2539
        %v3040 = vunpack.c.l.b16 %v2540
        %v3041 = vunpack.c.h.b16 %v2540
        %v3042 = vunpack.c.l.b16 %v2541
        %v3043 = vunpack.c.h.b16 %v2541
        %v3044 = vunpack.c.l.b16 %v2542
        %v3045 = vunpack.c.h.b16 %v2542
        %v3046 = vunpack.c.l.b16 %v2543
        %v3047 = vunpack.c.h.b16 %v2543
        %v3048 = vunpack.c.l.b16 %v2544
        %v3049 = vunpack.c.h.b16 %v2544
        %v3050 = vunpack.c.l.b16 %v2545
        %v3051 = vunpack.c.h.b16 %v2545
        %v3052 = vunpack.c.l.b16 %v2546
        %v3053 = vunpack.c.h.b16 %v2546
        %v3054 = vunpack.c.l.b16 %v2547
        %v3055 = vunpack.c.h.b16 %v2547
        %v3056 = vunpack.c.l.b16 %v2548
        %v3057 = vunpack.c.l.b16 %v2549
        %v3058 = vunpack.c.h.b16 %v2549
        %v3059 = vunpack.c.l.b16 %v2550
        %v3060 = vunpack.c.h.b16 %v2550
        %v3061 = vunpack.c.l.b16 %v2551
        %v3062 = vunpack.c.h.b16 %v2551
        %v3063 = vunpack.c.l.b16 %v2552
        %v3064 = vunpack.c.h.b16 %v2552
        %v3065 = vunpack.c.l.b16 %v2553
        %v3066 = vunpack.c.h.b16 %v2553
        %v3067 = vunpack.c.l.b16 %v2554
        %v3068 = vunpack.c.h.b16 %v2554
        %v3069 = vunpack.c.l.b16 %v2555
        %v3070 = vunpack.c.h.b16 %v2555
        %v3071 = vunpack.c.l.b16 %v2556
        %v3072 = vunpack.c.h.b16 %v2556
        %v3073 = vunpack.c.l.b16 %v2557
        %v3074 = vunpack.c.l.b16 %v2558
        %v3075 = vunpack.c.h.b16 %v2558
        %v3076 = vunpack.c.l.b16 %v2559
        %v3077 = vunpack.c.h.b16 %v2559
        %v3078 = vunpack.c.l.b16 %v2560
        %v3079 = vunpack.c.h.b16 %v2560
        %v3080 = vunpack.c.l.b16 %v2561
        %v3081 = vunpack.c.h.b16 %v2561
        %v3082 = vunpack.c.l.b16 %v2562
        %v3083 = vunpack.c.h.b16 %v2562
        %v3084 = vunpack.c.l.b16 %v2563
        %v3085 = vunpack.c.h.b16 %v2563
        %v3086 = vunpack.c.l.b16 %v2564
        %v3087 = vunpack.c.h.b16 %v2564
        %v3088 = vunpack.c.l.b16 %v2565
        %v3089 = vunpack.c.h.b16 %v2565
        %v3090 = vunpack.c.l.b16 %v2566
        %v3091 = vunpack.c.l.b16 %v2567
        %v3092 = vunpack.c.h.b16 %v2567
        %v3093 = vunpack.c.l.b16 %v2568
        %v3094 = vunpack.c.h.b16 %v2568
        %v3095 = vunpack.c.l.b16 %v2569
        %v3096 = vunpack.c.h.b16 %v2569
        %v3097 = vunpack.c.l.b16 %v2570
        %v3098 = vunpack.c.h.b16 %v2570
        %v3099 = vunpack.c.l.b16 %v2571
        %v3100 = vunpack.c.h.b16 %v2571
        %v3101 = vunpack.c.l.b16 %v2572
        %v3102 = vunpack.c.h.b16 %v2572
        %v3103 = vunpack.c.l.b16 %v2573
        %v3104 = vunpack.c.h.b16 %v2573
        %v3105 = vunpack.c.l.b16 %v2574
        %v3106 = vunpack.c.h.b16 %v2574
        %v3107 = vunpack.c.l.b16 %v2575
        %v3108 = vunpack.c.l.b16 %v2576
        %v3109 = vunpack.c.h.b16 %v2576
        %v3110 = vunpack.c.l.b16 %v2577
        %v3111 = vunpack.c.h.b16 %v2577
        %v3112 = vunpack.c.l.b16 %v2578
        %v3113 = vunpack.c.h.b16 %v2578
        %v3114 = vunpack.c.l.b16 %v2579
        %v3115 = vunpack.c.h.b16 %v2579
        %v3116 = vunpack.c.l.b16 %v2580
        %v3117 = vunpack.c.h.b16 %v2580
        %v3118 = vunpack.c.l.b16 %v2581
        %v3119 = vunpack.c.h.b16 %v2581
        %v3120 = vunpack.c.l.b16 %v2582
        %v3121 = vunpack.c.h.b16 %v2582
        %v3122 = vunpack.c.l.b16 %v2583
        %v3123 = vunpack.c.h.b16 %v2583
        %v3124 = vunpack.c.l.b16 %v2584
        %v3125 = vunpack.c.l.b16 %v2585
        %v3126 = vunpack.c.h.b16 %v2585
        %v3127 = vunpack.c.l.b16 %v2586
        %v3128 = vunpack.c.h.b16 %v2586
        %v3129 = vunpack.c.l.b16 %v2587
        %v3130 = vunpack.c.h.b16 %v2587
        %v3131 = vunpack.c.l.b16 %v2588
        %v3132 = vunpack.c.h.b16 %v2588
        %v3133 = vunpack.c.l.b16 %v2589
        %v3134 = vunpack.c.h.b16 %v2589
        %v3135 = vunpack.c.l.b16 %v2590
        %v3136 = vunpack.c.h.b16 %v2590
        %v3137 = vunpack.c.l.b16 %v2591
        %v3138 = vunpack.c.h.b16 %v2591
        %v3139 = vunpack.c.l.b16 %v2592
        %v3140 = vunpack.c.h.b16 %v2592
        %v3141 = vunpack.c.l.b16 %v2593
        %v3142 = vunpack.c.l.b16 %v2594
        %v3143 = vunpack.c.h.b16 %v2594
        %v3144 = vunpack.c.l.b16 %v2595
        %v3145 = vunpack.c.h.b16 %v2595
        %v3146 = vunpack.c.l.b16 %v2596
        %v3147 = vunpack.c.h.b16 %v2596
        %v3148 = vunpack.c.l.b16 %v2597
        %v3149 = vunpack.c.h.b16 %v2597
        %v3150 = vunpack.c.l.b16 %v2598
        %v3151 = vunpack.c.h.b16 %v2598
        %v3152 = vunpack.c.l.b16 %v2599
        %v3153 = vunpack.c.h.b16 %v2599
        %v3154 = vunpack.c.l.b16 %v2600
        %v3155 = vunpack.c.h.b16 %v2600
        %v3156 = vunpack.c.l.b16 %v2601
        %v3157 = vunpack.c.h.b16 %v2601
        %v3158 = vunpack.c.l.b16 %v2602
        %v3159 = vunpack.c.l.b16 %v2603
        %v3160 = vunpack.c.h.b16 %v2603
        %v3161 = vunpack.c.l.b16 %v2604
        %v3162 = vunpack.c.h.b16 %v2604
        %v3163 = vunpack.c.l.b16 %v2605
        %v3164 = vunpack.c.h.b16 %v2605
        %v3165 = vunpack.c.l.b16 %v2606
        %v3166 = vunpack.c.h.b16 %v2606
        %v3167 = vunpack.c.l.b16 %v2607
        %v3168 = vunpack.c.h.b16 %v2607
        %v3169 = vunpack.c.l.b16 %v2608
        %v3170 = vunpack.c.h.b16 %v2608
        %v3171 = vunpack.c.l.b16 %v2609
        %v3172 = vunpack.c.h.b16 %v2609
        %v3173 = vunpack.c.l.b16 %v2610
        %v3174 = vunpack.c.h.b16 %v2610
        %v3175 = vunpack.c.l.b16 %v2611
        %v3176 = vunpack.c.l.b16 %v2612
        %v3177 = vunpack.c.h.b16 %v2612
        %v3178 = vunpack.c.l.b16 %v2613
        %v3179 = vunpack.c.h.b16 %v2613
        %v3180 = vunpack.c.l.b16 %v2614
        %v3181 = vunpack.c.h.b16 %v2614
        %v3182 = vunpack.c.l.b16 %v2615
        %v3183 = vunpack.c.h.b16 %v2615
        %v3184 = vunpack.c.l.b16 %v2616
        %v3185 = vunpack.c.h.b16 %v2616
        %v3186 = vunpack.c.l.b16 %v2617
        %v3187 = vunpack.c.h.b16 %v2617
        %v3188 = vunpack.c.l.b16 %v2618
        %v3189 = vunpack.c.h.b16 %v2618
        %v3190 = vunpack.c.l.b16 %v2619
        %v3191 = vunpack.c.h.b16 %v2619
        %v3192 = vunpack.c.l.b16 %v2620
        %v3193 = vpack.c.b16 %v2836, %v2819
        %v3194 = vpack.c.b16 %v2837, %v2820
        %v3195 = vpack.c.b16 %v2838, %v2821
        %v3196 = vpack.c.b16 %v2839, %v2822
        %v3197 = vpack.c.b16 %v2840, %v2823
        %v3198 = vpack.c.b16 %v2841, %v2824
        %v3199 = vpack.c.b16 %v2842, %v2825
        %v3200 = vpack.c.b16 %v2843, %v2826
        %v3201 = vpack.c.b16 %v2844, %v2827
        %v3202 = vpack.c.b16 %v2845, %v2828
        %v3203 = vpack.c.b16 %v2846, %v2829
        %v3204 = vpack.c.b16 %v2847, %v2830
        %v3205 = vpack.c.b16 %v2848, %v2831
        %v3206 = vpack.c.b16 %v2849, %v2832
        %v3207 = vpack.c.b16 %v2850, %v2833
        %v3208 = vpack.c.b16 %v2851, %v2834
        %v3209 = vpack.c.b16 %v2852, %v2835
        %v3210 = vpack.c.b16 %v2870, %v2853
        %v3211 = vpack.c.b16 %v2871, %v2854
        %v3212 = vpack.c.b16 %v2872, %v2855
        %v3213 = vpack.c.b16 %v2873, %v2856
        %v3214 = vpack.c.b16 %v2874, %v2857
        %v3215 = vpack.c.b16 %v2875, %v2858
        %v3216 = vpack.c.b16 %v2876, %v2859
        %v3217 = vpack.c.b16 %v2877, %v2860
        %v3218 = vpack.c.b16 %v2878, %v2861
        %v3219 = vpack.c.b16 %v2879, %v2862
        %v3220 = vpack.c.b16 %v2880, %v2863
        %v3221 = vpack.c.b16 %v2881, %v2864
        %v3222 = vpack.c.b16 %v2882, %v2865
        %v3223 = vpack.c.b16 %v2883, %v2866
        %v3224 = vpack.c.b16 %v2884, %v2867
        %v3225 = vpack.c.b16 %v2885, %v2868
        %v3226 = vpack.c.b16 %v2886, %v2869
        %v3227 = vpack.c.b16 %v2904, %v2887
        %v3228 = vpack.c.b16 %v2905, %v2888
        %v3229 = vpack.c.b16 %v2906, %v2889
        %v3230 = vpack.c.b16 %v2907, %v2890
        %v3231 = vpack.c.b16 %v2908, %v2891
        %v3232 = vpack.c.b16 %v2909, %v2892
        %v3233 = vpack.c.b16 %v2910, %v2893
        %v3234 = vpack.c.b16 %v2911, %v2894
        %v3235 = vpack.c.b16 %v2912, %v2895
        %v3236 = vpack.c.b16 %v2913, %v2896
        %v3237 = vpack.c.b16 %v2914, %v2897
        %v3238 = vpack.c.b16 %v2915, %v2898
        %v3239 = vpack.c.b16 %v2916, %v2899
        %v3240 = vpack.c.b16 %v2917, %v2900
        %v3241 = vpack.c.b16 %v2918, %v2901
        %v3242 = vpack.c.b16 %v2919, %v2902
        %v3243 = vpack.c.b16 %v2920, %v2903
        %v3244 = vpack.c.b16 %v2938, %v2921
        %v3245 = vpack.c.b16 %v2939, %v2922
        %v3246 = vpack.c.b16 %v2940, %v2923
        %v3247 = vpack.c.b16 %v2941, %v2924
        %v3248 = vpack.c.b16 %v2942, %v2925
        %v3249 = vpack.c.b16 %v2943, %v2926
        %v3250 = vpack.c.b16 %v2944, %v2927
        %v3251 = vpack.c.b16 %v2945, %v2928
        %v3252 = vpack.c.b16 %v2946, %v2929
        %v3253 = vpack.c.b16 %v2947, %v2930
        %v3254 = vpack.c.b16 %v2948, %v2931
        %v3255 = vpack.c.b16 %v2949, %v2932
        %v3256 = vpack.c.b16 %v2950, %v2933
        %v3257 = vpack.c.b16 %v2951, %v2934
        %v3258 = vpack.c.b16 %v2952, %v2935
        %v3259 = vpack.c.b16 %v2953, %v2936
        %v3260 = vpack.c.b16 %v2954, %v2937
        %v3261 = vpack.c.b16 %v2972, %v2955
        %v3262 = vpack.c.b16 %v2973, %v2956
        %v3263 = vpack.c.b16 %v2974, %v2957
        %v3264 = vpack.c.b16 %v2975, %v2958
        %v3265 = vpack.c.b16 %v2976, %v2959
        %v3266 = vpack.c.b16 %v2977, %v2960
        %v3267 = vpack.c.b16 %v2978, %v2961
        %v3268 = vpack.c.b16 %v2979, %v2962
        %v3269 = vpack.c.b16 %v2980, %v2963
        %v3270 = vpack.c.b16 %v2981, %v2964
        %v3271 = vpack.c.b16 %v2982, %v2965
        %v3272 = vpack.c.b16 %v2983, %v2966
        %v3273 = vpack.c.b16 %v2984, %v2967
        %v3274 = vpack.c.b16 %v2985, %v2968
        %v3275 = vpack.c.b16 %v2986, %v2969
        %v3276 = vpack.c.b16 %v2987, %v2970
        %v3277 = vpack.c.b16 %v2988, %v2971
        %v3278 = vpack.c.b16 %v3006, %v2989
        %v3279 = vpack.c.b16 %v3007, %v2990
        %v3280 = vpack.c.b16 %v3008, %v2991
        %v3281 = vpack.c.b16 %v3009, %v2992
        %v3282 = vpack.c.b16 %v3010, %v2993
        %v3283 = vpack.c.b16 %v3011, %v2994
        %v3284 = vpack.c.b16 %v3012, %v2995
        %v3285 = vpack.c.b16 %v3013, %v2996
        %v3286 = vpack.c.b16 %v3014, %v2997
        %v3287 = vpack.c.b16 %v3015, %v2998
        %v3288 = vpack.c.b16 %v3016, %v2999
        %v3289 = vpack.c.b16 %v3017, %v3000
        %v3290 = vpack.c.b16 %v3018, %v3001
        %v3291 = vpack.c.b16 %v3019, %v3002
        %v3292 = vpack.c.b16 %v3020, %v3003
        %v3293 = vpack.c.b16 %v3021, %v3004
        %v3294 = vpack.c.b16 %v3022, %v3005
        %v3295 = vpack.c.b16 %v3040, %v3023
        %v3296 = vpack.c.b16 %v3041, %v3024
        %v3297 = vpack.c.b16 %v3042, %v3025
        %v3298 = vpack.c.b16 %v3043, %v3026
        %v3299 = vpack.c.b16 %v3044, %v3027
        %v3300 = vpack.c.b16 %v3045, %v3028
        %v3301 = vpack.c.b16 %v3046, %v3029
        %v3302 = vpack.c.b16 %v3047, %v3030
        %v3303 = vpack.c.b16 %v3048, %v3031
        %v3304 = vpack.c.b16 %v3049, %v3032
        %v3305 = vpack.c.b16 %v3050, %v3033
        %v3306 = vpack.c.b16 %v3051, %v3034
        %v3307 = vpack.c.b16 %v3052, %v3035
        %v3308 = vpack.c.b16 %v3053, %v3036
        %v3309 = vpack.c.b16 %v3054, %v3037
        %v3310 = vpack.c.b16 %v3055, %v3038
        %v3311 = vpack.c.b16 %v3056, %v3039
        %v3312 = vpack.c.b16 %v3074, %v3057
        %v3313 = vpack.c.b16 %v3075, %v3058
        %v3314 = vpack.c.b16 %v3076, %v3059
        %v3315 = vpack.c.b16 %v3077, %v3060
        %v3316 = vpack.c.b16 %v3078, %v3061
        %v3317 = vpack.c.b16 %v3079, %v3062
        %v3318 = vpack.c.b16 %v3080, %v3063
        %v3319 = vpack.c.b16 %v3081, %v3064
        %v3320 = vpack.c.b16 %v3082, %v3065
        %v3321 = vpack.c.b16 %v3083, %v3066
        %v3322 = vpack.c.b16 %v3084, %v3067
        %v3323 = vpack.c.b16 %v3085, %v3068
        %v3324 = vpack.c.b16 %v3086, %v3069
        %v3325 = vpack.c.b16 %v3087, %v3070
        %v3326 = vpack.c.b16 %v3088, %v3071
        %v3327 = vpack.c.b16 %v3089, %v3072
        %v3328 = vpack.c.b16 %v3090, %v3073
        %v3329 = vpack.c.b16 %v3108, %v3091
        %v3330 = vpack.c.b16 %v3109, %v3092
        %v3331 = vpack.c.b16 %v3110, %v3093
        %v3332 = vpack.c.b16 %v3111, %v3094
        %v3333 = vpack.c.b16 %v3112, %v3095
        %v3334 = vpack.c.b16 %v3113, %v3096
        %v3335 = vpack.c.b16 %v3114, %v3097
        %v3336 = vpack.c.b16 %v3115, %v3098
        %v3337 = vpack.c.b16 %v3116, %v3099
        %v3338 = vpack.c.b16 %v3117, %v3100
        %v3339 = vpack.c.b16 %v3118, %v3101
        %v3340 = vpack.c.b16 %v3119, %v3102
        %v3341 = vpack.c.b16 %v3120, %v3103
        %v3342 = vpack.c.b16 %v3121, %v3104
        %v3343 = vpack.c.b16 %v3122, %v3105
        %v3344 = vpack.c.b16 %v3123, %v3106
        %v3345 = vpack.c.b16 %v3124, %v3107
        %v3346 = vpack.c.b16 %v3142, %v3125
        %v3347 = vpack.c.b16 %v3143, %v3126
        %v3348 = vpack.c.b16 %v3144, %v3127
        %v3349 = vpack.c.b16 %v3145, %v3128
        %v3350 = vpack.c.b16 %v3146, %v3129
        %v3351 = vpack.c.b16 %v3147, %v3130
        %v3352 = vpack.c.b16 %v3148, %v3131
        %v3353 = vpack.c.b16 %v3149, %v3132
        %v3354 = vpack.c.b16 %v3150, %v3133
        %v3355 = vpack.c.b16 %v3151, %v3134
        %v3356 = vpack.c.b16 %v3152, %v3135
        %v3357 = vpack.c.b16 %v3153, %v3136
        %v3358 = vpack.c.b16 %v3154, %v3137
        %v3359 = vpack.c.b16 %v3155, %v3138
        %v3360 = vpack.c.b16 %v3156, %v3139
        %v3361 = vpack.c.b16 %v3157, %v3140
        %v3362 = vpack.c.b16 %v3158, %v3141
        %v3363 = vpack.c.b16 %v3176, %v3159
        %v3364 = vpack.c.b16 %v3177, %v3160
        %v3365 = vpack.c.b16 %v3178, %v3161
        %v3366 = vpack.c.b16 %v3179, %v3162
        %v3367 = vpack.c.b16 %v3180, %v3163
        %v3368 = vpack.c.b16 %v3181, %v3164
        %v3369 = vpack.c.b16 %v3182, %v3165
        %v3370 = vpack.c.b16 %v3183, %v3166
        %v3371 = vpack.c.b16 %v3184, %v3167
        %v3372 = vpack.c.b16 %v3185, %v3168
        %v3373 = vpack.c.b16 %v3186, %v3169
        %v3374 = vpack.c.b16 %v3187, %v3170
        %v3375 = vpack.c.b16 %v3188, %v3171
        %v3376 = vpack.c.b16 %v3189, %v3172
        %v3377 = vpack.c.b16 %v3190, %v3173
        %v3378 = vpack.c.b16 %v3191, %v3174
        %v3379 = vpack.c.b16 %v3192, %v3175
        %vm3556 = vcmask 130048
        %v3558 = vsel %vm3556, %v3209, 0
        %v3561 = vsel %vm3556, %v3226, 0
        %v3564 = vsel %vm3556, %v3243, 0
        %v3567 = vsel %vm3556, %v3260, 0
        %v3570 = vsel %vm3556, %v3277, 0
        %v3573 = vsel %vm3556, %v3294, 0
        %v3576 = vsel %vm3556, %v3311, 0
        %v3579 = vsel %vm3556, %v3328, 0
        %v3582 = vsel %vm3556, %v3345, 0
        %v3585 = vsel %vm3556, %v3362, 0
        %v3588 = vsel %vm3556, %v3379, 0
        %3590 = vmatprep.subr.bf16.mxu0 0
        %3591 = vmatpush1.bf16.msra.mxu0 %v2294
        %3592 = vmatprep.subr.bf16.mxu0 0
        %3593 = vmatpush1.bf16.msra.mxu0 %v2295
        %3594 = vmatprep.subr.bf16.mxu0 0
        %3595 = vmatpush1.bf16.msra.mxu0 %v2296
        %3596 = vmatprep.subr.bf16.mxu0 0
        %3597 = vmatpush1.bf16.msra.mxu0 %v2297
        %3598 = vmatprep.subr.bf16.mxu0 0
        %3599 = vmatpush1.bf16.msra.mxu0 %v2298
        %3600 = vmatprep.subr.bf16.mxu0 0
        %3601 = vmatpush1.bf16.msra.mxu0 %v2299
        %3602 = vmatprep.subr.bf16.mxu0 0
        %3603 = vmatpush1.bf16.msra.mxu0 %v2300
        %3604 = vmatprep.subr.bf16.mxu0 0
        %3605 = vmatpush1.bf16.msra.mxu0 %v2301
        %3606 = vmatprep.subr.bf16.mxu0 0
        %3607 = vmatpush1.bf16.msra.mxu0 %v2302
        %3608 = vmatprep.subr.bf16.mxu0 0
        %3609 = vmatpush1.bf16.msra.mxu0 %v2303
        %3610 = vmatprep.subr.bf16.mxu0 0
        %3611 = vmatpush1.bf16.msra.mxu0 %v2304
        %3612 = vmatprep.subr.bf16.mxu0 0
        %3613 = vmatpush1.bf16.msra.mxu0 %v2305
        %3614 = vmatprep.subr.bf16.mxu0 0
        %3615 = vmatpush1.bf16.msra.mxu0 %v2306
        %3616 = vmatprep.subr.bf16.mxu0 0
        %3617 = vmatpush1.bf16.msra.mxu0 %v2307
        %3618 = vmatprep.subr.bf16.mxu0 0
        %3619 = vmatpush1.bf16.msra.mxu0 %v2308
        %3620 = vmatprep.subr.bf16.mxu0 0
        %3621 = vmatpush1.bf16.msra.mxu0 %v2309
        %3622 = vmatprep.mubr.bf16.mxu0 %v3194
        %3623 = vmatmul.mubr.bf16.gmra.mrb[0].mxu0 %v3193
        %v3624 = vpop.f32.mrb[0].mxu0
        %v3625 = vadd.f32 0.0, %v3624
        %v3626 = vpop.f32.mrb[0].mxu0
        %v3627 = vpop.f32.mrb[0].mxu0
        %v3628 = vadd.f32 0.0, %v3627
        %v3629 = vpop.f32.mrb[0].mxu0
        %3630 = vmatprep.mubr.bf16.mxu0 %v3211
        %3631 = vmatmul.mubr.bf16.gmra.mrb[0].mxu0 %v3210
        %v3632 = vpop.f32.mrb[0].mxu0
        %v3633 = vadd.f32 0.0, %v3632
        %v3634 = vpop.f32.mrb[0].mxu0
        %v3635 = vpop.f32.mrb[0].mxu0
        %v3636 = vadd.f32 0.0, %v3635
        %v3637 = vpop.f32.mrb[0].mxu0
        %3638 = vmatprep.mubr.bf16.mxu0 %v3228
        %3639 = vmatmul.mubr.bf16.gmra.mrb[0].mxu0 %v3227
        %v3640 = vpop.f32.mrb[0].mxu0
        %v3641 = vadd.f32 0.0, %v3640
        %v3642 = vpop.f32.mrb[0].mxu0
        %v3643 = vpop.f32.mrb[0].mxu0
        %v3644 = vadd.f32 0.0, %v3643
        %v3645 = vpop.f32.mrb[0].mxu0
        %3646 = vmatprep.mubr.bf16.mxu0 %v3245
        %3647 = vmatmul.mubr.bf16.gmra.mrb[0].mxu0 %v3244
        %v3648 = vpop.f32.mrb[0].mxu0
        %v3649 = vadd.f32 0.0, %v3648
        %v3650 = vpop.f32.mrb[0].mxu0
        %v3651 = vpop.f32.mrb[0].mxu0
        %v3652 = vadd.f32 0.0, %v3651
        %v3653 = vpop.f32.mrb[0].mxu0
        %3654 = vmatprep.mubr.bf16.mxu0 %v3262
        %3655 = vmatmul.mubr.bf16.gmra.mrb[0].mxu0 %v3261
        %v3656 = vpop.f32.mrb[0].mxu0
        %v3657 = vadd.f32 0.0, %v3656
        %v3658 = vpop.f32.mrb[0].mxu0
        %v3659 = vpop.f32.mrb[0].mxu0
        %v3660 = vadd.f32 0.0, %v3659
        %v3661 = vpop.f32.mrb[0].mxu0
        %3662 = vmatprep.mubr.bf16.mxu0 %v3279
        %3663 = vmatmul.mubr.bf16.gmra.mrb[0].mxu0 %v3278
        %v3664 = vpop.f32.mrb[0].mxu0
        %v3665 = vadd.f32 0.0, %v3664
        %v3666 = vpop.f32.mrb[0].mxu0
        %v3667 = vpop.f32.mrb[0].mxu0
        %v3668 = vadd.f32 0.0, %v3667
        %v3669 = vpop.f32.mrb[0].mxu0
        %3670 = vmatprep.mubr.bf16.mxu0 %v3296
        %3671 = vmatmul.mubr.bf16.gmra.mrb[0].mxu0 %v3295
        %v3672 = vpop.f32.mrb[0].mxu0
        %v3673 = vadd.f32 0.0, %v3672
        %v3674 = vpop.f32.mrb[0].mxu0
        %v3675 = vpop.f32.mrb[0].mxu0
        %v3676 = vadd.f32 0.0, %v3675
        %v3677 = vpop.f32.mrb[0].mxu0
        %3678 = vmatprep.mubr.bf16.mxu0 %v3313
        %3679 = vmatmul.mubr.bf16.gmra.mrb[0].mxu0 %v3312
        %v3680 = vpop.f32.mrb[0].mxu0
        %v3681 = vadd.f32 0.0, %v3680
        %v3682 = vpop.f32.mrb[0].mxu0
        %v3683 = vpop.f32.mrb[0].mxu0
        %v3684 = vadd.f32 0.0, %v3683
        %v3685 = vpop.f32.mrb[0].mxu0
        %3686 = vmatprep.mubr.bf16.mxu0 %v3330
        %3687 = vmatmul.mubr.bf16.gmra.mrb[0].mxu0 %v3329
        %v3688 = vpop.f32.mrb[0].mxu0
        %v3689 = vadd.f32 0.0, %v3688
        %v3690 = vpop.f32.mrb[0].mxu0
        %v3691 = vpop.f32.mrb[0].mxu0
        %v3692 = vadd.f32 0.0, %v3691
        %v3693 = vpop.f32.mrb[0].mxu0
        %3694 = vmatprep.mubr.bf16.mxu0 %v3347
        %3695 = vmatmul.mubr.bf16.gmra.mrb[0].mxu0 %v3346
        %v3696 = vpop.f32.mrb[0].mxu0
        %v3697 = vadd.f32 0.0, %v3696
        %v3698 = vpop.f32.mrb[0].mxu0
        %v3699 = vpop.f32.mrb[0].mxu0
        %v3700 = vadd.f32 0.0, %v3699
        %v3701 = vpop.f32.mrb[0].mxu0
        %3702 = vmatprep.mubr.bf16.mxu0 %v3364
        %3703 = vmatmul.mubr.bf16.gmra.mrb[0].mxu0 %v3363
        %v3704 = vpop.f32.mrb[0].mxu0
        %v3705 = vadd.f32 0.0, %v3704
        %v3706 = vpop.f32.mrb[0].mxu0
        %v3707 = vpop.f32.mrb[0].mxu0
        %v3708 = vadd.f32 0.0, %v3707
        %v3709 = vpop.f32.mrb[0].mxu0
        %3710 = vdwg.mxu0
        %3711 = vmatprep.subr.bf16.mxu0 0
        %3712 = vmatpush1.bf16.msra.mxu0 %v2310
        %3713 = vmatprep.subr.bf16.mxu0 0
        %3714 = vmatpush1.bf16.msra.mxu0 %v2311
        %3715 = vmatprep.subr.bf16.mxu0 0
        %3716 = vmatpush1.bf16.msra.mxu0 %v2312
        %3717 = vmatprep.subr.bf16.mxu0 0
        %3718 = vmatpush1.bf16.msra.mxu0 %v2313
        %3719 = vmatprep.subr.bf16.mxu0 0
        %3720 = vmatpush1.bf16.msra.mxu0 %v2314
        %3721 = vmatprep.subr.bf16.mxu0 0
        %3722 = vmatpush1.bf16.msra.mxu0 %v2315
        %3723 = vmatprep.subr.bf16.mxu0 0
        %3724 = vmatpush1.bf16.msra.mxu0 %v2316
        %3725 = vmatprep.subr.bf16.mxu0 0
        %3726 = vmatpush1.bf16.msra.mxu0 %v2317
        %3727 = vmatprep.subr.bf16.mxu0 0
        %3728 = vmatpush1.bf16.msra.mxu0 %v2318
        %3729 = vmatprep.subr.bf16.mxu0 0
        %3730 = vmatpush1.bf16.msra.mxu0 %v2319
        %3731 = vmatprep.subr.bf16.mxu0 0
        %3732 = vmatpush1.bf16.msra.mxu0 %v2320
        %3733 = vmatprep.subr.bf16.mxu0 0
        %3734 = vmatpush1.bf16.msra.mxu0 %v2321
        %3735 = vmatprep.subr.bf16.mxu0 0
        %3736 = vmatpush1.bf16.msra.mxu0 %v2322
        %3737 = vmatprep.subr.bf16.mxu0 0
        %3738 = vmatpush1.bf16.msra.mxu0 %v2323
        %3739 = vmatprep.subr.bf16.mxu0 0
        %3740 = vmatpush1.bf16.msra.mxu0 %v2324
        %3741 = vmatprep.subr.bf16.mxu0 0
        %3742 = vmatpush1.bf16.msra.mxu0 %v2325
        %3743 = vmatprep.mubr.bf16.mxu0 %v3196
        %3744 = vmatmul.mubr.bf16.gmra.mrb[0].mxu0 %v3195
        %v3745 = vpop.f32.mrb[0].mxu0
        %v3746 = vadd.f32 %v3625, %v3745
        %v3747 = vpop.f32.mrb[0].mxu0
        %v3748 = vpop.f32.mrb[0].mxu0
        %v3749 = vadd.f32 %v3628, %v3748
        %v3750 = vpop.f32.mrb[0].mxu0
        %3751 = vmatprep.mubr.bf16.mxu0 %v3213
        %3752 = vmatmul.mubr.bf16.gmra.mrb[0].mxu0 %v3212
        %v3753 = vpop.f32.mrb[0].mxu0
        %v3754 = vadd.f32 %v3633, %v3753
        %v3755 = vpop.f32.mrb[0].mxu0
        %v3756 = vpop.f32.mrb[0].mxu0
        %v3757 = vadd.f32 %v3636, %v3756
        %v3758 = vpop.f32.mrb[0].mxu0
        %3759 = vmatprep.mubr.bf16.mxu0 %v3230
        %3760 = vmatmul.mubr.bf16.gmra.mrb[0].mxu0 %v3229
        %v3761 = vpop.f32.mrb[0].mxu0
        %v3762 = vadd.f32 %v3641, %v3761
        %v3763 = vpop.f32.mrb[0].mxu0
        %v3764 = vpop.f32.mrb[0].mxu0
        %v3765 = vadd.f32 %v3644, %v3764
        %v3766 = vpop.f32.mrb[0].mxu0
        %3767 = vmatprep.mubr.bf16.mxu0 %v3247
        %3768 = vmatmul.mubr.bf16.gmra.mrb[0].mxu0 %v3246
        %v3769 = vpop.f32.mrb[0].mxu0
        %v3770 = vadd.f32 %v3649, %v3769
        %v3771 = vpop.f32.mrb[0].mxu0
        %v3772 = vpop.f32.mrb[0].mxu0
        %v3773 = vadd.f32 %v3652, %v3772
        %v3774 = vpop.f32.mrb[0].mxu0
        %3775 = vmatprep.mubr.bf16.mxu0 %v3264
        %3776 = vmatmul.mubr.bf16.gmra.mrb[0].mxu0 %v3263
        %v3777 = vpop.f32.mrb[0].mxu0
        %v3778 = vadd.f32 %v3657, %v3777
        %v3779 = vpop.f32.mrb[0].mxu0
        %v3780 = vpop.f32.mrb[0].mxu0
        %v3781 = vadd.f32 %v3660, %v3780
        %v3782 = vpop.f32.mrb[0].mxu0
        %3783 = vmatprep.mubr.bf16.mxu0 %v3281
        %3784 = vmatmul.mubr.bf16.gmra.mrb[0].mxu0 %v3280
        %v3785 = vpop.f32.mrb[0].mxu0
        %v3786 = vadd.f32 %v3665, %v3785
        %v3787 = vpop.f32.mrb[0].mxu0
        %v3788 = vpop.f32.mrb[0].mxu0
        %v3789 = vadd.f32 %v3668, %v3788
        %v3790 = vpop.f32.mrb[0].mxu0
        %3791 = vmatprep.mubr.bf16.mxu0 %v3298
        %3792 = vmatmul.mubr.bf16.gmra.mrb[0].mxu0 %v3297
        %v3793 = vpop.f32.mrb[0].mxu0
        %v3794 = vadd.f32 %v3673, %v3793
        %v3795 = vpop.f32.mrb[0].mxu0
        %v3796 = vpop.f32.mrb[0].mxu0
        %v3797 = vadd.f32 %v3676, %v3796
        %v3798 = vpop.f32.mrb[0].mxu0
        %3799 = vmatprep.mubr.bf16.mxu0 %v3315
        %3800 = vmatmul.mubr.bf16.gmra.mrb[0].mxu0 %v3314
        %v3801 = vpop.f32.mrb[0].mxu0
        %v3802 = vadd.f32 %v3681, %v3801
        %v3803 = vpop.f32.mrb[0].mxu0
        %v3804 = vpop.f32.mrb[0].mxu0
        %v3805 = vadd.f32 %v3684, %v3804
        %v3806 = vpop.f32.mrb[0].mxu0
        %3807 = vmatprep.mubr.bf16.mxu0 %v3332
        %3808 = vmatmul.mubr.bf16.gmra.mrb[0].mxu0 %v3331
        %v3809 = vpop.f32.mrb[0].mxu0
        %v3810 = vadd.f32 %v3689, %v3809
        %v3811 = vpop.f32.mrb[0].mxu0
        %v3812 = vpop.f32.mrb[0].mxu0
        %v3813 = vadd.f32 %v3692, %v3812
        %v3814 = vpop.f32.mrb[0].mxu0
        %3815 = vmatprep.mubr.bf16.mxu0 %v3349
        %3816 = vmatmul.mubr.bf16.gmra.mrb[0].mxu0 %v3348
        %v3817 = vpop.f32.mrb[0].mxu0
        %v3818 = vadd.f32 %v3697, %v3817
        %v3819 = vpop.f32.mrb[0].mxu0
        %v3820 = vpop.f32.mrb[0].mxu0
        %v3821 = vadd.f32 %v3700, %v3820
        %v3822 = vpop.f32.mrb[0].mxu0
        %3823 = vmatprep.mubr.bf16.mxu0 %v3366
        %3824 = vmatmul.mubr.bf16.gmra.mrb[0].mxu0 %v3365
        %v3825 = vpop.f32.mrb[0].mxu0
        %v3826 = vadd.f32 %v3705, %v3825
        %v3827 = vpop.f32.mrb[0].mxu0
        %v3828 = vpop.f32.mrb[0].mxu0
        %v3829 = vadd.f32 %v3708, %v3828
        %v3830 = vpop.f32.mrb[0].mxu0
        %3831 = vdwg.mxu0
        %3832 = vmatprep.subr.bf16.mxu0 0
        %3833 = vmatpush1.bf16.msra.mxu0 %v2326
        %3834 = vmatprep.subr.bf16.mxu0 0
        %3835 = vmatpush1.bf16.msra.mxu0 %v2327
        %3836 = vmatprep.subr.bf16.mxu0 0
        %3837 = vmatpush1.bf16.msra.mxu0 %v2328
        %3838 = vmatprep.subr.bf16.mxu0 0
        %3839 = vmatpush1.bf16.msra.mxu0 %v2329
        %3840 = vmatprep.subr.bf16.mxu0 0
        %3841 = vmatpush1.bf16.msra.mxu0 %v2330
        %3842 = vmatprep.subr.bf16.mxu0 0
        %3843 = vmatpush1.bf16.msra.mxu0 %v2331
        %3844 = vmatprep.subr.bf16.mxu0 0
        %3845 = vmatpush1.bf16.msra.mxu0 %v2332
        %3846 = vmatprep.subr.bf16.mxu0 0
        %3847 = vmatpush1.bf16.msra.mxu0 %v2333
        %3848 = vmatprep.subr.bf16.mxu0 0
        %3849 = vmatpush1.bf16.msra.mxu0 %v2334
        %3850 = vmatprep.subr.bf16.mxu0 0
        %3851 = vmatpush1.bf16.msra.mxu0 %v2335
        %3852 = vmatprep.subr.bf16.mxu0 0
        %3853 = vmatpush1.bf16.msra.mxu0 %v2336
        %3854 = vmatprep.subr.bf16.mxu0 0
        %3855 = vmatpush1.bf16.msra.mxu0 %v2337
        %3856 = vmatprep.subr.bf16.mxu0 0
        %3857 = vmatpush1.bf16.msra.mxu0 %v2338
        %3858 = vmatprep.subr.bf16.mxu0 0
        %3859 = vmatpush1.bf16.msra.mxu0 %v2339
        %3860 = vmatprep.subr.bf16.mxu0 0
        %3861 = vmatpush1.bf16.msra.mxu0 %v2340
        %3862 = vmatprep.subr.bf16.mxu0 0
        %3863 = vmatpush1.bf16.msra.mxu0 %v2341
        %3864 = vmatprep.mubr.bf16.mxu0 %v3198
        %3865 = vmatmul.mubr.bf16.gmra.mrb[0].mxu0 %v3197
        %v3866 = vpop.f32.mrb[0].mxu0
        %v3867 = vadd.f32 %v3746, %v3866
        %v3868 = vpop.f32.mrb[0].mxu0
        %v3869 = vpop.f32.mrb[0].mxu0
        %v3870 = vadd.f32 %v3749, %v3869
        %v3871 = vpop.f32.mrb[0].mxu0
        %3872 = vmatprep.mubr.bf16.mxu0 %v3215
        %3873 = vmatmul.mubr.bf16.gmra.mrb[0].mxu0 %v3214
        %v3874 = vpop.f32.mrb[0].mxu0
        %v3875 = vadd.f32 %v3754, %v3874
        %v3876 = vpop.f32.mrb[0].mxu0
        %v3877 = vpop.f32.mrb[0].mxu0
        %v3878 = vadd.f32 %v3757, %v3877
        %v3879 = vpop.f32.mrb[0].mxu0
        %3880 = vmatprep.mubr.bf16.mxu0 %v3232
        %3881 = vmatmul.mubr.bf16.gmra.mrb[0].mxu0 %v3231
        %v3882 = vpop.f32.mrb[0].mxu0
        %v3883 = vadd.f32 %v3762, %v3882
        %v3884 = vpop.f32.mrb[0].mxu0
        %v3885 = vpop.f32.mrb[0].mxu0
        %v3886 = vadd.f32 %v3765, %v3885
        %v3887 = vpop.f32.mrb[0].mxu0
        %3888 = vmatprep.mubr.bf16.mxu0 %v3249
        %3889 = vmatmul.mubr.bf16.gmra.mrb[0].mxu0 %v3248
        %v3890 = vpop.f32.mrb[0].mxu0
        %v3891 = vadd.f32 %v3770, %v3890
        %v3892 = vpop.f32.mrb[0].mxu0
        %v3893 = vpop.f32.mrb[0].mxu0
        %v3894 = vadd.f32 %v3773, %v3893
        %v3895 = vpop.f32.mrb[0].mxu0
        %3896 = vmatprep.mubr.bf16.mxu0 %v3266
        %3897 = vmatmul.mubr.bf16.gmra.mrb[0].mxu0 %v3265
        %v3898 = vpop.f32.mrb[0].mxu0
        %v3899 = vadd.f32 %v3778, %v3898
        %v3900 = vpop.f32.mrb[0].mxu0
        %v3901 = vpop.f32.mrb[0].mxu0
        %v3902 = vadd.f32 %v3781, %v3901
        %v3903 = vpop.f32.mrb[0].mxu0
        %3904 = vmatprep.mubr.bf16.mxu0 %v3283
        %3905 = vmatmul.mubr.bf16.gmra.mrb[0].mxu0 %v3282
        %v3906 = vpop.f32.mrb[0].mxu0
        %v3907 = vadd.f32 %v3786, %v3906
        %v3908 = vpop.f32.mrb[0].mxu0
        %v3909 = vpop.f32.mrb[0].mxu0
        %v3910 = vadd.f32 %v3789, %v3909
        %v3911 = vpop.f32.mrb[0].mxu0
        %3912 = vmatprep.mubr.bf16.mxu0 %v3300
        %3913 = vmatmul.mubr.bf16.gmra.mrb[0].mxu0 %v3299
        %v3914 = vpop.f32.mrb[0].mxu0
        %v3915 = vadd.f32 %v3794, %v3914
        %v3916 = vpop.f32.mrb[0].mxu0
        %v3917 = vpop.f32.mrb[0].mxu0
        %v3918 = vadd.f32 %v3797, %v3917
        %v3919 = vpop.f32.mrb[0].mxu0
        %3920 = vmatprep.mubr.bf16.mxu0 %v3317
        %3921 = vmatmul.mubr.bf16.gmra.mrb[0].mxu0 %v3316
        %v3922 = vpop.f32.mrb[0].mxu0
        %v3923 = vadd.f32 %v3802, %v3922
        %v3924 = vpop.f32.mrb[0].mxu0
        %v3925 = vpop.f32.mrb[0].mxu0
        %v3926 = vadd.f32 %v3805, %v3925
        %v3927 = vpop.f32.mrb[0].mxu0
        %3928 = vmatprep.mubr.bf16.mxu0 %v3334
        %3929 = vmatmul.mubr.bf16.gmra.mrb[0].mxu0 %v3333
        %v3930 = vpop.f32.mrb[0].mxu0
        %v3931 = vadd.f32 %v3810, %v3930
        %v3932 = vpop.f32.mrb[0].mxu0
        %v3933 = vpop.f32.mrb[0].mxu0
        %v3934 = vadd.f32 %v3813, %v3933
        %v3935 = vpop.f32.mrb[0].mxu0
        %3936 = vmatprep.mubr.bf16.mxu0 %v3351
        %3937 = vmatmul.mubr.bf16.gmra.mrb[0].mxu0 %v3350
        %v3938 = vpop.f32.mrb[0].mxu0
        %v3939 = vadd.f32 %v3818, %v3938
        %v3940 = vpop.f32.mrb[0].mxu0
        %v3941 = vpop.f32.mrb[0].mxu0
        %v3942 = vadd.f32 %v3821, %v3941
        %v3943 = vpop.f32.mrb[0].mxu0
        %3944 = vmatprep.mubr.bf16.mxu0 %v3368
        %3945 = vmatmul.mubr.bf16.gmra.mrb[0].mxu0 %v3367
        %v3946 = vpop.f32.mrb[0].mxu0
        %v3947 = vadd.f32 %v3826, %v3946
        %v3948 = vpop.f32.mrb[0].mxu0
        %v3949 = vpop.f32.mrb[0].mxu0
        %v3950 = vadd.f32 %v3829, %v3949
        %v3951 = vpop.f32.mrb[0].mxu0
        %3952 = vdwg.mxu0
        %3953 = vmatprep.subr.bf16.mxu0 0
        %3954 = vmatpush1.bf16.msra.mxu0 %v2342
        %3955 = vmatprep.subr.bf16.mxu0 0
        %3956 = vmatpush1.bf16.msra.mxu0 %v2343
        %3957 = vmatprep.subr.bf16.mxu0 0
        %3958 = vmatpush1.bf16.msra.mxu0 %v2344
        %3959 = vmatprep.subr.bf16.mxu0 0
        %3960 = vmatpush1.bf16.msra.mxu0 %v2345
        %3961 = vmatprep.subr.bf16.mxu0 0
        %3962 = vmatpush1.bf16.msra.mxu0 %v2346
        %3963 = vmatprep.subr.bf16.mxu0 0
        %3964 = vmatpush1.bf16.msra.mxu0 %v2347
        %3965 = vmatprep.subr.bf16.mxu0 0
        %3966 = vmatpush1.bf16.msra.mxu0 %v2348
        %3967 = vmatprep.subr.bf16.mxu0 0
        %3968 = vmatpush1.bf16.msra.mxu0 %v2349
        %3969 = vmatprep.subr.bf16.mxu0 0
        %3970 = vmatpush1.bf16.msra.mxu0 %v2350
        %3971 = vmatprep.subr.bf16.mxu0 0
        %3972 = vmatpush1.bf16.msra.mxu0 %v2351
        %3973 = vmatprep.subr.bf16.mxu0 0
        %3974 = vmatpush1.bf16.msra.mxu0 %v2352
        %3975 = vmatprep.subr.bf16.mxu0 0
        %3976 = vmatpush1.bf16.msra.mxu0 %v2353
        %3977 = vmatprep.subr.bf16.mxu0 0
        %3978 = vmatpush1.bf16.msra.mxu0 %v2354
        %3979 = vmatprep.subr.bf16.mxu0 0
        %3980 = vmatpush1.bf16.msra.mxu0 %v2355
        %3981 = vmatprep.subr.bf16.mxu0 0
        %3982 = vmatpush1.bf16.msra.mxu0 %v2356
        %3983 = vmatprep.subr.bf16.mxu0 0
        %3984 = vmatpush1.bf16.msra.mxu0 %v2357
        %3985 = vmatprep.mubr.bf16.mxu0 %v3200
        %3986 = vmatmul.mubr.bf16.gmra.mrb[0].mxu0 %v3199
        %v3987 = vpop.f32.mrb[0].mxu0
        %v3988 = vadd.f32 %v3867, %v3987
        %v3989 = vpop.f32.mrb[0].mxu0
        %v3990 = vpop.f32.mrb[0].mxu0
        %v3991 = vadd.f32 %v3870, %v3990
        %v3992 = vpop.f32.mrb[0].mxu0
        %3993 = vmatprep.mubr.bf16.mxu0 %v3217
        %3994 = vmatmul.mubr.bf16.gmra.mrb[0].mxu0 %v3216
        %v3995 = vpop.f32.mrb[0].mxu0
        %v3996 = vadd.f32 %v3875, %v3995
        %v3997 = vpop.f32.mrb[0].mxu0
        %v3998 = vpop.f32.mrb[0].mxu0
        %v3999 = vadd.f32 %v3878, %v3998
        %v4000 = vpop.f32.mrb[0].mxu0
        %4001 = vmatprep.mubr.bf16.mxu0 %v3234
        %4002 = vmatmul.mubr.bf16.gmra.mrb[0].mxu0 %v3233
        %v4003 = vpop.f32.mrb[0].mxu0
        %v4004 = vadd.f32 %v3883, %v4003
        %v4005 = vpop.f32.mrb[0].mxu0
        %v4006 = vpop.f32.mrb[0].mxu0
        %v4007 = vadd.f32 %v3886, %v4006
        %v4008 = vpop.f32.mrb[0].mxu0
        %4009 = vmatprep.mubr.bf16.mxu0 %v3251
        %4010 = vmatmul.mubr.bf16.gmra.mrb[0].mxu0 %v3250
        %v4011 = vpop.f32.mrb[0].mxu0
        %v4012 = vadd.f32 %v3891, %v4011
        %v4013 = vpop.f32.mrb[0].mxu0
        %v4014 = vpop.f32.mrb[0].mxu0
        %v4015 = vadd.f32 %v3894, %v4014
        %v4016 = vpop.f32.mrb[0].mxu0
        %4017 = vmatprep.mubr.bf16.mxu0 %v3268
        %4018 = vmatmul.mubr.bf16.gmra.mrb[0].mxu0 %v3267
        %v4019 = vpop.f32.mrb[0].mxu0
        %v4020 = vadd.f32 %v3899, %v4019
        %v4021 = vpop.f32.mrb[0].mxu0
        %v4022 = vpop.f32.mrb[0].mxu0
        %v4023 = vadd.f32 %v3902, %v4022
        %v4024 = vpop.f32.mrb[0].mxu0
        %4025 = vmatprep.mubr.bf16.mxu0 %v3285
        %4026 = vmatmul.mubr.bf16.gmra.mrb[0].mxu0 %v3284
        %v4027 = vpop.f32.mrb[0].mxu0
        %v4028 = vadd.f32 %v3907, %v4027
        %v4029 = vpop.f32.mrb[0].mxu0
        %v4030 = vpop.f32.mrb[0].mxu0
        %v4031 = vadd.f32 %v3910, %v4030
        %v4032 = vpop.f32.mrb[0].mxu0
        %4033 = vmatprep.mubr.bf16.mxu0 %v3302
        %4034 = vmatmul.mubr.bf16.gmra.mrb[0].mxu0 %v3301
        %v4035 = vpop.f32.mrb[0].mxu0
        %v4036 = vadd.f32 %v3915, %v4035
        %v4037 = vpop.f32.mrb[0].mxu0
        %v4038 = vpop.f32.mrb[0].mxu0
        %v4039 = vadd.f32 %v3918, %v4038
        %v4040 = vpop.f32.mrb[0].mxu0
        %4041 = vmatprep.mubr.bf16.mxu0 %v3319
        %4042 = vmatmul.mubr.bf16.gmra.mrb[0].mxu0 %v3318
        %v4043 = vpop.f32.mrb[0].mxu0
        %v4044 = vadd.f32 %v3923, %v4043
        %v4045 = vpop.f32.mrb[0].mxu0
        %v4046 = vpop.f32.mrb[0].mxu0
        %v4047 = vadd.f32 %v3926, %v4046
        %v4048 = vpop.f32.mrb[0].mxu0
        %4049 = vmatprep.mubr.bf16.mxu0 %v3336
        %4050 = vmatmul.mubr.bf16.gmra.mrb[0].mxu0 %v3335
        %v4051 = vpop.f32.mrb[0].mxu0
        %v4052 = vadd.f32 %v3931, %v4051
        %v4053 = vpop.f32.mrb[0].mxu0
        %v4054 = vpop.f32.mrb[0].mxu0
        %v4055 = vadd.f32 %v3934, %v4054
        %v4056 = vpop.f32.mrb[0].mxu0
        %4057 = vmatprep.mubr.bf16.mxu0 %v3353
        %4058 = vmatmul.mubr.bf16.gmra.mrb[0].mxu0 %v3352
        %v4059 = vpop.f32.mrb[0].mxu0
        %v4060 = vadd.f32 %v3939, %v4059
        %v4061 = vpop.f32.mrb[0].mxu0
        %v4062 = vpop.f32.mrb[0].mxu0
        %v4063 = vadd.f32 %v3942, %v4062
        %v4064 = vpop.f32.mrb[0].mxu0
        %4065 = vmatprep.mubr.bf16.mxu0 %v3370
        %4066 = vmatmul.mubr.bf16.gmra.mrb[0].mxu0 %v3369
        %v4067 = vpop.f32.mrb[0].mxu0
        %v4068 = vadd.f32 %v3947, %v4067
        %v4069 = vpop.f32.mrb[0].mxu0
        %v4070 = vpop.f32.mrb[0].mxu0
        %v4071 = vadd.f32 %v3950, %v4070
        %v4072 = vpop.f32.mrb[0].mxu0
        %4073 = vdwg.mxu0
        %4074 = vmatprep.subr.bf16.mxu0 0
        %4075 = vmatpush1.bf16.msra.mxu0 %v2358
        %4076 = vmatprep.subr.bf16.mxu0 0
        %4077 = vmatpush1.bf16.msra.mxu0 %v2359
        %4078 = vmatprep.subr.bf16.mxu0 0
        %4079 = vmatpush1.bf16.msra.mxu0 %v2360
        %4080 = vmatprep.subr.bf16.mxu0 0
        %4081 = vmatpush1.bf16.msra.mxu0 %v2361
        %4082 = vmatprep.subr.bf16.mxu0 0
        %4083 = vmatpush1.bf16.msra.mxu0 %v2362
        %4084 = vmatprep.subr.bf16.mxu0 0
        %4085 = vmatpush1.bf16.msra.mxu0 %v2363
        %4086 = vmatprep.subr.bf16.mxu0 0
        %4087 = vmatpush1.bf16.msra.mxu0 %v2364
        %4088 = vmatprep.subr.bf16.mxu0 0
        %4089 = vmatpush1.bf16.msra.mxu0 %v2365
        %4090 = vmatprep.subr.bf16.mxu0 0
        %4091 = vmatpush1.bf16.msra.mxu0 %v2366
        %4092 = vmatprep.subr.bf16.mxu0 0
        %4093 = vmatpush1.bf16.msra.mxu0 %v2367
        %4094 = vmatprep.subr.bf16.mxu0 0
        %4095 = vmatpush1.bf16.msra.mxu0 %v2368
        %4096 = vmatprep.subr.bf16.mxu0 0
        %4097 = vmatpush1.bf16.msra.mxu0 %v2369
        %4098 = vmatprep.subr.bf16.mxu0 0
        %4099 = vmatpush1.bf16.msra.mxu0 %v2370
        %4100 = vmatprep.subr.bf16.mxu0 0
        %4101 = vmatpush1.bf16.msra.mxu0 %v2371
        %4102 = vmatprep.subr.bf16.mxu0 0
        %4103 = vmatpush1.bf16.msra.mxu0 %v2372
        %4104 = vmatprep.subr.bf16.mxu0 0
        %4105 = vmatpush1.bf16.msra.mxu0 %v2373
        %4106 = vmatprep.mubr.bf16.mxu0 %v3202
        %4107 = vmatmul.mubr.bf16.gmra.mrb[0].mxu0 %v3201
        %v4108 = vpop.f32.mrb[0].mxu0
        %v4109 = vadd.f32 %v3988, %v4108
        %v4110 = vpop.f32.mrb[0].mxu0
        %v4111 = vpop.f32.mrb[0].mxu0
        %v4112 = vadd.f32 %v3991, %v4111
        %v4113 = vpop.f32.mrb[0].mxu0
        %4114 = vmatprep.mubr.bf16.mxu0 %v3219
        %4115 = vmatmul.mubr.bf16.gmra.mrb[0].mxu0 %v3218
        %v4116 = vpop.f32.mrb[0].mxu0
        %v4117 = vadd.f32 %v3996, %v4116
        %v4118 = vpop.f32.mrb[0].mxu0
        %v4119 = vpop.f32.mrb[0].mxu0
        %v4120 = vadd.f32 %v3999, %v4119
        %v4121 = vpop.f32.mrb[0].mxu0
        %4122 = vmatprep.mubr.bf16.mxu0 %v3236
        %4123 = vmatmul.mubr.bf16.gmra.mrb[0].mxu0 %v3235
        %v4124 = vpop.f32.mrb[0].mxu0
        %v4125 = vadd.f32 %v4004, %v4124
        %v4126 = vpop.f32.mrb[0].mxu0
        %v4127 = vpop.f32.mrb[0].mxu0
        %v4128 = vadd.f32 %v4007, %v4127
        %v4129 = vpop.f32.mrb[0].mxu0
        %4130 = vmatprep.mubr.bf16.mxu0 %v3253
        %4131 = vmatmul.mubr.bf16.gmra.mrb[0].mxu0 %v3252
        %v4132 = vpop.f32.mrb[0].mxu0
        %v4133 = vadd.f32 %v4012, %v4132
        %v4134 = vpop.f32.mrb[0].mxu0
        %v4135 = vpop.f32.mrb[0].mxu0
        %v4136 = vadd.f32 %v4015, %v4135
        %v4137 = vpop.f32.mrb[0].mxu0
        %4138 = vmatprep.mubr.bf16.mxu0 %v3270
        %4139 = vmatmul.mubr.bf16.gmra.mrb[0].mxu0 %v3269
        %v4140 = vpop.f32.mrb[0].mxu0
        %v4141 = vadd.f32 %v4020, %v4140
        %v4142 = vpop.f32.mrb[0].mxu0
        %v4143 = vpop.f32.mrb[0].mxu0
        %v4144 = vadd.f32 %v4023, %v4143
        %v4145 = vpop.f32.mrb[0].mxu0
        %4146 = vmatprep.mubr.bf16.mxu0 %v3287
        %4147 = vmatmul.mubr.bf16.gmra.mrb[0].mxu0 %v3286
        %v4148 = vpop.f32.mrb[0].mxu0
        %v4149 = vadd.f32 %v4028, %v4148
        %v4150 = vpop.f32.mrb[0].mxu0
        %v4151 = vpop.f32.mrb[0].mxu0
        %v4152 = vadd.f32 %v4031, %v4151
        %v4153 = vpop.f32.mrb[0].mxu0
        %4154 = vmatprep.mubr.bf16.mxu0 %v3304
        %4155 = vmatmul.mubr.bf16.gmra.mrb[0].mxu0 %v3303
        %v4156 = vpop.f32.mrb[0].mxu0
        %v4157 = vadd.f32 %v4036, %v4156
        %v4158 = vpop.f32.mrb[0].mxu0
        %v4159 = vpop.f32.mrb[0].mxu0
        %v4160 = vadd.f32 %v4039, %v4159
        %v4161 = vpop.f32.mrb[0].mxu0
        %4162 = vmatprep.mubr.bf16.mxu0 %v3321
        %4163 = vmatmul.mubr.bf16.gmra.mrb[0].mxu0 %v3320
        %v4164 = vpop.f32.mrb[0].mxu0
        %v4165 = vadd.f32 %v4044, %v4164
        %v4166 = vpop.f32.mrb[0].mxu0
        %v4167 = vpop.f32.mrb[0].mxu0
        %v4168 = vadd.f32 %v4047, %v4167
        %v4169 = vpop.f32.mrb[0].mxu0
        %4170 = vmatprep.mubr.bf16.mxu0 %v3338
        %4171 = vmatmul.mubr.bf16.gmra.mrb[0].mxu0 %v3337
        %v4172 = vpop.f32.mrb[0].mxu0
        %v4173 = vadd.f32 %v4052, %v4172
        %v4174 = vpop.f32.mrb[0].mxu0
        %v4175 = vpop.f32.mrb[0].mxu0
        %v4176 = vadd.f32 %v4055, %v4175
        %v4177 = vpop.f32.mrb[0].mxu0
        %4178 = vmatprep.mubr.bf16.mxu0 %v3355
        %4179 = vmatmul.mubr.bf16.gmra.mrb[0].mxu0 %v3354
        %v4180 = vpop.f32.mrb[0].mxu0
        %v4181 = vadd.f32 %v4060, %v4180
        %v4182 = vpop.f32.mrb[0].mxu0
        %v4183 = vpop.f32.mrb[0].mxu0
        %v4184 = vadd.f32 %v4063, %v4183
        %v4185 = vpop.f32.mrb[0].mxu0
        %4186 = vmatprep.mubr.bf16.mxu0 %v3372
        %4187 = vmatmul.mubr.bf16.gmra.mrb[0].mxu0 %v3371
        %v4188 = vpop.f32.mrb[0].mxu0
        %v4189 = vadd.f32 %v4068, %v4188
        %v4190 = vpop.f32.mrb[0].mxu0
        %v4191 = vpop.f32.mrb[0].mxu0
        %v4192 = vadd.f32 %v4071, %v4191
        %v4193 = vpop.f32.mrb[0].mxu0
        %4194 = vdwg.mxu0
        %4195 = vmatprep.subr.bf16.mxu0 0
        %4196 = vmatpush1.bf16.msra.mxu0 %v2374
        %4197 = vmatprep.subr.bf16.mxu0 0
        %4198 = vmatpush1.bf16.msra.mxu0 %v2375
        %4199 = vmatprep.subr.bf16.mxu0 0
        %4200 = vmatpush1.bf16.msra.mxu0 %v2376
        %4201 = vmatprep.subr.bf16.mxu0 0
        %4202 = vmatpush1.bf16.msra.mxu0 %v2377
        %4203 = vmatprep.subr.bf16.mxu0 0
        %4204 = vmatpush1.bf16.msra.mxu0 %v2378
        %4205 = vmatprep.subr.bf16.mxu0 0
        %4206 = vmatpush1.bf16.msra.mxu0 %v2379
        %4207 = vmatprep.subr.bf16.mxu0 0
        %4208 = vmatpush1.bf16.msra.mxu0 %v2380
        %4209 = vmatprep.subr.bf16.mxu0 0
        %4210 = vmatpush1.bf16.msra.mxu0 %v2381
        %4211 = vmatprep.subr.bf16.mxu0 0
        %4212 = vmatpush1.bf16.msra.mxu0 %v2382
        %4213 = vmatprep.subr.bf16.mxu0 0
        %4214 = vmatpush1.bf16.msra.mxu0 %v2383
        %4215 = vmatprep.subr.bf16.mxu0 0
        %4216 = vmatpush1.bf16.msra.mxu0 %v2384
        %4217 = vmatprep.subr.bf16.mxu0 0
        %4218 = vmatpush1.bf16.msra.mxu0 %v2385
        %4219 = vmatprep.subr.bf16.mxu0 0
        %4220 = vmatpush1.bf16.msra.mxu0 %v2386
        %4221 = vmatprep.subr.bf16.mxu0 0
        %4222 = vmatpush1.bf16.msra.mxu0 %v2387
        %4223 = vmatprep.subr.bf16.mxu0 0
        %4224 = vmatpush1.bf16.msra.mxu0 %v2388
        %4225 = vmatprep.subr.bf16.mxu0 0
        %4226 = vmatpush1.bf16.msra.mxu0 %v2389
        %4227 = vmatprep.mubr.bf16.mxu0 %v3204
        %4228 = vmatmul.mubr.bf16.gmra.mrb[0].mxu0 %v3203
        %v4229 = vpop.f32.mrb[0].mxu0
        %v4230 = vadd.f32 %v4109, %v4229
        %v4231 = vpop.f32.mrb[0].mxu0
        %v4232 = vpop.f32.mrb[0].mxu0
        %v4233 = vadd.f32 %v4112, %v4232
        %v4234 = vpop.f32.mrb[0].mxu0
        %4235 = vmatprep.mubr.bf16.mxu0 %v3221
        %4236 = vmatmul.mubr.bf16.gmra.mrb[0].mxu0 %v3220
        %v4237 = vpop.f32.mrb[0].mxu0
        %v4238 = vadd.f32 %v4117, %v4237
        %v4239 = vpop.f32.mrb[0].mxu0
        %v4240 = vpop.f32.mrb[0].mxu0
        %v4241 = vadd.f32 %v4120, %v4240
        %v4242 = vpop.f32.mrb[0].mxu0
        %4243 = vmatprep.mubr.bf16.mxu0 %v3238
        %4244 = vmatmul.mubr.bf16.gmra.mrb[0].mxu0 %v3237
        %v4245 = vpop.f32.mrb[0].mxu0
        %v4246 = vadd.f32 %v4125, %v4245
        %v4247 = vpop.f32.mrb[0].mxu0
        %v4248 = vpop.f32.mrb[0].mxu0
        %v4249 = vadd.f32 %v4128, %v4248
        %v4250 = vpop.f32.mrb[0].mxu0
        %4251 = vmatprep.mubr.bf16.mxu0 %v3255
        %4252 = vmatmul.mubr.bf16.gmra.mrb[0].mxu0 %v3254
        %v4253 = vpop.f32.mrb[0].mxu0
        %v4254 = vadd.f32 %v4133, %v4253
        %v4255 = vpop.f32.mrb[0].mxu0
        %v4256 = vpop.f32.mrb[0].mxu0
        %v4257 = vadd.f32 %v4136, %v4256
        %v4258 = vpop.f32.mrb[0].mxu0
        %4259 = vmatprep.mubr.bf16.mxu0 %v3272
        %4260 = vmatmul.mubr.bf16.gmra.mrb[0].mxu0 %v3271
        %v4261 = vpop.f32.mrb[0].mxu0
        %v4262 = vadd.f32 %v4141, %v4261
        %v4263 = vpop.f32.mrb[0].mxu0
        %v4264 = vpop.f32.mrb[0].mxu0
        %v4265 = vadd.f32 %v4144, %v4264
        %v4266 = vpop.f32.mrb[0].mxu0
        %4267 = vmatprep.mubr.bf16.mxu0 %v3289
        %4268 = vmatmul.mubr.bf16.gmra.mrb[0].mxu0 %v3288
        %v4269 = vpop.f32.mrb[0].mxu0
        %v4270 = vadd.f32 %v4149, %v4269
        %v4271 = vpop.f32.mrb[0].mxu0
        %v4272 = vpop.f32.mrb[0].mxu0
        %v4273 = vadd.f32 %v4152, %v4272
        %v4274 = vpop.f32.mrb[0].mxu0
        %4275 = vmatprep.mubr.bf16.mxu0 %v3306
        %4276 = vmatmul.mubr.bf16.gmra.mrb[0].mxu0 %v3305
        %v4277 = vpop.f32.mrb[0].mxu0
        %v4278 = vadd.f32 %v4157, %v4277
        %v4279 = vpop.f32.mrb[0].mxu0
        %v4280 = vpop.f32.mrb[0].mxu0
        %v4281 = vadd.f32 %v4160, %v4280
        %v4282 = vpop.f32.mrb[0].mxu0
        %4283 = vmatprep.mubr.bf16.mxu0 %v3323
        %4284 = vmatmul.mubr.bf16.gmra.mrb[0].mxu0 %v3322
        %v4285 = vpop.f32.mrb[0].mxu0
        %v4286 = vadd.f32 %v4165, %v4285
        %v4287 = vpop.f32.mrb[0].mxu0
        %v4288 = vpop.f32.mrb[0].mxu0
        %v4289 = vadd.f32 %v4168, %v4288
        %v4290 = vpop.f32.mrb[0].mxu0
        %4291 = vmatprep.mubr.bf16.mxu0 %v3340
        %4292 = vmatmul.mubr.bf16.gmra.mrb[0].mxu0 %v3339
        %v4293 = vpop.f32.mrb[0].mxu0
        %v4294 = vadd.f32 %v4173, %v4293
        %v4295 = vpop.f32.mrb[0].mxu0
        %v4296 = vpop.f32.mrb[0].mxu0
        %v4297 = vadd.f32 %v4176, %v4296
        %v4298 = vpop.f32.mrb[0].mxu0
        %4299 = vmatprep.mubr.bf16.mxu0 %v3357
        %4300 = vmatmul.mubr.bf16.gmra.mrb[0].mxu0 %v3356
        %v4301 = vpop.f32.mrb[0].mxu0
        %v4302 = vadd.f32 %v4181, %v4301
        %v4303 = vpop.f32.mrb[0].mxu0
        %v4304 = vpop.f32.mrb[0].mxu0
        %v4305 = vadd.f32 %v4184, %v4304
        %v4306 = vpop.f32.mrb[0].mxu0
        %4307 = vmatprep.mubr.bf16.mxu0 %v3374
        %4308 = vmatmul.mubr.bf16.gmra.mrb[0].mxu0 %v3373
        %v4309 = vpop.f32.mrb[0].mxu0
        %v4310 = vadd.f32 %v4189, %v4309
        %v4311 = vpop.f32.mrb[0].mxu0
        %v4312 = vpop.f32.mrb[0].mxu0
        %v4313 = vadd.f32 %v4192, %v4312
        %v4314 = vpop.f32.mrb[0].mxu0
        %4315 = vdwg.mxu0
        %4316 = vmatprep.subr.bf16.mxu0 0
        %4317 = vmatpush1.bf16.msra.mxu0 %v2390
        %4318 = vmatprep.subr.bf16.mxu0 0
        %4319 = vmatpush1.bf16.msra.mxu0 %v2391
        %4320 = vmatprep.subr.bf16.mxu0 0
        %4321 = vmatpush1.bf16.msra.mxu0 %v2392
        %4322 = vmatprep.subr.bf16.mxu0 0
        %4323 = vmatpush1.bf16.msra.mxu0 %v2393
        %4324 = vmatprep.subr.bf16.mxu0 0
        %4325 = vmatpush1.bf16.msra.mxu0 %v2394
        %4326 = vmatprep.subr.bf16.mxu0 0
        %4327 = vmatpush1.bf16.msra.mxu0 %v2395
        %4328 = vmatprep.subr.bf16.mxu0 0
        %4329 = vmatpush1.bf16.msra.mxu0 %v2396
        %4330 = vmatprep.subr.bf16.mxu0 0
        %4331 = vmatpush1.bf16.msra.mxu0 %v2397
        %4332 = vmatprep.subr.bf16.mxu0 0
        %4333 = vmatpush1.bf16.msra.mxu0 %v2398
        %4334 = vmatprep.subr.bf16.mxu0 0
        %4335 = vmatpush1.bf16.msra.mxu0 %v2399
        %4336 = vmatprep.subr.bf16.mxu0 0
        %4337 = vmatpush1.bf16.msra.mxu0 %v2400
        %4338 = vmatprep.subr.bf16.mxu0 0
        %4339 = vmatpush1.bf16.msra.mxu0 %v2401
        %4340 = vmatprep.subr.bf16.mxu0 0
        %4341 = vmatpush1.bf16.msra.mxu0 %v2402
        %4342 = vmatprep.subr.bf16.mxu0 0
        %4343 = vmatpush1.bf16.msra.mxu0 %v2403
        %4344 = vmatprep.subr.bf16.mxu0 0
        %4345 = vmatpush1.bf16.msra.mxu0 %v2404
        %4346 = vmatprep.subr.bf16.mxu0 0
        %4347 = vmatpush1.bf16.msra.mxu0 %v2405
        %4348 = vmatprep.mubr.bf16.mxu0 %v3206
        %4349 = vmatmul.mubr.bf16.gmra.mrb[0].mxu0 %v3205
        %v4350 = vpop.f32.mrb[0].mxu0
        %v4351 = vadd.f32 %v4230, %v4350
        %v4352 = vpop.f32.mrb[0].mxu0
        %v4353 = vpop.f32.mrb[0].mxu0
        %v4354 = vadd.f32 %v4233, %v4353
        %v4355 = vpop.f32.mrb[0].mxu0
        %4356 = vmatprep.mubr.bf16.mxu0 %v3223
        %4357 = vmatmul.mubr.bf16.gmra.mrb[0].mxu0 %v3222
        %v4358 = vpop.f32.mrb[0].mxu0
        %v4359 = vadd.f32 %v4238, %v4358
        %v4360 = vpop.f32.mrb[0].mxu0
        %v4361 = vpop.f32.mrb[0].mxu0
        %v4362 = vadd.f32 %v4241, %v4361
        %v4363 = vpop.f32.mrb[0].mxu0
        %4364 = vmatprep.mubr.bf16.mxu0 %v3240
        %4365 = vmatmul.mubr.bf16.gmra.mrb[0].mxu0 %v3239
        %v4366 = vpop.f32.mrb[0].mxu0
        %v4367 = vadd.f32 %v4246, %v4366
        %v4368 = vpop.f32.mrb[0].mxu0
        %v4369 = vpop.f32.mrb[0].mxu0
        %v4370 = vadd.f32 %v4249, %v4369
        %v4371 = vpop.f32.mrb[0].mxu0
        %4372 = vmatprep.mubr.bf16.mxu0 %v3257
        %4373 = vmatmul.mubr.bf16.gmra.mrb[0].mxu0 %v3256
        %v4374 = vpop.f32.mrb[0].mxu0
        %v4375 = vadd.f32 %v4254, %v4374
        %v4376 = vpop.f32.mrb[0].mxu0
        %v4377 = vpop.f32.mrb[0].mxu0
        %v4378 = vadd.f32 %v4257, %v4377
        %v4379 = vpop.f32.mrb[0].mxu0
        %4380 = vmatprep.mubr.bf16.mxu0 %v3274
        %4381 = vmatmul.mubr.bf16.gmra.mrb[0].mxu0 %v3273
        %v4382 = vpop.f32.mrb[0].mxu0
        %v4383 = vadd.f32 %v4262, %v4382
        %v4384 = vpop.f32.mrb[0].mxu0
        %v4385 = vpop.f32.mrb[0].mxu0
        %v4386 = vadd.f32 %v4265, %v4385
        %v4387 = vpop.f32.mrb[0].mxu0
        %4388 = vmatprep.mubr.bf16.mxu0 %v3291
        %4389 = vmatmul.mubr.bf16.gmra.mrb[0].mxu0 %v3290
        %v4390 = vpop.f32.mrb[0].mxu0
        %v4391 = vadd.f32 %v4270, %v4390
        %v4392 = vpop.f32.mrb[0].mxu0
        %v4393 = vpop.f32.mrb[0].mxu0
        %v4394 = vadd.f32 %v4273, %v4393
        %v4395 = vpop.f32.mrb[0].mxu0
        %4396 = vmatprep.mubr.bf16.mxu0 %v3308
        %4397 = vmatmul.mubr.bf16.gmra.mrb[0].mxu0 %v3307
        %v4398 = vpop.f32.mrb[0].mxu0
        %v4399 = vadd.f32 %v4278, %v4398
        %v4400 = vpop.f32.mrb[0].mxu0
        %v4401 = vpop.f32.mrb[0].mxu0
        %v4402 = vadd.f32 %v4281, %v4401
        %v4403 = vpop.f32.mrb[0].mxu0
        %4404 = vmatprep.mubr.bf16.mxu0 %v3325
        %4405 = vmatmul.mubr.bf16.gmra.mrb[0].mxu0 %v3324
        %v4406 = vpop.f32.mrb[0].mxu0
        %v4407 = vadd.f32 %v4286, %v4406
        %v4408 = vpop.f32.mrb[0].mxu0
        %v4409 = vpop.f32.mrb[0].mxu0
        %v4410 = vadd.f32 %v4289, %v4409
        %v4411 = vpop.f32.mrb[0].mxu0
        %4412 = vmatprep.mubr.bf16.mxu0 %v3342
        %4413 = vmatmul.mubr.bf16.gmra.mrb[0].mxu0 %v3341
        %v4414 = vpop.f32.mrb[0].mxu0
        %v4415 = vadd.f32 %v4294, %v4414
        %v4416 = vpop.f32.mrb[0].mxu0
        %v4417 = vpop.f32.mrb[0].mxu0
        %v4418 = vadd.f32 %v4297, %v4417
        %v4419 = vpop.f32.mrb[0].mxu0
        %4420 = vmatprep.mubr.bf16.mxu0 %v3359
        %4421 = vmatmul.mubr.bf16.gmra.mrb[0].mxu0 %v3358
        %v4422 = vpop.f32.mrb[0].mxu0
        %v4423 = vadd.f32 %v4302, %v4422
        %v4424 = vpop.f32.mrb[0].mxu0
        %v4425 = vpop.f32.mrb[0].mxu0
        %v4426 = vadd.f32 %v4305, %v4425
        %v4427 = vpop.f32.mrb[0].mxu0
        %4428 = vmatprep.mubr.bf16.mxu0 %v3376
        %4429 = vmatmul.mubr.bf16.gmra.mrb[0].mxu0 %v3375
        %v4430 = vpop.f32.mrb[0].mxu0
        %v4431 = vadd.f32 %v4310, %v4430
        %v4432 = vpop.f32.mrb[0].mxu0
        %v4433 = vpop.f32.mrb[0].mxu0
        %v4434 = vadd.f32 %v4313, %v4433
        %v4435 = vpop.f32.mrb[0].mxu0
        %4436 = vdwg.mxu0
        %4437 = vmatprep.subr.bf16.mxu0 0
        %4438 = vmatpush1.bf16.msra.mxu0 %v2406
        %4439 = vmatprep.subr.bf16.mxu0 0
        %4440 = vmatpush1.bf16.msra.mxu0 %v2407
        %4441 = vmatprep.subr.bf16.mxu0 0
        %4442 = vmatpush1.bf16.msra.mxu0 %v2408
        %4443 = vmatprep.subr.bf16.mxu0 0
        %4444 = vmatpush1.bf16.msra.mxu0 %v2409
        %4445 = vmatprep.subr.bf16.mxu0 0
        %4446 = vmatpush1.bf16.msra.mxu0 %v2410
        %4447 = vmatprep.subr.bf16.mxu0 0
        %4448 = vmatpush1.bf16.msra.mxu0 %v2411
        %4449 = vmatprep.subr.bf16.mxu0 0
        %4450 = vmatpush1.bf16.msra.mxu0 %v2412
        %4451 = vmatprep.subr.bf16.mxu0 0
        %4452 = vmatpush1.bf16.msra.mxu0 %v2413
        %4453 = vmatprep.subr.bf16.mxu0 0
        %4454 = vmatpush1.bf16.msra.mxu0 %v2414
        %4455 = vmatprep.subr.bf16.mxu0 0
        %4456 = vmatpush1.bf16.msra.mxu0 %v2415
        %4457 = vmatprep.subr.bf16.mxu0 0
        %4458 = vmatpush1.bf16.msra.mxu0 %v2416
        %4459 = vmatprep.subr.bf16.mxu0 0
        %4460 = vmatpush1.bf16.msra.mxu0 %v2417
        %4461 = vmatprep.subr.bf16.mxu0 0
        %4462 = vmatpush1.bf16.msra.mxu0 %v2418
        %4463 = vmatprep.subr.bf16.mxu0 0
        %4464 = vmatpush1.bf16.msra.mxu0 %v2419
        %4465 = vmatprep.subr.bf16.mxu0 0
        %4466 = vmatpush1.bf16.msra.mxu0 %v2420
        %4467 = vmatprep.subr.bf16.mxu0 0
        %4468 = vmatpush1.bf16.msra.mxu0 %v2421
        %4469 = vmatprep.mubr.bf16.mxu0 %v3208
        %4470 = vmatmul.mubr.bf16.gmra.mrb[0].mxu0 %v3207
        %v4471 = vpop.f32.mrb[0].mxu0
        %v4472 = vadd.f32 %v4351, %v4471
        %v4473 = vpop.f32.mrb[0].mxu0
        %v4474 = vpop.f32.mrb[0].mxu0
        %v4475 = vadd.f32 %v4354, %v4474
        %v4476 = vpop.f32.mrb[0].mxu0
        %4477 = vmatprep.mubr.bf16.mxu0 %v3225
        %4478 = vmatmul.mubr.bf16.gmra.mrb[0].mxu0 %v3224
        %v4479 = vpop.f32.mrb[0].mxu0
        %v4480 = vadd.f32 %v4359, %v4479
        %v4481 = vpop.f32.mrb[0].mxu0
        %v4482 = vpop.f32.mrb[0].mxu0
        %v4483 = vadd.f32 %v4362, %v4482
        %v4484 = vpop.f32.mrb[0].mxu0
        %4485 = vmatprep.mubr.bf16.mxu0 %v3242
        %4486 = vmatmul.mubr.bf16.gmra.mrb[0].mxu0 %v3241
        %v4487 = vpop.f32.mrb[0].mxu0
        %v4488 = vadd.f32 %v4367, %v4487
        %v4489 = vpop.f32.mrb[0].mxu0
        %v4490 = vpop.f32.mrb[0].mxu0
        %v4491 = vadd.f32 %v4370, %v4490
        %v4492 = vpop.f32.mrb[0].mxu0
        %4493 = vmatprep.mubr.bf16.mxu0 %v3259
        %4494 = vmatmul.mubr.bf16.gmra.mrb[0].mxu0 %v3258
        %v4495 = vpop.f32.mrb[0].mxu0
        %v4496 = vadd.f32 %v4375, %v4495
        %v4497 = vpop.f32.mrb[0].mxu0
        %v4498 = vpop.f32.mrb[0].mxu0
        %v4499 = vadd.f32 %v4378, %v4498
        %v4500 = vpop.f32.mrb[0].mxu0
        %4501 = vmatprep.mubr.bf16.mxu0 %v3276
        %4502 = vmatmul.mubr.bf16.gmra.mrb[0].mxu0 %v3275
        %v4503 = vpop.f32.mrb[0].mxu0
        %v4504 = vadd.f32 %v4383, %v4503
        %v4505 = vpop.f32.mrb[0].mxu0
        %v4506 = vpop.f32.mrb[0].mxu0
        %v4507 = vadd.f32 %v4386, %v4506
        %v4508 = vpop.f32.mrb[0].mxu0
        %4509 = vmatprep.mubr.bf16.mxu0 %v3293
        %4510 = vmatmul.mubr.bf16.gmra.mrb[0].mxu0 %v3292
        %v4511 = vpop.f32.mrb[0].mxu0
        %v4512 = vadd.f32 %v4391, %v4511
        %v4513 = vpop.f32.mrb[0].mxu0
        %v4514 = vpop.f32.mrb[0].mxu0
        %v4515 = vadd.f32 %v4394, %v4514
        %v4516 = vpop.f32.mrb[0].mxu0
        %4517 = vmatprep.mubr.bf16.mxu0 %v3310
        %4518 = vmatmul.mubr.bf16.gmra.mrb[0].mxu0 %v3309
        %v4519 = vpop.f32.mrb[0].mxu0
        %v4520 = vadd.f32 %v4399, %v4519
        %v4521 = vpop.f32.mrb[0].mxu0
        %v4522 = vpop.f32.mrb[0].mxu0
        %v4523 = vadd.f32 %v4402, %v4522
        %v4524 = vpop.f32.mrb[0].mxu0
        %4525 = vmatprep.mubr.bf16.mxu0 %v3327
        %4526 = vmatmul.mubr.bf16.gmra.mrb[0].mxu0 %v3326
        %v4527 = vpop.f32.mrb[0].mxu0
        %v4528 = vadd.f32 %v4407, %v4527
        %v4529 = vpop.f32.mrb[0].mxu0
        %v4530 = vpop.f32.mrb[0].mxu0
        %v4531 = vadd.f32 %v4410, %v4530
        %v4532 = vpop.f32.mrb[0].mxu0
        %4533 = vmatprep.mubr.bf16.mxu0 %v3344
        %4534 = vmatmul.mubr.bf16.gmra.mrb[0].mxu0 %v3343
        %v4535 = vpop.f32.mrb[0].mxu0
        %v4536 = vadd.f32 %v4415, %v4535
        %v4537 = vpop.f32.mrb[0].mxu0
        %v4538 = vpop.f32.mrb[0].mxu0
        %v4539 = vadd.f32 %v4418, %v4538
        %v4540 = vpop.f32.mrb[0].mxu0
        %4541 = vmatprep.mubr.bf16.mxu0 %v3361
        %4542 = vmatmul.mubr.bf16.gmra.mrb[0].mxu0 %v3360
        %v4543 = vpop.f32.mrb[0].mxu0
        %v4544 = vadd.f32 %v4423, %v4543
        %v4545 = vpop.f32.mrb[0].mxu0
        %v4546 = vpop.f32.mrb[0].mxu0
        %v4547 = vadd.f32 %v4426, %v4546
        %v4548 = vpop.f32.mrb[0].mxu0
        %4549 = vmatprep.mubr.bf16.mxu0 %v3378
        %4550 = vmatmul.mubr.bf16.gmra.mrb[0].mxu0 %v3377
        %v4551 = vpop.f32.mrb[0].mxu0
        %v4552 = vadd.f32 %v4431, %v4551
        %v4553 = vpop.f32.mrb[0].mxu0
        %v4554 = vpop.f32.mrb[0].mxu0
        %v4555 = vadd.f32 %v4434, %v4554
        %v4556 = vpop.f32.mrb[0].mxu0
        %4557 = vdwg.mxu0
        %4558 = vmatprep.subr.bf16.mxu0 0
        %4559 = vmatpush1.bf16.msra.mxu0 %v2422
        %4560 = vmatprep.subr.bf16.mxu0 0
        %4561 = vmatpush1.bf16.msra.mxu0 0
        %4562 = vmatprep.subr.bf16.mxu0 0
        %4563 = vmatpush1.bf16.msra.mxu0 0
        %4564 = vmatprep.subr.bf16.mxu0 0
        %4565 = vmatpush1.bf16.msra.mxu0 0
        %4566 = vmatprep.subr.bf16.mxu0 0
        %4567 = vmatpush1.bf16.msra.mxu0 0
        %4568 = vmatprep.subr.bf16.mxu0 0
        %4569 = vmatpush1.bf16.msra.mxu0 0
        %4570 = vmatprep.subr.bf16.mxu0 0
        %4571 = vmatpush1.bf16.msra.mxu0 0
        %4572 = vmatprep.subr.bf16.mxu0 0
        %4573 = vmatpush1.bf16.msra.mxu0 0
        %4574 = vmatprep.subr.bf16.mxu0 0
        %4575 = vmatpush1.bf16.msra.mxu0 0
        %4576 = vmatprep.subr.bf16.mxu0 0
        %4577 = vmatpush1.bf16.msra.mxu0 0
        %4578 = vmatprep.subr.bf16.mxu0 0
        %4579 = vmatpush1.bf16.msra.mxu0 0
        %4580 = vmatprep.subr.bf16.mxu0 0
        %4581 = vmatpush1.bf16.msra.mxu0 0
        %4582 = vmatprep.subr.bf16.mxu0 0
        %4583 = vmatpush1.bf16.msra.mxu0 0
        %4584 = vmatprep.subr.bf16.mxu0 0
        %4585 = vmatpush1.bf16.msra.mxu0 0
        %4586 = vmatprep.subr.bf16.mxu0 0
        %4587 = vmatpush1.bf16.msra.mxu0 0
        %4588 = vmatprep.subr.bf16.mxu0 0
        %4589 = vmatpush1.bf16.msra.mxu0 0
        %4590 = vmatprep.mubr.bf16.mxu0 0
        %4591 = vmatmul.mubr.bf16.gmra.mrb[0].mxu0 %v3558
        %v4592 = vpop.f32.mrb[0].mxu0
        %v4593 = vadd.f32 %v4472, %v4592
        %v4594 = vpop.f32.mrb[0].mxu0
        %v4595 = vpop.f32.mrb[0].mxu0
        %v4596 = vadd.f32 %v4475, %v4595
        %v4597 = vpop.f32.mrb[0].mxu0
        %4598 = vmatprep.mubr.bf16.mxu0 0
        %4599 = vmatmul.mubr.bf16.gmra.mrb[0].mxu0 %v3561
        %v4600 = vpop.f32.mrb[0].mxu0
        %v4601 = vadd.f32 %v4480, %v4600
        %v4602 = vpop.f32.mrb[0].mxu0
        %v4603 = vpop.f32.mrb[0].mxu0
        %v4604 = vadd.f32 %v4483, %v4603
        %v4605 = vpop.f32.mrb[0].mxu0
        %4606 = vmatprep.mubr.bf16.mxu0 0
        %4607 = vmatmul.mubr.bf16.gmra.mrb[0].mxu0 %v3564
        %v4608 = vpop.f32.mrb[0].mxu0
        %v4609 = vadd.f32 %v4488, %v4608
        %v4610 = vpop.f32.mrb[0].mxu0
        %v4611 = vpop.f32.mrb[0].mxu0
        %v4612 = vadd.f32 %v4491, %v4611
        %v4613 = vpop.f32.mrb[0].mxu0
        %4614 = vmatprep.mubr.bf16.mxu0 0
        %4615 = vmatmul.mubr.bf16.gmra.mrb[0].mxu0 %v3567
        %v4616 = vpop.f32.mrb[0].mxu0
        %v4617 = vadd.f32 %v4496, %v4616
        %v4618 = vpop.f32.mrb[0].mxu0
        %v4619 = vpop.f32.mrb[0].mxu0
        %v4620 = vadd.f32 %v4499, %v4619
        %v4621 = vpop.f32.mrb[0].mxu0
        %4622 = vmatprep.mubr.bf16.mxu0 0
        %4623 = vmatmul.mubr.bf16.gmra.mrb[0].mxu0 %v3570
        %v4624 = vpop.f32.mrb[0].mxu0
        %v4625 = vadd.f32 %v4504, %v4624
        %v4626 = vpop.f32.mrb[0].mxu0
        %v4627 = vpop.f32.mrb[0].mxu0
        %v4628 = vadd.f32 %v4507, %v4627
        %v4629 = vpop.f32.mrb[0].mxu0
        %4630 = vmatprep.mubr.bf16.mxu0 0
        %4631 = vmatmul.mubr.bf16.gmra.mrb[0].mxu0 %v3573
        %v4632 = vpop.f32.mrb[0].mxu0
        %v4633 = vadd.f32 %v4512, %v4632
        %v4634 = vpop.f32.mrb[0].mxu0
        %v4635 = vpop.f32.mrb[0].mxu0
        %v4636 = vadd.f32 %v4515, %v4635
        %v4637 = vpop.f32.mrb[0].mxu0
        %4638 = vmatprep.mubr.bf16.mxu0 0
        %4639 = vmatmul.mubr.bf16.gmra.mrb[0].mxu0 %v3576
        %v4640 = vpop.f32.mrb[0].mxu0
        %v4641 = vadd.f32 %v4520, %v4640
        %v4642 = vpop.f32.mrb[0].mxu0
        %v4643 = vpop.f32.mrb[0].mxu0
        %v4644 = vadd.f32 %v4523, %v4643
        %v4645 = vpop.f32.mrb[0].mxu0
        %4646 = vmatprep.mubr.bf16.mxu0 0
        %4647 = vmatmul.mubr.bf16.gmra.mrb[0].mxu0 %v3579
        %v4648 = vpop.f32.mrb[0].mxu0
        %v4649 = vadd.f32 %v4528, %v4648
        %v4650 = vpop.f32.mrb[0].mxu0
        %v4651 = vpop.f32.mrb[0].mxu0
        %v4652 = vadd.f32 %v4531, %v4651
        %v4653 = vpop.f32.mrb[0].mxu0
        %4654 = vmatprep.mubr.bf16.mxu0 0
        %4655 = vmatmul.mubr.bf16.gmra.mrb[0].mxu0 %v3582
        %v4656 = vpop.f32.mrb[0].mxu0
        %v4657 = vadd.f32 %v4536, %v4656
        %v4658 = vpop.f32.mrb[0].mxu0
        %v4659 = vpop.f32.mrb[0].mxu0
        %v4660 = vadd.f32 %v4539, %v4659
        %v4661 = vpop.f32.mrb[0].mxu0
        %4662 = vmatprep.mubr.bf16.mxu0 0
        %4663 = vmatmul.mubr.bf16.gmra.mrb[0].mxu0 %v3585
        %v4664 = vpop.f32.mrb[0].mxu0
        %v4665 = vadd.f32 %v4544, %v4664
        %v4666 = vpop.f32.mrb[0].mxu0
        %v4667 = vpop.f32.mrb[0].mxu0
        %v4668 = vadd.f32 %v4547, %v4667
        %v4669 = vpop.f32.mrb[0].mxu0
        %4670 = vmatprep.mubr.bf16.mxu0 0
        %4671 = vmatmul.mubr.bf16.gmra.mrb[0].mxu0 %v3588
        %v4672 = vpop.f32.mrb[0].mxu0
        %v4673 = vadd.f32 %v4552, %v4672
        %v4674 = vpop.f32.mrb[0].mxu0
        %v4675 = vpop.f32.mrb[0].mxu0
        %v4676 = vadd.f32 %v4555, %v4675
        %v4677 = vpop.f32.mrb[0].mxu0
        %4678 = vdwg.mxu0
        %vm4679 = vcmask 400384
        %4680 = vst.msk [vmem:[%s206] sm:$0xff] %vm4679, %v4593
        %4681 = vst.msk [vmem:[%s206 + $0x8] sm:$0xff] %vm4679, %v4596
        %4682 = vst.msk [vmem:[%s206 + $0x10] sm:$0xff] %vm4679, %v4601
        %4683 = vst.msk [vmem:[%s206 + $0x18] sm:$0xff] %vm4679, %v4604
        %4684 = vst.msk [vmem:[%s206 + $0x20] sm:$0xff] %vm4679, %v4609
        %4685 = vst.msk [vmem:[%s206 + $0x28] sm:$0xff] %vm4679, %v4612
        %4686 = vst.msk [vmem:[%s206 + $0x30] sm:$0xff] %vm4679, %v4617
        %4687 = vst.msk [vmem:[%s206 + $0x38] sm:$0xff] %vm4679, %v4620
        %4688 = vst.msk [vmem:[%s206 + $0x40] sm:$0xff] %vm4679, %v4625
        %4689 = vst.msk [vmem:[%s206 + $0x48] sm:$0xff] %vm4679, %v4628
        %4690 = vst.msk [vmem:[%s206 + $0x50] sm:$0xff] %vm4679, %v4633
        %4691 = vst.msk [vmem:[%s206 + $0x58] sm:$0xff] %vm4679, %v4636
        %4692 = vst.msk [vmem:[%s206 + $0x60] sm:$0xff] %vm4679, %v4641
        %4693 = vst.msk [vmem:[%s206 + $0x68] sm:$0xff] %vm4679, %v4644
        %4694 = vst.msk [vmem:[%s206 + $0x70] sm:$0xff] %vm4679, %v4649
        %4695 = vst.msk [vmem:[%s206 + $0x78] sm:$0xff] %vm4679, %v4652
        %4696 = vst.msk [vmem:[%s206 + $0x80] sm:$0xff] %vm4679, %v4657
        %4697 = vst.msk [vmem:[%s206 + $0x88] sm:$0xff] %vm4679, %v4660
        %4698 = vst.msk [vmem:[%s206 + $0x90] sm:$0xff] %vm4679, %v4665
        %4699 = vst.msk [vmem:[%s206 + $0x98] sm:$0xff] %vm4679, %v4668
        %4700 = vst.msk [vmem:[%s206 + $0xa0] sm:$0xff] %vm4679, %v4673
        %4701 = vst.msk [vmem:[%s206 + $0xa8] sm:$0xff] %vm4679, %v4676
        %s4702 = sand.u32 %s114, 1
        %s4703 = sand.u32 %s114, 1
        %s4704 = smul.addr %s4703, 176
        %s4705 = scalar_lea.vmem [#allocation2], %s4704
        // Predicated region
        $region33: #{mul_conv1x1.1} parent=31 // pred_check
          %p4706 = pneg %p124
        $region34: #{mul_conv1x1.1} parent=31 // pred_check_branch
          %4708 = sbr.rel (%p4706) target = $region36
        $region35: #{mul_conv1x1.1} parent=31 // pred_region
          %s4709 = smul.u32 22, %s19
          %s4710 = ssub.s32 43, %s4709
          %p4711 = scmp.lt.s32.totalorder %s4710, 22
          %s4712 = scalar_select %p4711, %s4710, 22
          %s4713 = smul.u32 128, %s4712
          %p4714 = scmp.ne.s32.totalorder 0, %s4713
          %s4715 = smul.addr %s18, 43
          %s4716 = sadd.s32 %s4709, %s4715
          %s4717 = smul.addr %s4716, 8
          %s4718 = scalar_lea.vmem %s3, %s4717
          // Predicated region
          $region37: #{mul_conv1x1.1} parent=35 // pred_check
            %p4719 = pneg %p4714
          $region38: #{mul_conv1x1.1} parent=35 // pred_check_branch
            %4721 = sbr.rel (%p4719) target = $region40
          $region39: #{mul_conv1x1.1} parent=35 // pred_region
            // Predicated region
            $region41: #{mul_conv1x1.1} parent=39 // pred_check
              _
            $region42: #{mul_conv1x1.1} parent=39 // pred_check_branch
              %4723 = sbr.rel (0) target = $region44
            $region43: #{mul_conv1x1.1} parent=39 // pred_region
              // Predicated region
              $region63: #{mul_conv1x1.1} parent=43 // pred_check
                _
              $region64: #{mul_conv1x1.1} parent=43 // pred_check_branch
                %4815 = sbr.rel (0) target = $region66
              $region65: #{mul_conv1x1.1} parent=43 // pred_region
                %s4816 = sdiv.u32.pop %s4712, 22
                %s4817 = srem.u32.pop %s4712, 22
                // While loop
                $region67: #{mul_conv1x1.1} parent=65 // loop_pre_header
                  _
                $region68: #{mul_conv1x1.1} parent=65 // loop_header
                  %s4819 = sphi 0, %s4821
                  %p4820 = scmp.ge.s32.totalorder %s4819, %s4816
                  %s4824 = sphi 0, %s4873
                  %s4825 = sphi %s4705, %s4876
                  %s4826 = sphi %s4718, %s4877
                $region69: #{mul_conv1x1.1} parent=65 // loop_header_branch
                  %4823 = sbr.rel (%p4820) target = $region73
                $region70: #{mul_conv1x1.1} parent=65 // loop_body
                  %v4827 = vld [vmem:[%s4825] sm:$0xff]
                  %4828 = vst [vmem:[%s4826] sm:$0xff] %v4827
                  %v4829 = vld [vmem:[%s4825 + $0x8] sm:$0xff]
                  %4830 = vst [vmem:[%s4826 + $0x8] sm:$0xff] %v4829
                  %v4831 = vld [vmem:[%s4825 + $0x10] sm:$0xff]
                  %4832 = vst [vmem:[%s4826 + $0x10] sm:$0xff] %v4831
                  %v4833 = vld [vmem:[%s4825 + $0x18] sm:$0xff]
                  %4834 = vst [vmem:[%s4826 + $0x18] sm:$0xff] %v4833
                  %v4835 = vld [vmem:[%s4825 + $0x20] sm:$0xff]
                  %4836 = vst [vmem:[%s4826 + $0x20] sm:$0xff] %v4835
                  %v4837 = vld [vmem:[%s4825 + $0x28] sm:$0xff]
                  %4838 = vst [vmem:[%s4826 + $0x28] sm:$0xff] %v4837
                  %v4839 = vld [vmem:[%s4825 + $0x30] sm:$0xff]
                  %4840 = vst [vmem:[%s4826 + $0x30] sm:$0xff] %v4839
                  %v4841 = vld [vmem:[%s4825 + $0x38] sm:$0xff]
                  %4842 = vst [vmem:[%s4826 + $0x38] sm:$0xff] %v4841
                  %v4843 = vld [vmem:[%s4825 + $0x40] sm:$0xff]
                  %4844 = vst [vmem:[%s4826 + $0x40] sm:$0xff] %v4843
                  %v4845 = vld [vmem:[%s4825 + $0x48] sm:$0xff]
                  %4846 = vst [vmem:[%s4826 + $0x48] sm:$0xff] %v4845
                  %v4847 = vld [vmem:[%s4825 + $0x50] sm:$0xff]
                  %4848 = vst [vmem:[%s4826 + $0x50] sm:$0xff] %v4847
                  %v4849 = vld [vmem:[%s4825 + $0x58] sm:$0xff]
                  %4850 = vst [vmem:[%s4826 + $0x58] sm:$0xff] %v4849
                  %v4851 = vld [vmem:[%s4825 + $0x60] sm:$0xff]
                  %4852 = vst [vmem:[%s4826 + $0x60] sm:$0xff] %v4851
                  %v4853 = vld [vmem:[%s4825 + $0x68] sm:$0xff]
                  %4854 = vst [vmem:[%s4826 + $0x68] sm:$0xff] %v4853
                  %v4855 = vld [vmem:[%s4825 + $0x70] sm:$0xff]
                  %4856 = vst [vmem:[%s4826 + $0x70] sm:$0xff] %v4855
                  %v4857 = vld [vmem:[%s4825 + $0x78] sm:$0xff]
                  %4858 = vst [vmem:[%s4826 + $0x78] sm:$0xff] %v4857
                  %v4859 = vld [vmem:[%s4825 + $0x80] sm:$0xff]
                  %4860 = vst [vmem:[%s4826 + $0x80] sm:$0xff] %v4859
                  %v4861 = vld [vmem:[%s4825 + $0x88] sm:$0xff]
                  %4862 = vst [vmem:[%s4826 + $0x88] sm:$0xff] %v4861
                  %v4863 = vld [vmem:[%s4825 + $0x90] sm:$0xff]
                  %4864 = vst [vmem:[%s4826 + $0x90] sm:$0xff] %v4863
                  %v4865 = vld [vmem:[%s4825 + $0x98] sm:$0xff]
                  %4866 = vst [vmem:[%s4826 + $0x98] sm:$0xff] %v4865
                  %v4867 = vld [vmem:[%s4825 + $0xa0] sm:$0xff]
                  %4868 = vst [vmem:[%s4826 + $0xa0] sm:$0xff] %v4867
                  %v4869 = vld [vmem:[%s4825 + $0xa8] sm:$0xff]
                  %4870 = vst [vmem:[%s4826 + $0xa8] sm:$0xff] %v4869
                  %s4871 = sadd.s32 1, %s4824
                  %p4872 = scmp.ge.s32.totalorder %s4871, %s4816
                  %s4873 = scalar_select %p4872, 0, %s4871
                  %s4874 = smul.u32 %s4873, 176
                  %s4875 = smul.u32 %s4873, 176
                  %s4876 = scalar_lea.vmem %s4705, %s4874 [#allocation2]
                  %s4877 = scalar_lea.vmem %s4718, %s4875
                $region71: #{mul_conv1x1.1} parent=65 // loop_footer
                  %s4821 = sadd.s32 %s4819, 1
                $region72: #{mul_conv1x1.1} parent=65 // loop_footer_branch
                  %4818 = sbr.rel target = $region68
                $region73: #{mul_conv1x1.1} parent=65 // loop_exit
                  _
                %s4878 = sdiv.u32.pop %s4712, 22
                %s4879 = srem.u32.pop %s4712, 22
                %s4880 = smul.u32 %s4878, 22
                %s4881 = smul.u32 8, %s4880
                %s4882 = scalar_lea.vmem %s4705, %s4881 [#allocation2]
                %s4883 = smul.u32 8, %s4880
                %s4884 = scalar_lea.vmem %s4718, %s4883
                // While loop
                $region74: #{mul_conv1x1.1} parent=65 // loop_pre_header
                  _
                $region75: #{mul_conv1x1.1} parent=65 // loop_header
                  %s4886 = sphi 0, %s4888
                  %p4887 = scmp.ge.s32.totalorder %s4886, %s4879
                  %s4891 = sphi 0, %s4898
                  %s4892 = sphi %s4882, %s4901
                  %s4893 = sphi %s4884, %s4902
                $region76: #{mul_conv1x1.1} parent=65 // loop_header_branch
                  %4890 = sbr.rel (%p4887) target = $region80
                $region77: #{mul_conv1x1.1} parent=65 // loop_body
                  %v4894 = vld [vmem:[%s4892] sm:$0xff]
                  %4895 = vst [vmem:[%s4893] sm:$0xff] %v4894
                  %s4896 = sadd.s32 1, %s4891
                  %p4897 = scmp.ge.s32.totalorder %s4896, %s4879
                  %s4898 = scalar_select %p4897, 0, %s4896
                  %s4899 = smul.u32 %s4898, 8
                  %s4900 = smul.u32 %s4898, 8
                  %s4901 = scalar_lea.vmem %s4882, %s4899 [#allocation2]
                  %s4902 = scalar_lea.vmem %s4884, %s4900
                $region78: #{mul_conv1x1.1} parent=65 // loop_footer
                  %s4888 = sadd.s32 %s4886, 1
                $region79: #{mul_conv1x1.1} parent=65 // loop_footer_branch
                  %4885 = sbr.rel target = $region75
                $region80: #{mul_conv1x1.1} parent=65 // loop_exit
                  _
              $region66: #{mul_conv1x1.1} parent=43 // pred_fallthru
                _
              // Predicated region
              $region81: #{mul_conv1x1.1} parent=43 // pred_check
                _
              $region82: #{mul_conv1x1.1} parent=43 // pred_check_branch
                %4904 = sbr.rel target = $region84
              $region83: #{mul_conv1x1.1} parent=43 // pred_region
                _
              $region84: #{mul_conv1x1.1} parent=43 // pred_fallthru
                _
            $region44: #{mul_conv1x1.1} parent=39 // pred_fallthru
              _
            // Predicated region
            $region45: #{mul_conv1x1.1} parent=39 // pred_check
              _
            $region46: #{mul_conv1x1.1} parent=39 // pred_check_branch
              %4725 = sbr.rel target = $region48
            $region47: #{mul_conv1x1.1} parent=39 // pred_region
              %s4727 = sdiv.u32.pop %s4712, 22
              %s4728 = srem.u32.pop %s4712, 22
              // While loop
              $region49: #{mul_conv1x1.1} parent=47 // loop_pre_header
                _
              $region50: #{mul_conv1x1.1} parent=47 // loop_header
                %s4730 = sphi 0, %s4732
                %p4731 = scmp.ge.s32.totalorder %s4730, %s4727
                %s4735 = sphi 0, %s4784
                %s4736 = sphi %s4705, %s4787
                %s4737 = sphi %s4718, %s4788
              $region51: #{mul_conv1x1.1} parent=47 // loop_header_branch
                %4734 = sbr.rel (%p4731) target = $region55
              $region52: #{mul_conv1x1.1} parent=47 // loop_body
                %v4738 = vld [vmem:[%s4736] sm:$0xff]
                %4739 = vst [vmem:[%s4737] sm:$0xff] %v4738
                %v4740 = vld [vmem:[%s4736 + $0x8] sm:$0xff]
                %4741 = vst [vmem:[%s4737 + $0x8] sm:$0xff] %v4740
                %v4742 = vld [vmem:[%s4736 + $0x10] sm:$0xff]
                %4743 = vst [vmem:[%s4737 + $0x10] sm:$0xff] %v4742
                %v4744 = vld [vmem:[%s4736 + $0x18] sm:$0xff]
                %4745 = vst [vmem:[%s4737 + $0x18] sm:$0xff] %v4744
                %v4746 = vld [vmem:[%s4736 + $0x20] sm:$0xff]
                %4747 = vst [vmem:[%s4737 + $0x20] sm:$0xff] %v4746
                %v4748 = vld [vmem:[%s4736 + $0x28] sm:$0xff]
                %4749 = vst [vmem:[%s4737 + $0x28] sm:$0xff] %v4748
                %v4750 = vld [vmem:[%s4736 + $0x30] sm:$0xff]
                %4751 = vst [vmem:[%s4737 + $0x30] sm:$0xff] %v4750
                %v4752 = vld [vmem:[%s4736 + $0x38] sm:$0xff]
                %4753 = vst [vmem:[%s4737 + $0x38] sm:$0xff] %v4752
                %v4754 = vld [vmem:[%s4736 + $0x40] sm:$0xff]
                %4755 = vst [vmem:[%s4737 + $0x40] sm:$0xff] %v4754
                %v4756 = vld [vmem:[%s4736 + $0x48] sm:$0xff]
                %4757 = vst [vmem:[%s4737 + $0x48] sm:$0xff] %v4756
                %v4758 = vld [vmem:[%s4736 + $0x50] sm:$0xff]
                %4759 = vst [vmem:[%s4737 + $0x50] sm:$0xff] %v4758
                %v4760 = vld [vmem:[%s4736 + $0x58] sm:$0xff]
                %4761 = vst [vmem:[%s4737 + $0x58] sm:$0xff] %v4760
                %v4762 = vld [vmem:[%s4736 + $0x60] sm:$0xff]
                %4763 = vst [vmem:[%s4737 + $0x60] sm:$0xff] %v4762
                %v4764 = vld [vmem:[%s4736 + $0x68] sm:$0xff]
                %4765 = vst [vmem:[%s4737 + $0x68] sm:$0xff] %v4764
                %v4766 = vld [vmem:[%s4736 + $0x70] sm:$0xff]
                %4767 = vst [vmem:[%s4737 + $0x70] sm:$0xff] %v4766
                %v4768 = vld [vmem:[%s4736 + $0x78] sm:$0xff]
                %4769 = vst [vmem:[%s4737 + $0x78] sm:$0xff] %v4768
                %v4770 = vld [vmem:[%s4736 + $0x80] sm:$0xff]
                %4771 = vst [vmem:[%s4737 + $0x80] sm:$0xff] %v4770
                %v4772 = vld [vmem:[%s4736 + $0x88] sm:$0xff]
                %4773 = vst [vmem:[%s4737 + $0x88] sm:$0xff] %v4772
                %v4774 = vld [vmem:[%s4736 + $0x90] sm:$0xff]
                %4775 = vst [vmem:[%s4737 + $0x90] sm:$0xff] %v4774
                %v4776 = vld [vmem:[%s4736 + $0x98] sm:$0xff]
                %4777 = vst [vmem:[%s4737 + $0x98] sm:$0xff] %v4776
                %v4778 = vld [vmem:[%s4736 + $0xa0] sm:$0xff]
                %4779 = vst [vmem:[%s4737 + $0xa0] sm:$0xff] %v4778
                %v4780 = vld [vmem:[%s4736 + $0xa8] sm:$0xff]
                %4781 = vst [vmem:[%s4737 + $0xa8] sm:$0xff] %v4780
                %s4782 = sadd.s32 1, %s4735
                %p4783 = scmp.ge.s32.totalorder %s4782, %s4727
                %s4784 = scalar_select %p4783, 0, %s4782
                %s4785 = smul.u32 %s4784, 176
                %s4786 = smul.u32 %s4784, 176
                %s4787 = scalar_lea.vmem %s4705, %s4785 [#allocation2]
                %s4788 = scalar_lea.vmem %s4718, %s4786
              $region53: #{mul_conv1x1.1} parent=47 // loop_footer
                %s4732 = sadd.s32 %s4730, 1
              $region54: #{mul_conv1x1.1} parent=47 // loop_footer_branch
                %4729 = sbr.rel target = $region50
              $region55: #{mul_conv1x1.1} parent=47 // loop_exit
                _
              %s4789 = sdiv.u32.pop %s4712, 22
              %s4790 = srem.u32.pop %s4712, 22
              %s4791 = smul.u32 %s4789, 22
              %s4792 = smul.u32 8, %s4791
              %s4793 = scalar_lea.vmem %s4705, %s4792 [#allocation2]
              %s4794 = smul.u32 8, %s4791
              %s4795 = scalar_lea.vmem %s4718, %s4794
              // While loop
              $region56: #{mul_conv1x1.1} parent=47 // loop_pre_header
                _
              $region57: #{mul_conv1x1.1} parent=47 // loop_header
                %s4797 = sphi 0, %s4799
                %p4798 = scmp.ge.s32.totalorder %s4797, %s4790
                %s4802 = sphi 0, %s4809
                %s4803 = sphi %s4793, %s4812
                %s4804 = sphi %s4795, %s4813
              $region58: #{mul_conv1x1.1} parent=47 // loop_header_branch
                %4801 = sbr.rel (%p4798) target = $region62
              $region59: #{mul_conv1x1.1} parent=47 // loop_body
                %v4805 = vld [vmem:[%s4803] sm:$0xff]
                %4806 = vst [vmem:[%s4804] sm:$0xff] %v4805
                %s4807 = sadd.s32 1, %s4802
                %p4808 = scmp.ge.s32.totalorder %s4807, %s4790
                %s4809 = scalar_select %p4808, 0, %s4807
                %s4810 = smul.u32 %s4809, 8
                %s4811 = smul.u32 %s4809, 8
                %s4812 = scalar_lea.vmem %s4793, %s4810 [#allocation2]
                %s4813 = scalar_lea.vmem %s4795, %s4811
              $region60: #{mul_conv1x1.1} parent=47 // loop_footer
                %s4799 = sadd.s32 %s4797, 1
              $region61: #{mul_conv1x1.1} parent=47 // loop_footer_branch
                %4796 = sbr.rel target = $region57
              $region62: #{mul_conv1x1.1} parent=47 // loop_exit
                _
            $region48: #{mul_conv1x1.1} parent=39 // pred_fallthru
              _
          $region40: #{mul_conv1x1.1} parent=35 // pred_fallthru
            _
          %4905 = vnop
        $region36: #{mul_conv1x1.1} parent=31 // pred_fallthru
          _
      $region32: #{mul_conv1x1.1} parent=5 // pred_fallthru
        _
      %p4906 = scmp.le.s32.totalorder 2, %s9
      // Predicated region
      $region85: #{mul_conv1x1.1} parent=5 // pred_check
        %p4907 = pneg %p4906
      $region86: #{mul_conv1x1.1} parent=5 // pred_check_branch
        %4909 = sbr.rel (%p4907) target = $region88
      $region87: #{mul_conv1x1.1} parent=5 // pred_region
        %s4910 = ssub.s32 %s9, 2
        // Predicated region
        $region89: #{mul_conv1x1.1} parent=87 // pred_check
          %p4911 = pneg %p130
        $region90: #{mul_conv1x1.1} parent=87 // pred_check_branch
          %4913 = sbr.rel (%p4911) target = $region92
        $region91: #{mul_conv1x1.1} parent=87 // pred_region
          %s4914 = sand.u32 %s115, 1
          %s4915 = sand.u32 %s115, 1
          %s4916 = smul.addr %s4915, 176
          %s4917 = scalar_lea.vmem [#allocation2], %s4916
        $region92: #{mul_conv1x1.1} parent=87 // pred_fallthru
          _
      $region88: #{mul_conv1x1.1} parent=5 // pred_fallthru
        _
    $region6: #{mul_conv1x1.1} parent=1 // loop_footer
      %s13 = sadd.s32 1, %s9
    $region7: #{mul_conv1x1.1} parent=1 // loop_footer_branch
      %8 = sbr.rel target = $region3
    $region8: #{mul_conv1x1.1} parent=1 // loop_exit
      _

</llo_original>
